<compile_context>
chip_gen: v6e
topology: v6e:2x2x1
jax: 0.10.0
libtpu: 0.0.40
codegen_flags: <defaults>
</compile_context>

<pallas_src>
import functools

import jax
import jax.numpy as jnp
from jax import lax
from jax.experimental import pallas as pl
from jax.experimental.pallas import tpu as pltpu

VOCAB = 41
EMB = 64
HID = 64
H2 = 2 * HID          # 128 : both directions packed along lanes
G8 = 8 * HID          # 512 : 4 gates x 2 directions (gate-major, dir-minor)
N_GAT = 4 * 64        # 256 : concat of the four graph-model outputs
N_CLASS = 2
OUT_PAD = 128         # fc2 output padded 2 -> 128 lanes (lane-dense store)


def _round_up(x, m):
    return (x + m - 1) // m * m


# ------------------------------- fused kernel -------------------------------

def _protac_kernel(meta_ref,                       # SMEM [1] int32: [t_eff]
                   x_ref, len_ref,
                   wih_f_ref, wih_b_ref, whh_ref, b_ref,
                   sfcw_ref, sfcb_ref,
                   gat_ref, fc1a_ref, fc1b_ref, fc1bias_ref,
                   fc2w_ref, fc2b_ref,
                   out_ref, *, T, TB):
    t_eff = meta_ref[0]
    s_f = t_eff - 1          # forward capture step  (output time t_eff-1)
    s_b = T - t_eff          # backward capture step (flipped time of t_eff-1)
    # NOTE: t_eff == 0 (all-empty batch) leaves `last` at zero (no capture).

    lane = jax.lax.broadcasted_iota(jnp.int32, (1, H2), 1)
    sel_f = lane < HID                       # [1,128] True on forward lanes
    sel_b = jnp.logical_not(sel_f)

    len_vec = len_ref[...]                   # [TB, 1] int32 per-row lengths

    # loop-invariant loads, hoisted: weights resident for the whole recurrence
    wih_f = wih_f_ref[...]                   # [E, 8H] bf16 (fwd gate columns)
    wih_b = wih_b_ref[...]                   # [E, 8H] bf16 (bwd gate columns)
    whh = whh_ref[...]                       # [2H, 8H] bf16 (block-diagonal)
    bias = jnp.broadcast_to(b_ref[...], (TB, G8))          # [TB, 8H] f32

    h0 = jnp.zeros((TB, H2), jnp.float32)
    c0 = jnp.zeros((TB, H2), jnp.float32)
    last0 = jnp.zeros((TB, H2), jnp.float32)

    def step(s, carry):
        h, c, last = carry
        x_f = x_ref[s]                       # [TB, E] bf16 (forward token)
        x_b = x_ref[T - 1 - s]               # [TB, E] bf16 (flipped token)

        gates = (jnp.dot(x_f, wih_f, preferred_element_type=jnp.float32)
                 + jnp.dot(x_b, wih_b, preferred_element_type=jnp.float32)
                 + jnp.dot(h.astype(jnp.bfloat16), whh,
                           preferred_element_type=jnp.float32)
                 + bias)                                    # [TB, 8H] f32

        # 128-lane-aligned gate slices (both directions packed per gate)
        i = jax.nn.sigmoid(gates[:, 0 * H2:1 * H2])
        f = jax.nn.sigmoid(gates[:, 1 * H2:2 * H2])
        g = jnp.tanh(gates[:, 2 * H2:3 * H2])
        o = jax.nn.sigmoid(gates[:, 3 * H2:4 * H2])

        c_new = f * c + i * g
        h_new = o * jnp.tanh(c_new)

        # per-direction validity (packed-sequence semantics), built from lengths
        pos = jnp.where(sel_f, s, T - 1 - s)                # [1, 2H] int32
        valid = pos < len_vec                               # [TB, 2H] bool

        hm = jnp.where(valid, h_new, 0.0)    # masked output (zeros past end)
        h = jnp.where(valid, h_new, h)       # carry state past sequence ends
        c = jnp.where(valid, c_new, c)

        # capture out[:, t_eff-1, :]: forward half at s_f, backward half at s_b
        cap = jnp.logical_or(jnp.logical_and(s == s_f, sel_f),
                             jnp.logical_and(s == s_b, sel_b))
        last = jnp.where(cap, hm, last)
        return (h, c, last)

    unroll = T if T <= 16 else 4
    _, _, last = lax.fori_loop(0, T, step, (h0, c0, last0), unroll=unroll)

    # SmilesNet fc: [TB, 2H] -> [TB, 64]
    smi = (jnp.dot(last.astype(jnp.bfloat16), sfcw_ref[...],
                   preferred_element_type=jnp.float32) + sfcb_ref[...])

    # ProtacModel head: cat(v0..v3, v4) @ fc1 done as a split matmul (no concat)
    v = (jnp.dot(gat_ref[...], fc1a_ref[...],
                 preferred_element_type=jnp.float32)
         + jnp.dot(smi.astype(jnp.bfloat16), fc1b_ref[...],
                   preferred_element_type=jnp.float32)
         + fc1bias_ref[...])                                 # [TB, 64]
    v = jnp.where(v >= 0.0, v, 0.01 * v)                     # LeakyReLU(0.01)

    out_ref[...] = (jnp.dot(v.astype(jnp.bfloat16), fc2w_ref[...],
                            preferred_element_type=jnp.float32)
                    + fc2b_ref[...])                         # [TB, 128]


# --------------------------------- wrapper -----------------------------------

def protac_forward(gat_feats, tokens, lengths, params):
    """gat_feats: [B, 256] (cat of the four graph-model [B,64] outputs),
       tokens: [B, T] int32, lengths: per-sample SMILES lengths (list/array)."""
    B, T_in = tokens.shape
    T = max(8, _round_up(T_in, 8))           # bucket T (avoid per-shape recompile)
    TB = min(128, _round_up(B, 8))           # batch tile (multiple of 8 sublanes)
    B_pad = _round_up(B, TB)
    nb = B_pad // TB

    len_arr = jnp.asarray(lengths, jnp.int32)                 # [B]
    meta = jnp.reshape(jnp.max(len_arr).astype(jnp.int32), (1,))   # [t_eff]

    # pad batch/time; padding token is 0 (padding_idx), padded lengths are 0
    tok_pad = jnp.zeros((B_pad, T), jnp.int32).at[:B, :T_in].set(tokens)
    emb_tm = jnp.take(params["embed"], tok_pad.T, axis=0)     # [T, B_pad, E] f32
    emb_tm = emb_tm.astype(jnp.bfloat16)
    len_col = jnp.zeros((B_pad, 1), jnp.int32).at[:B, 0].set(len_arr)
    gat_pad = jnp.zeros((B_pad, N_GAT), jnp.bfloat16)
    gat_pad = gat_pad.at[:B].set(gat_feats.astype(jnp.bfloat16))

    kernel = functools.partial(_protac_kernel, T=T, TB=TB)

    def resident2(shape):
        return pl.BlockSpec(shape, lambda i, m: (0, 0))

    def batched2(shape):
        return pl.BlockSpec(shape, lambda i, m: (i, 0))

    y = pl.pallas_call(
        kernel,
        out_shape=jax.ShapeDtypeStruct((B_pad, OUT_PAD), jnp.float32),
        grid_spec=pltpu.PrefetchScalarGridSpec(
            num_scalar_prefetch=1,
            grid=(nb,),
            in_specs=[
                pl.BlockSpec((T, TB, EMB), lambda i, m: (0, i, 0)),  # emb (bf16)
                batched2((TB, 1)),             # per-row lengths (int32)
                resident2((EMB, G8)),          # W_ih fwd (gate-major, bf16)
                resident2((EMB, G8)),          # W_ih bwd (gate-major, bf16)
                resident2((H2, G8)),           # W_hh packed block-diag (bf16)
                resident2((1, G8)),            # packed lstm bias (f32)
                resident2((H2, 64)),           # SmilesNet fc weight^T (bf16)
                resident2((1, 64)),            # SmilesNet fc bias (f32)
                batched2((TB, N_GAT)),         # gat features v0..v3 (bf16)
                resident2((N_GAT, 64)),        # fc1 rows for gat part (bf16)
                resident2((64, 64)),           # fc1 rows for smiles part (bf16)
                resident2((1, 64)),            # fc1 bias (f32)
                resident2((64, OUT_PAD)),      # fc2 weight^T padded (bf16)
                resident2((1, OUT_PAD)),       # fc2 bias padded (f32)
            ],
            out_specs=batched2((TB, OUT_PAD)),
        ),
        compiler_params=pltpu.CompilerParams(
            dimension_semantics=("parallel",),
            vmem_limit_bytes=32 * 1024 * 1024),
    )(meta, emb_tm, len_col,
      params["w_ih_f_pack"], params["w_ih_b_pack"], params["w_hh_pack"],
      params["b_pack"], params["sfc_w_t"], params["sfc_b"],
      gat_pad, params["fc1_w_gat"], params["fc1_w_smi"], params["fc1_b"],
      params["fc2_w_t"], params["fc2_b"])
    return y[:B, :N_CLASS]


# -------------------------------- parameters ---------------------------------

def init_params(key):
    ks = jax.random.split(key, 16)
    s = 0.1
    bf = jnp.bfloat16

    embed = jax.random.normal(ks[0], (VOCAB, EMB), jnp.float32) * s
    embed = embed.at[0].set(0.0)                      # padding_idx = 0

    def lstm_dir(k0, k1, k2, k3):
        w_ih = jax.random.normal(k0, (4 * HID, EMB), jnp.float32) * s  # torch layout
        w_hh = jax.random.normal(k1, (4 * HID, HID), jnp.float32) * s
        b_ih = jax.random.normal(k2, (4 * HID,), jnp.float32) * s
        b_hh = jax.random.normal(k3, (4 * HID,), jnp.float32) * s
        return w_ih.T, w_hh.T, (b_ih + b_hh)[None, :]   # [E,4H], [H,4H], [1,4H]

    wih_f, whh_f, b_f = lstm_dir(ks[1], ks[2], ks[3], ks[4])
    wih_b, whh_b, b_b = lstm_dir(ks[5], ks[6], ks[7], ks[8])

    def pack_gate_major(a_f, a_b):
        """[i_f|i_b|f_f|f_b|g_f|g_b|o_f|o_b] along last axis (128-lane gates)."""
        parts = []
        for k in range(4):
            parts.append(a_f[..., k * HID:(k + 1) * HID])
            parts.append(a_b[..., k * HID:(k + 1) * HID])
        return jnp.concatenate(parts, axis=-1)

    z_e = jnp.zeros_like(wih_f)                                  # [E, 4H]
    w_ih_f_pack = pack_gate_major(wih_f, z_e)                    # [64, 512]
    w_ih_b_pack = pack_gate_major(z_e, wih_b)                    # [64, 512]
    z_h = jnp.zeros_like(whh_f)                                  # [H, 4H]
    w_hh_pack = jnp.concatenate([pack_gate_major(whh_f, z_h),    # rows: h_fwd
                                 pack_gate_major(z_h, whh_b)],   # rows: h_bwd
                                axis=0)                          # [128, 512]
    b_pack = pack_gate_major(b_f, b_b)                           # [1, 512]

    # SmilesNet fc: torch Linear(128, 64)
    sfc_w = jax.random.normal(ks[9], (64, H2), jnp.float32) * s
    sfc_b = jax.random.normal(ks[10], (64,), jnp.float32) * s

    # ProtacModel head: fc1 Linear(320, 64), fc2 Linear(64, 2)
    fc1_w = jax.random.normal(ks[11], (64, N_GAT + 64), jnp.float32) * s
    fc1_b = jax.random.normal(ks[12], (64,), jnp.float32) * s
    fc2_w = jax.random.normal(ks[13], (N_CLASS, 64), jnp.float32) * s
    fc2_b = jax.random.normal(ks[14], (N_CLASS,), jnp.float32) * s

    fc1_w_t = fc1_w.T                                            # [320, 64]
    fc2_w_t = jnp.zeros((64, OUT_PAD), jnp.float32).at[:, :N_CLASS].set(fc2_w.T)
    fc2_b_p = jnp.zeros((1, OUT_PAD), jnp.float32).at[:, :N_CLASS].set(fc2_b)

    return dict(
        embed=embed,
        # kernel (bf16 MXU operands, f32 biases)
        w_ih_f_pack=w_ih_f_pack.astype(bf), w_ih_b_pack=w_ih_b_pack.astype(bf),
        w_hh_pack=w_hh_pack.astype(bf), b_pack=b_pack,
        sfc_w_t=sfc_w.T.astype(bf), sfc_b=sfc_b[None, :],
        fc1_w_gat=fc1_w_t[:N_GAT, :].astype(bf),
        fc1_w_smi=fc1_w_t[N_GAT:, :].astype(bf),
        fc1_b=fc1_b[None, :],
        fc2_w_t=fc2_w_t.astype(bf), fc2_b=fc2_b_p,
        # raw f32 weights (reference path only)
        ref_wih_f=wih_f, ref_whh_f=whh_f, ref_b_f=b_f,
        ref_wih_b=wih_b, ref_whh_b=whh_b, ref_b_b=b_b,
        ref_sfc_w_t=sfc_w.T, ref_sfc_b=sfc_b[None, :],
        ref_fc1_w_t=fc1_w_t, ref_fc1_b=fc1_b[None, :],
        ref_fc2_w_t=fc2_w.T, ref_fc2_b=fc2_b[None, :])


# --------------------------- pure-jnp reference ------------------------------

def reference_forward(gat_feats, tokens, lengths, params):
    """Straightforward f32 jnp transliteration of the PyTorch forward."""
    B, T = tokens.shape
    t_eff = int(max(lengths))
    hp = jax.lax.Precision.HIGHEST

    emb = jnp.take(params["embed"], tokens, axis=0)               # [B,T,E]
    x_tm = jnp.transpose(emb, (1, 0, 2))                          # [T,B,E]
    len_arr = jnp.asarray(lengths, jnp.int32)
    t_idx = jnp.arange(T, dtype=jnp.int32)[:, None]
    mask_tm = (t_idx < len_arr[None, :]).astype(jnp.float32)[:, :, None]

    def run_dir(x_seq, m_seq, w_ih_t, w_hh_t, b):
        def step(carry, xm):
            h, c = carry
            x, m = xm
            gates = (jnp.dot(x, w_ih_t, precision=hp)
                     + jnp.dot(h, w_hh_t, precision=hp) + b)
            i = jax.nn.sigmoid(gates[:, 0 * HID:1 * HID])
            f = jax.nn.sigmoid(gates[:, 1 * HID:2 * HID])
            g = jnp.tanh(gates[:, 2 * HID:3 * HID])
            o = jax.nn.sigmoid(gates[:, 3 * HID:4 * HID])
            c_new = f * c + i * g
            h_new = o * jnp.tanh(c_new)
            return (m * h_new + (1 - m) * h, m * c_new + (1 - m) * c), h_new * m
        init = (jnp.zeros((B, HID), jnp.float32), jnp.zeros((B, HID), jnp.float32))
        _, outs = jax.lax.scan(step, init, (x_seq, m_seq))
        return outs                                               # [T,B,H]

    out_f = run_dir(x_tm, mask_tm,
                    params["ref_wih_f"], params["ref_whh_f"], params["ref_b_f"])
    rev_idx = jnp.clip(len_arr[None, :] - 1 - t_idx, 0, T - 1)    # [T,B]
    x_rev = jnp.take_along_axis(x_tm, rev_idx[:, :, None], axis=0)
    out_b_rev = run_dir(x_rev, mask_tm,
                        params["ref_wih_b"], params["ref_whh_b"], params["ref_b_b"])
    out_b = jnp.take_along_axis(out_b_rev, rev_idx[:, :, None], axis=0) * mask_tm
    last = jnp.concatenate([out_f, out_b], axis=-1)[t_eff - 1]    # [B,2H]

    smi = jnp.dot(last, params["ref_sfc_w_t"], precision=hp) + params["ref_sfc_b"]
    vf = jnp.concatenate([gat_feats, smi], axis=1)                # [B,320]
    v = jnp.dot(vf, params["ref_fc1_w_t"], precision=hp) + params["ref_fc1_b"]
    v = jnp.where(v >= 0.0, v, 0.01 * v)
    return jnp.dot(v, params["ref_fc2_w_t"], precision=hp) + params["ref_fc2_b"]


# ----------------------------------- main ------------------------------------

if __name__ == "__main__":
    key = jax.random.PRNGKey(0)
    pkey, tkey, gkey = jax.random.split(key, 3)
    params = init_params(pkey)

    B, T = 2, 8
    lengths = [8, 5]   # per-sample SMILES lengths (the CPU `smiles_length` tensor)

    tokens = jax.random.randint(tkey, (B, T), 1, VOCAB, dtype=jnp.int32)
    pos = jnp.arange(T, dtype=jnp.int32)
    tokens = jnp.where(pos[None, :] < jnp.asarray(lengths, jnp.int32)[:, None],
                       tokens, 0)  # pad with padding_idx=0

    # TODO(synk): outputs of the four GAT submodels are inputs here ([B, 4*64]).
    gat_feats = jax.random.normal(gkey, (B, N_GAT), jnp.float32) * 0.1

    y = protac_forward(gat_feats, tokens, lengths, params)
    y = jax.block_until_ready(y)
    assert y.shape == (B, N_CLASS)
    assert bool(jnp.all(jnp.isfinite(y)))

    y_ref = reference_forward(gat_feats, tokens, lengths, params)
    max_err = float(jnp.max(jnp.abs(y - y_ref)))
    # bf16 MXU operands vs f32 HIGHEST reference -> looser tolerance
    assert max_err < 2e-2, f"mismatch vs reference: {max_err}"

    print("KERNEL_OK")
</pallas_src>

<mosaic_0001>
module attributes {stable_mosaic.version = 11 : i64} {
  func.func @_protac_kernel(%arg0: i32, %arg1: memref<1xi32, #tpu.memory_space<smem>>, %arg2: memref<8x8x64xbf16, #tpu.memory_space<vmem>>, %arg3: memref<8x1xi32, #tpu.memory_space<vmem>>, %arg4: memref<64x512xbf16, #tpu.memory_space<vmem>>, %arg5: memref<64x512xbf16, #tpu.memory_space<vmem>>, %arg6: memref<128x512xbf16, #tpu.memory_space<vmem>>, %arg7: memref<1x512xf32, #tpu.memory_space<vmem>>, %arg8: memref<128x64xbf16, #tpu.memory_space<vmem>>, %arg9: memref<1x64xf32, #tpu.memory_space<vmem>>, %arg10: memref<8x256xbf16, #tpu.memory_space<vmem>>, %arg11: memref<256x64xbf16, #tpu.memory_space<vmem>>, %arg12: memref<64x64xbf16, #tpu.memory_space<vmem>>, %arg13: memref<1x64xf32, #tpu.memory_space<vmem>>, %arg14: memref<64x128xbf16, #tpu.memory_space<vmem>>, %arg15: memref<1x128xf32, #tpu.memory_space<vmem>>, %arg16: memref<8x128xf32, #tpu.memory_space<vmem>>) attributes {dimension_semantics = [#tpu.dimension_semantics<parallel>], iteration_bounds = array<i64: 1>, scalar_prefetch = 1 : i64, scratch_operands = 0 : i64, tpu.core_type = #tpu.core_type<tc>, window_params = [{transform_indices = @transform_0, window_bounds = array<i64: 8, 8, 64>}, {transform_indices = @transform_1, window_bounds = array<i64: 8, 1>}, {pipeline_mode = #tpu.pipeline_mode<synchronous>, transform_indices = @transform_2, window_bounds = array<i64: 64, 512>}, {pipeline_mode = #tpu.pipeline_mode<synchronous>, transform_indices = @transform_3, window_bounds = array<i64: 64, 512>}, {pipeline_mode = #tpu.pipeline_mode<synchronous>, transform_indices = @transform_4, window_bounds = array<i64: 128, 512>}, {pipeline_mode = #tpu.pipeline_mode<synchronous>, transform_indices = @transform_5, window_bounds = array<i64: 1, 512>}, {pipeline_mode = #tpu.pipeline_mode<synchronous>, transform_indices = @transform_6, window_bounds = array<i64: 128, 64>}, {pipeline_mode = #tpu.pipeline_mode<synchronous>, transform_indices = @transform_7, window_bounds = array<i64: 1, 64>}, {transform_indices = @transform_8, window_bounds = array<i64: 8, 256>}, {pipeline_mode = #tpu.pipeline_mode<synchronous>, transform_indices = @transform_9, window_bounds = array<i64: 256, 64>}, {pipeline_mode = #tpu.pipeline_mode<synchronous>, transform_indices = @transform_10, window_bounds = array<i64: 64, 64>}, {pipeline_mode = #tpu.pipeline_mode<synchronous>, transform_indices = @transform_11, window_bounds = array<i64: 1, 64>}, {pipeline_mode = #tpu.pipeline_mode<synchronous>, transform_indices = @transform_12, window_bounds = array<i64: 64, 128>}, {pipeline_mode = #tpu.pipeline_mode<synchronous>, transform_indices = @transform_13, window_bounds = array<i64: 1, 128>}, {transform_indices = @transform_14, window_bounds = array<i64: 8, 128>}]} {
    %c0 = arith.constant 0 : index
    %0 = memref.load %arg1[%c0] : memref<1xi32, #tpu.memory_space<smem>>
    %c1_i32 = arith.constant 1 : i32
    %1 = arith.subi %0, %c1_i32 : i32
    %c8_i32 = arith.constant 8 : i32
    %2 = arith.subi %c8_i32, %0 : i32
    %3 = tpu.iota {dimensions = array<i32: 1>} : vector<1x128xi32>
    %c64_i32 = arith.constant 64 : i32
    %4 = vector.broadcast %c64_i32 : i32 to vector<1x128xi32>
    %5 = arith.cmpi slt, %3, %4 : vector<1x128xi32>
    %cst = arith.constant dense<true> : vector<1x128xi1>
    %6 = arith.xori %5, %cst : vector<1x128xi1>
    %c0_0 = arith.constant 0 : index
    %c0_1 = arith.constant 0 : index
    %7 = vector.load %arg3[%c0_0, %c0_1] : memref<8x1xi32, #tpu.memory_space<vmem>>, vector<8x1xi32>
    %c0_2 = arith.constant 0 : index
    %c0_3 = arith.constant 0 : index
    %8 = vector.load %arg4[%c0_2, %c0_3] : memref<64x512xbf16, #tpu.memory_space<vmem>>, vector<64x512xbf16>
    %c0_4 = arith.constant 0 : index
    %c0_5 = arith.constant 0 : index
    %9 = vector.load %arg5[%c0_4, %c0_5] : memref<64x512xbf16, #tpu.memory_space<vmem>>, vector<64x512xbf16>
    %c0_6 = arith.constant 0 : index
    %c0_7 = arith.constant 0 : index
    %10 = vector.load %arg6[%c0_6, %c0_7] : memref<128x512xbf16, #tpu.memory_space<vmem>>, vector<128x512xbf16>
    %c0_8 = arith.constant 0 : index
    %c0_9 = arith.constant 0 : index
    %11 = vector.load %arg7[%c0_8, %c0_9] : memref<1x512xf32, #tpu.memory_space<vmem>>, vector<1x512xf32>
    %12 = vector.shape_cast %11 : vector<1x512xf32> to vector<1x512xf32>
    %13 = vector.broadcast %12 : vector<1x512xf32> to vector<8x512xf32>
    %cst_10 = arith.constant 0.000000e+00 : f32
    %14 = vector.broadcast %cst_10 : f32 to vector<8x128xf32>
    %cst_11 = arith.constant 0.000000e+00 : f32
    %15 = vector.broadcast %cst_11 : f32 to vector<8x128xf32>
    %cst_12 = arith.constant 0.000000e+00 : f32
    %16 = vector.broadcast %cst_12 : f32 to vector<8x128xf32>
    %c0_i32 = arith.constant 0 : i32
    %17 = arith.index_cast %c0_i32 : i32 to index
    %c0_13 = arith.constant 0 : index
    %c0_14 = arith.constant 0 : index
    %18 = vector.load %arg2[%17, %c0_13, %c0_14] : memref<8x8x64xbf16, #tpu.memory_space<vmem>>, vector<1x8x64xbf16>
    %19 = vector.shape_cast %18 : vector<1x8x64xbf16> to vector<8x64xbf16>
    %c7_i32 = arith.constant 7 : i32
    %20 = arith.subi %c7_i32, %c0_i32 : i32
    %21 = arith.index_cast %20 : i32 to index
    %c0_15 = arith.constant 0 : index
    %c0_16 = arith.constant 0 : index
    %22 = vector.load %arg2[%21, %c0_15, %c0_16] : memref<8x8x64xbf16, #tpu.memory_space<vmem>>, vector<1x8x64xbf16>
    %23 = vector.shape_cast %22 : vector<1x8x64xbf16> to vector<8x64xbf16>
    %cst_17 = arith.constant dense<0.000000e+00> : vector<8x512xf32>
    %24 = tpu.matmul %19, %8, %cst_17 {dimension_numbers = #tpu.dot_dimension_numbers<[1], [0], [0], [1], [0, 0, 1, 1], [], []>} : vector<8x64xbf16>, vector<64x512xbf16>, vector<8x512xf32> -> vector<8x512xf32>
    %cst_18 = arith.constant dense<0.000000e+00> : vector<8x512xf32>
    %25 = tpu.matmul %23, %9, %cst_18 {dimension_numbers = #tpu.dot_dimension_numbers<[1], [0], [0], [1], [0, 0, 1, 1], [], []>} : vector<8x64xbf16>, vector<64x512xbf16>, vector<8x512xf32> -> vector<8x512xf32>
    %26 = arith.addf %24, %25 : vector<8x512xf32>
    %27 = arith.truncf %14 : vector<8x128xf32> to vector<8x128xbf16>
    %cst_19 = arith.constant dense<0.000000e+00> : vector<8x512xf32>
    %28 = tpu.matmul %27, %10, %cst_19 {dimension_numbers = #tpu.dot_dimension_numbers<[1], [0], [0], [1], [0, 0, 1, 1], [], []>} : vector<8x128xbf16>, vector<128x512xbf16>, vector<8x512xf32> -> vector<8x512xf32>
    %29 = arith.addf %26, %28 : vector<8x512xf32>
    %30 = arith.addf %29, %13 : vector<8x512xf32>
    %31 = vector.extract_strided_slice %30 {offsets = [0, 0], sizes = [8, 128], strides = [1, 1]} : vector<8x512xf32> to vector<8x128xf32>
    %32 = arith.negf %31 : vector<8x128xf32>
    %33 = math.exp %32 : vector<8x128xf32>
    %cst_20 = arith.constant 1.000000e+00 : f32
    %34 = vector.broadcast %cst_20 : f32 to vector<8x128xf32>
    %35 = arith.addf %34, %33 : vector<8x128xf32>
    %36 = arith.divf %34, %35 : vector<8x128xf32>
    %37 = vector.extract_strided_slice %30 {offsets = [0, 128], sizes = [8, 128], strides = [1, 1]} : vector<8x512xf32> to vector<8x128xf32>
    %38 = arith.negf %37 : vector<8x128xf32>
    %39 = math.exp %38 : vector<8x128xf32>
    %cst_21 = arith.constant 1.000000e+00 : f32
    %40 = vector.broadcast %cst_21 : f32 to vector<8x128xf32>
    %41 = arith.addf %40, %39 : vector<8x128xf32>
    %42 = arith.divf %40, %41 : vector<8x128xf32>
    %43 = vector.extract_strided_slice %30 {offsets = [0, 256], sizes = [8, 128], strides = [1, 1]} : vector<8x512xf32> to vector<8x128xf32>
    %44 = math.tanh %43 : vector<8x128xf32>
    %45 = vector.extract_strided_slice %30 {offsets = [0, 384], sizes = [8, 128], strides = [1, 1]} : vector<8x512xf32> to vector<8x128xf32>
    %46 = arith.negf %45 : vector<8x128xf32>
    %47 = math.exp %46 : vector<8x128xf32>
    %cst_22 = arith.constant 1.000000e+00 : f32
    %48 = vector.broadcast %cst_22 : f32 to vector<8x128xf32>
    %49 = arith.addf %48, %47 : vector<8x128xf32>
    %50 = arith.divf %48, %49 : vector<8x128xf32>
    %51 = arith.mulf %42, %15 : vector<8x128xf32>
    %52 = arith.mulf %36, %44 : vector<8x128xf32>
    %53 = arith.addf %51, %52 : vector<8x128xf32>
    %54 = math.tanh %53 : vector<8x128xf32>
    %55 = arith.mulf %50, %54 : vector<8x128xf32>
    %c7_i32_23 = arith.constant 7 : i32
    %56 = arith.subi %c7_i32_23, %c0_i32 : i32
    %57 = vector.broadcast %c0_i32 : i32 to vector<1x128xi32>
    %58 = vector.broadcast %56 : i32 to vector<1x128xi32>
    %59 = arith.select %5, %57, %58 : vector<1x128xi1>, vector<1x128xi32>
    %60 = vector.broadcast %59 : vector<1x128xi32> to vector<8x128xi32>
    %61 = vector.broadcast %7 : vector<8x1xi32> to vector<8x128xi32>
    %62 = arith.cmpi slt, %60, %61 : vector<8x128xi32>
    %cst_24 = arith.constant 0.000000e+00 : f32
    %63 = vector.broadcast %cst_24 : f32 to vector<8x128xf32>
    %64 = arith.select %62, %55, %63 : vector<8x128xi1>, vector<8x128xf32>
    %65 = arith.select %62, %55, %14 : vector<8x128xi1>, vector<8x128xf32>
    %66 = arith.select %62, %53, %15 : vector<8x128xi1>, vector<8x128xf32>
    %67 = arith.cmpi eq, %c0_i32, %1 : i32
    %68 = vector.broadcast %67 : i1 to vector<1x128xi1>
    %69 = arith.andi %68, %5 : vector<1x128xi1>
    %70 = arith.cmpi eq, %c0_i32, %2 : i32
    %71 = vector.broadcast %70 : i1 to vector<1x128xi1>
    %72 = arith.andi %71, %6 : vector<1x128xi1>
    %73 = arith.ori %69, %72 : vector<1x128xi1>
    %74 = vector.shape_cast %73 : vector<1x128xi1> to vector<1x128xi1>
    %75 = vector.broadcast %74 : vector<1x128xi1> to vector<8x128xi1>
    %76 = arith.select %75, %64, %16 : vector<8x128xi1>, vector<8x128xf32>
    %c1_i32_25 = arith.constant 1 : i32
    %77 = arith.index_cast %c1_i32_25 : i32 to index
    %c0_26 = arith.constant 0 : index
    %c0_27 = arith.constant 0 : index
    %78 = vector.load %arg2[%77, %c0_26, %c0_27] : memref<8x8x64xbf16, #tpu.memory_space<vmem>>, vector<1x8x64xbf16>
    %79 = vector.shape_cast %78 : vector<1x8x64xbf16> to vector<8x64xbf16>
    %c7_i32_28 = arith.constant 7 : i32
    %80 = arith.subi %c7_i32_28, %c1_i32_25 : i32
    %81 = arith.index_cast %80 : i32 to index
    %c0_29 = arith.constant 0 : index
    %c0_30 = arith.constant 0 : index
    %82 = vector.load %arg2[%81, %c0_29, %c0_30] : memref<8x8x64xbf16, #tpu.memory_space<vmem>>, vector<1x8x64xbf16>
    %83 = vector.shape_cast %82 : vector<1x8x64xbf16> to vector<8x64xbf16>
    %cst_31 = arith.constant dense<0.000000e+00> : vector<8x512xf32>
    %84 = tpu.matmul %79, %8, %cst_31 {dimension_numbers = #tpu.dot_dimension_numbers<[1], [0], [0], [1], [0, 0, 1, 1], [], []>} : vector<8x64xbf16>, vector<64x512xbf16>, vector<8x512xf32> -> vector<8x512xf32>
    %cst_32 = arith.constant dense<0.000000e+00> : vector<8x512xf32>
    %85 = tpu.matmul %83, %9, %cst_32 {dimension_numbers = #tpu.dot_dimension_numbers<[1], [0], [0], [1], [0, 0, 1, 1], [], []>} : vector<8x64xbf16>, vector<64x512xbf16>, vector<8x512xf32> -> vector<8x512xf32>
    %86 = arith.addf %84, %85 : vector<8x512xf32>
    %87 = arith.truncf %65 : vector<8x128xf32> to vector<8x128xbf16>
    %cst_33 = arith.constant dense<0.000000e+00> : vector<8x512xf32>
    %88 = tpu.matmul %87, %10, %cst_33 {dimension_numbers = #tpu.dot_dimension_numbers<[1], [0], [0], [1], [0, 0, 1, 1], [], []>} : vector<8x128xbf16>, vector<128x512xbf16>, vector<8x512xf32> -> vector<8x512xf32>
    %89 = arith.addf %86, %88 : vector<8x512xf32>
    %90 = arith.addf %89, %13 : vector<8x512xf32>
    %91 = vector.extract_strided_slice %90 {offsets = [0, 0], sizes = [8, 128], strides = [1, 1]} : vector<8x512xf32> to vector<8x128xf32>
    %92 = arith.negf %91 : vector<8x128xf32>
    %93 = math.exp %92 : vector<8x128xf32>
    %cst_34 = arith.constant 1.000000e+00 : f32
    %94 = vector.broadcast %cst_34 : f32 to vector<8x128xf32>
    %95 = arith.addf %94, %93 : vector<8x128xf32>
    %96 = arith.divf %94, %95 : vector<8x128xf32>
    %97 = vector.extract_strided_slice %90 {offsets = [0, 128], sizes = [8, 128], strides = [1, 1]} : vector<8x512xf32> to vector<8x128xf32>
    %98 = arith.negf %97 : vector<8x128xf32>
    %99 = math.exp %98 : vector<8x128xf32>
    %cst_35 = arith.constant 1.000000e+00 : f32
    %100 = vector.broadcast %cst_35 : f32 to vector<8x128xf32>
    %101 = arith.addf %100, %99 : vector<8x128xf32>
    %102 = arith.divf %100, %101 : vector<8x128xf32>
    %103 = vector.extract_strided_slice %90 {offsets = [0, 256], sizes = [8, 128], strides = [1, 1]} : vector<8x512xf32> to vector<8x128xf32>
    %104 = math.tanh %103 : vector<8x128xf32>
    %105 = vector.extract_strided_slice %90 {offsets = [0, 384], sizes = [8, 128], strides = [1, 1]} : vector<8x512xf32> to vector<8x128xf32>
    %106 = arith.negf %105 : vector<8x128xf32>
    %107 = math.exp %106 : vector<8x128xf32>
    %cst_36 = arith.constant 1.000000e+00 : f32
    %108 = vector.broadcast %cst_36 : f32 to vector<8x128xf32>
    %109 = arith.addf %108, %107 : vector<8x128xf32>
    %110 = arith.divf %108, %109 : vector<8x128xf32>
    %111 = arith.mulf %102, %66 : vector<8x128xf32>
    %112 = arith.mulf %96, %104 : vector<8x128xf32>
    %113 = arith.addf %111, %112 : vector<8x128xf32>
    %114 = math.tanh %113 : vector<8x128xf32>
    %115 = arith.mulf %110, %114 : vector<8x128xf32>
    %c7_i32_37 = arith.constant 7 : i32
    %116 = arith.subi %c7_i32_37, %c1_i32_25 : i32
    %117 = vector.broadcast %c1_i32_25 : i32 to vector<1x128xi32>
    %118 = vector.broadcast %116 : i32 to vector<1x128xi32>
    %119 = arith.select %5, %117, %118 : vector<1x128xi1>, vector<1x128xi32>
    %120 = vector.broadcast %119 : vector<1x128xi32> to vector<8x128xi32>
    %121 = vector.broadcast %7 : vector<8x1xi32> to vector<8x128xi32>
    %122 = arith.cmpi slt, %120, %121 : vector<8x128xi32>
    %cst_38 = arith.constant 0.000000e+00 : f32
    %123 = vector.broadcast %cst_38 : f32 to vector<8x128xf32>
    %124 = arith.select %122, %115, %123 : vector<8x128xi1>, vector<8x128xf32>
    %125 = arith.select %122, %115, %65 : vector<8x128xi1>, vector<8x128xf32>
    %126 = arith.select %122, %113, %66 : vector<8x128xi1>, vector<8x128xf32>
    %127 = arith.cmpi eq, %c1_i32_25, %1 : i32
    %128 = vector.broadcast %127 : i1 to vector<1x128xi1>
    %129 = arith.andi %128, %5 : vector<1x128xi1>
    %130 = arith.cmpi eq, %c1_i32_25, %2 : i32
    %131 = vector.broadcast %130 : i1 to vector<1x128xi1>
    %132 = arith.andi %131, %6 : vector<1x128xi1>
    %133 = arith.ori %129, %132 : vector<1x128xi1>
    %134 = vector.shape_cast %133 : vector<1x128xi1> to vector<1x128xi1>
    %135 = vector.broadcast %134 : vector<1x128xi1> to vector<8x128xi1>
    %136 = arith.select %135, %124, %76 : vector<8x128xi1>, vector<8x128xf32>
    %c2_i32 = arith.constant 2 : i32
    %137 = arith.index_cast %c2_i32 : i32 to index
    %c0_39 = arith.constant 0 : index
    %c0_40 = arith.constant 0 : index
    %138 = vector.load %arg2[%137, %c0_39, %c0_40] : memref<8x8x64xbf16, #tpu.memory_space<vmem>>, vector<1x8x64xbf16>
    %139 = vector.shape_cast %138 : vector<1x8x64xbf16> to vector<8x64xbf16>
    %c7_i32_41 = arith.constant 7 : i32
    %140 = arith.subi %c7_i32_41, %c2_i32 : i32
    %141 = arith.index_cast %140 : i32 to index
    %c0_42 = arith.constant 0 : index
    %c0_43 = arith.constant 0 : index
    %142 = vector.load %arg2[%141, %c0_42, %c0_43] : memref<8x8x64xbf16, #tpu.memory_space<vmem>>, vector<1x8x64xbf16>
    %143 = vector.shape_cast %142 : vector<1x8x64xbf16> to vector<8x64xbf16>
    %cst_44 = arith.constant dense<0.000000e+00> : vector<8x512xf32>
    %144 = tpu.matmul %139, %8, %cst_44 {dimension_numbers = #tpu.dot_dimension_numbers<[1], [0], [0], [1], [0, 0, 1, 1], [], []>} : vector<8x64xbf16>, vector<64x512xbf16>, vector<8x512xf32> -> vector<8x512xf32>
    %cst_45 = arith.constant dense<0.000000e+00> : vector<8x512xf32>
    %145 = tpu.matmul %143, %9, %cst_45 {dimension_numbers = #tpu.dot_dimension_numbers<[1], [0], [0], [1], [0, 0, 1, 1], [], []>} : vector<8x64xbf16>, vector<64x512xbf16>, vector<8x512xf32> -> vector<8x512xf32>
    %146 = arith.addf %144, %145 : vector<8x512xf32>
    %147 = arith.truncf %125 : vector<8x128xf32> to vector<8x128xbf16>
    %cst_46 = arith.constant dense<0.000000e+00> : vector<8x512xf32>
    %148 = tpu.matmul %147, %10, %cst_46 {dimension_numbers = #tpu.dot_dimension_numbers<[1], [0], [0], [1], [0, 0, 1, 1], [], []>} : vector<8x128xbf16>, vector<128x512xbf16>, vector<8x512xf32> -> vector<8x512xf32>
    %149 = arith.addf %146, %148 : vector<8x512xf32>
    %150 = arith.addf %149, %13 : vector<8x512xf32>
    %151 = vector.extract_strided_slice %150 {offsets = [0, 0], sizes = [8, 128], strides = [1, 1]} : vector<8x512xf32> to vector<8x128xf32>
    %152 = arith.negf %151 : vector<8x128xf32>
    %153 = math.exp %152 : vector<8x128xf32>
    %cst_47 = arith.constant 1.000000e+00 : f32
    %154 = vector.broadcast %cst_47 : f32 to vector<8x128xf32>
    %155 = arith.addf %154, %153 : vector<8x128xf32>
    %156 = arith.divf %154, %155 : vector<8x128xf32>
    %157 = vector.extract_strided_slice %150 {offsets = [0, 128], sizes = [8, 128], strides = [1, 1]} : vector<8x512xf32> to vector<8x128xf32>
    %158 = arith.negf %157 : vector<8x128xf32>
    %159 = math.exp %158 : vector<8x128xf32>
    %cst_48 = arith.constant 1.000000e+00 : f32
    %160 = vector.broadcast %cst_48 : f32 to vector<8x128xf32>
    %161 = arith.addf %160, %159 : vector<8x128xf32>
    %162 = arith.divf %160, %161 : vector<8x128xf32>
    %163 = vector.extract_strided_slice %150 {offsets = [0, 256], sizes = [8, 128], strides = [1, 1]} : vector<8x512xf32> to vector<8x128xf32>
    %164 = math.tanh %163 : vector<8x128xf32>
    %165 = vector.extract_strided_slice %150 {offsets = [0, 384], sizes = [8, 128], strides = [1, 1]} : vector<8x512xf32> to vector<8x128xf32>
    %166 = arith.negf %165 : vector<8x128xf32>
    %167 = math.exp %166 : vector<8x128xf32>
    %cst_49 = arith.constant 1.000000e+00 : f32
    %168 = vector.broadcast %cst_49 : f32 to vector<8x128xf32>
    %169 = arith.addf %168, %167 : vector<8x128xf32>
    %170 = arith.divf %168, %169 : vector<8x128xf32>
    %171 = arith.mulf %162, %126 : vector<8x128xf32>
    %172 = arith.mulf %156, %164 : vector<8x128xf32>
    %173 = arith.addf %171, %172 : vector<8x128xf32>
    %174 = math.tanh %173 : vector<8x128xf32>
    %175 = arith.mulf %170, %174 : vector<8x128xf32>
    %c7_i32_50 = arith.constant 7 : i32
    %176 = arith.subi %c7_i32_50, %c2_i32 : i32
    %177 = vector.broadcast %c2_i32 : i32 to vector<1x128xi32>
    %178 = vector.broadcast %176 : i32 to vector<1x128xi32>
    %179 = arith.select %5, %177, %178 : vector<1x128xi1>, vector<1x128xi32>
    %180 = vector.broadcast %179 : vector<1x128xi32> to vector<8x128xi32>
    %181 = vector.broadcast %7 : vector<8x1xi32> to vector<8x128xi32>
    %182 = arith.cmpi slt, %180, %181 : vector<8x128xi32>
    %cst_51 = arith.constant 0.000000e+00 : f32
    %183 = vector.broadcast %cst_51 : f32 to vector<8x128xf32>
    %184 = arith.select %182, %175, %183 : vector<8x128xi1>, vector<8x128xf32>
    %185 = arith.select %182, %175, %125 : vector<8x128xi1>, vector<8x128xf32>
    %186 = arith.select %182, %173, %126 : vector<8x128xi1>, vector<8x128xf32>
    %187 = arith.cmpi eq, %c2_i32, %1 : i32
    %188 = vector.broadcast %187 : i1 to vector<1x128xi1>
    %189 = arith.andi %188, %5 : vector<1x128xi1>
    %190 = arith.cmpi eq, %c2_i32, %2 : i32
    %191 = vector.broadcast %190 : i1 to vector<1x128xi1>
    %192 = arith.andi %191, %6 : vector<1x128xi1>
    %193 = arith.ori %189, %192 : vector<1x128xi1>
    %194 = vector.shape_cast %193 : vector<1x128xi1> to vector<1x128xi1>
    %195 = vector.broadcast %194 : vector<1x128xi1> to vector<8x128xi1>
    %196 = arith.select %195, %184, %136 : vector<8x128xi1>, vector<8x128xf32>
    %c3_i32 = arith.constant 3 : i32
    %197 = arith.index_cast %c3_i32 : i32 to index
    %c0_52 = arith.constant 0 : index
    %c0_53 = arith.constant 0 : index
    %198 = vector.load %arg2[%197, %c0_52, %c0_53] : memref<8x8x64xbf16, #tpu.memory_space<vmem>>, vector<1x8x64xbf16>
    %199 = vector.shape_cast %198 : vector<1x8x64xbf16> to vector<8x64xbf16>
    %c7_i32_54 = arith.constant 7 : i32
    %200 = arith.subi %c7_i32_54, %c3_i32 : i32
    %201 = arith.index_cast %200 : i32 to index
    %c0_55 = arith.constant 0 : index
    %c0_56 = arith.constant 0 : index
    %202 = vector.load %arg2[%201, %c0_55, %c0_56] : memref<8x8x64xbf16, #tpu.memory_space<vmem>>, vector<1x8x64xbf16>
    %203 = vector.shape_cast %202 : vector<1x8x64xbf16> to vector<8x64xbf16>
    %cst_57 = arith.constant dense<0.000000e+00> : vector<8x512xf32>
    %204 = tpu.matmul %199, %8, %cst_57 {dimension_numbers = #tpu.dot_dimension_numbers<[1], [0], [0], [1], [0, 0, 1, 1], [], []>} : vector<8x64xbf16>, vector<64x512xbf16>, vector<8x512xf32> -> vector<8x512xf32>
    %cst_58 = arith.constant dense<0.000000e+00> : vector<8x512xf32>
    %205 = tpu.matmul %203, %9, %cst_58 {dimension_numbers = #tpu.dot_dimension_numbers<[1], [0], [0], [1], [0, 0, 1, 1], [], []>} : vector<8x64xbf16>, vector<64x512xbf16>, vector<8x512xf32> -> vector<8x512xf32>
    %206 = arith.addf %204, %205 : vector<8x512xf32>
    %207 = arith.truncf %185 : vector<8x128xf32> to vector<8x128xbf16>
    %cst_59 = arith.constant dense<0.000000e+00> : vector<8x512xf32>
    %208 = tpu.matmul %207, %10, %cst_59 {dimension_numbers = #tpu.dot_dimension_numbers<[1], [0], [0], [1], [0, 0, 1, 1], [], []>} : vector<8x128xbf16>, vector<128x512xbf16>, vector<8x512xf32> -> vector<8x512xf32>
    %209 = arith.addf %206, %208 : vector<8x512xf32>
    %210 = arith.addf %209, %13 : vector<8x512xf32>
    %211 = vector.extract_strided_slice %210 {offsets = [0, 0], sizes = [8, 128], strides = [1, 1]} : vector<8x512xf32> to vector<8x128xf32>
    %212 = arith.negf %211 : vector<8x128xf32>
    %213 = math.exp %212 : vector<8x128xf32>
    %cst_60 = arith.constant 1.000000e+00 : f32
    %214 = vector.broadcast %cst_60 : f32 to vector<8x128xf32>
    %215 = arith.addf %214, %213 : vector<8x128xf32>
    %216 = arith.divf %214, %215 : vector<8x128xf32>
    %217 = vector.extract_strided_slice %210 {offsets = [0, 128], sizes = [8, 128], strides = [1, 1]} : vector<8x512xf32> to vector<8x128xf32>
    %218 = arith.negf %217 : vector<8x128xf32>
    %219 = math.exp %218 : vector<8x128xf32>
    %cst_61 = arith.constant 1.000000e+00 : f32
    %220 = vector.broadcast %cst_61 : f32 to vector<8x128xf32>
    %221 = arith.addf %220, %219 : vector<8x128xf32>
    %222 = arith.divf %220, %221 : vector<8x128xf32>
    %223 = vector.extract_strided_slice %210 {offsets = [0, 256], sizes = [8, 128], strides = [1, 1]} : vector<8x512xf32> to vector<8x128xf32>
    %224 = math.tanh %223 : vector<8x128xf32>
    %225 = vector.extract_strided_slice %210 {offsets = [0, 384], sizes = [8, 128], strides = [1, 1]} : vector<8x512xf32> to vector<8x128xf32>
    %226 = arith.negf %225 : vector<8x128xf32>
    %227 = math.exp %226 : vector<8x128xf32>
    %cst_62 = arith.constant 1.000000e+00 : f32
    %228 = vector.broadcast %cst_62 : f32 to vector<8x128xf32>
    %229 = arith.addf %228, %227 : vector<8x128xf32>
    %230 = arith.divf %228, %229 : vector<8x128xf32>
    %231 = arith.mulf %222, %186 : vector<8x128xf32>
    %232 = arith.mulf %216, %224 : vector<8x128xf32>
    %233 = arith.addf %231, %232 : vector<8x128xf32>
    %234 = math.tanh %233 : vector<8x128xf32>
    %235 = arith.mulf %230, %234 : vector<8x128xf32>
    %c7_i32_63 = arith.constant 7 : i32
    %236 = arith.subi %c7_i32_63, %c3_i32 : i32
    %237 = vector.broadcast %c3_i32 : i32 to vector<1x128xi32>
    %238 = vector.broadcast %236 : i32 to vector<1x128xi32>
    %239 = arith.select %5, %237, %238 : vector<1x128xi1>, vector<1x128xi32>
    %240 = vector.broadcast %239 : vector<1x128xi32> to vector<8x128xi32>
    %241 = vector.broadcast %7 : vector<8x1xi32> to vector<8x128xi32>
    %242 = arith.cmpi slt, %240, %241 : vector<8x128xi32>
    %cst_64 = arith.constant 0.000000e+00 : f32
    %243 = vector.broadcast %cst_64 : f32 to vector<8x128xf32>
    %244 = arith.select %242, %235, %243 : vector<8x128xi1>, vector<8x128xf32>
    %245 = arith.select %242, %235, %185 : vector<8x128xi1>, vector<8x128xf32>
    %246 = arith.select %242, %233, %186 : vector<8x128xi1>, vector<8x128xf32>
    %247 = arith.cmpi eq, %c3_i32, %1 : i32
    %248 = vector.broadcast %247 : i1 to vector<1x128xi1>
    %249 = arith.andi %248, %5 : vector<1x128xi1>
    %250 = arith.cmpi eq, %c3_i32, %2 : i32
    %251 = vector.broadcast %250 : i1 to vector<1x128xi1>
    %252 = arith.andi %251, %6 : vector<1x128xi1>
    %253 = arith.ori %249, %252 : vector<1x128xi1>
    %254 = vector.shape_cast %253 : vector<1x128xi1> to vector<1x128xi1>
    %255 = vector.broadcast %254 : vector<1x128xi1> to vector<8x128xi1>
    %256 = arith.select %255, %244, %196 : vector<8x128xi1>, vector<8x128xf32>
    %c4_i32 = arith.constant 4 : i32
    %257 = arith.index_cast %c4_i32 : i32 to index
    %c0_65 = arith.constant 0 : index
    %c0_66 = arith.constant 0 : index
    %258 = vector.load %arg2[%257, %c0_65, %c0_66] : memref<8x8x64xbf16, #tpu.memory_space<vmem>>, vector<1x8x64xbf16>
    %259 = vector.shape_cast %258 : vector<1x8x64xbf16> to vector<8x64xbf16>
    %c7_i32_67 = arith.constant 7 : i32
    %260 = arith.subi %c7_i32_67, %c4_i32 : i32
    %261 = arith.index_cast %260 : i32 to index
    %c0_68 = arith.constant 0 : index
    %c0_69 = arith.constant 0 : index
    %262 = vector.load %arg2[%261, %c0_68, %c0_69] : memref<8x8x64xbf16, #tpu.memory_space<vmem>>, vector<1x8x64xbf16>
    %263 = vector.shape_cast %262 : vector<1x8x64xbf16> to vector<8x64xbf16>
    %cst_70 = arith.constant dense<0.000000e+00> : vector<8x512xf32>
    %264 = tpu.matmul %259, %8, %cst_70 {dimension_numbers = #tpu.dot_dimension_numbers<[1], [0], [0], [1], [0, 0, 1, 1], [], []>} : vector<8x64xbf16>, vector<64x512xbf16>, vector<8x512xf32> -> vector<8x512xf32>
    %cst_71 = arith.constant dense<0.000000e+00> : vector<8x512xf32>
    %265 = tpu.matmul %263, %9, %cst_71 {dimension_numbers = #tpu.dot_dimension_numbers<[1], [0], [0], [1], [0, 0, 1, 1], [], []>} : vector<8x64xbf16>, vector<64x512xbf16>, vector<8x512xf32> -> vector<8x512xf32>
    %266 = arith.addf %264, %265 : vector<8x512xf32>
    %267 = arith.truncf %245 : vector<8x128xf32> to vector<8x128xbf16>
    %cst_72 = arith.constant dense<0.000000e+00> : vector<8x512xf32>
    %268 = tpu.matmul %267, %10, %cst_72 {dimension_numbers = #tpu.dot_dimension_numbers<[1], [0], [0], [1], [0, 0, 1, 1], [], []>} : vector<8x128xbf16>, vector<128x512xbf16>, vector<8x512xf32> -> vector<8x512xf32>
    %269 = arith.addf %266, %268 : vector<8x512xf32>
    %270 = arith.addf %269, %13 : vector<8x512xf32>
    %271 = vector.extract_strided_slice %270 {offsets = [0, 0], sizes = [8, 128], strides = [1, 1]} : vector<8x512xf32> to vector<8x128xf32>
    %272 = arith.negf %271 : vector<8x128xf32>
    %273 = math.exp %272 : vector<8x128xf32>
    %cst_73 = arith.constant 1.000000e+00 : f32
    %274 = vector.broadcast %cst_73 : f32 to vector<8x128xf32>
    %275 = arith.addf %274, %273 : vector<8x128xf32>
    %276 = arith.divf %274, %275 : vector<8x128xf32>
    %277 = vector.extract_strided_slice %270 {offsets = [0, 128], sizes = [8, 128], strides = [1, 1]} : vector<8x512xf32> to vector<8x128xf32>
    %278 = arith.negf %277 : vector<8x128xf32>
    %279 = math.exp %278 : vector<8x128xf32>
    %cst_74 = arith.constant 1.000000e+00 : f32
    %280 = vector.broadcast %cst_74 : f32 to vector<8x128xf32>
    %281 = arith.addf %280, %279 : vector<8x128xf32>
    %282 = arith.divf %280, %281 : vector<8x128xf32>
    %283 = vector.extract_strided_slice %270 {offsets = [0, 256], sizes = [8, 128], strides = [1, 1]} : vector<8x512xf32> to vector<8x128xf32>
    %284 = math.tanh %283 : vector<8x128xf32>
    %285 = vector.extract_strided_slice %270 {offsets = [0, 384], sizes = [8, 128], strides = [1, 1]} : vector<8x512xf32> to vector<8x128xf32>
    %286 = arith.negf %285 : vector<8x128xf32>
    %287 = math.exp %286 : vector<8x128xf32>
    %cst_75 = arith.constant 1.000000e+00 : f32
    %288 = vector.broadcast %cst_75 : f32 to vector<8x128xf32>
    %289 = arith.addf %288, %287 : vector<8x128xf32>
    %290 = arith.divf %288, %289 : vector<8x128xf32>
    %291 = arith.mulf %282, %246 : vector<8x128xf32>
    %292 = arith.mulf %276, %284 : vector<8x128xf32>
    %293 = arith.addf %291, %292 : vector<8x128xf32>
    %294 = math.tanh %293 : vector<8x128xf32>
    %295 = arith.mulf %290, %294 : vector<8x128xf32>
    %c7_i32_76 = arith.constant 7 : i32
    %296 = arith.subi %c7_i32_76, %c4_i32 : i32
    %297 = vector.broadcast %c4_i32 : i32 to vector<1x128xi32>
    %298 = vector.broadcast %296 : i32 to vector<1x128xi32>
    %299 = arith.select %5, %297, %298 : vector<1x128xi1>, vector<1x128xi32>
    %300 = vector.broadcast %299 : vector<1x128xi32> to vector<8x128xi32>
    %301 = vector.broadcast %7 : vector<8x1xi32> to vector<8x128xi32>
    %302 = arith.cmpi slt, %300, %301 : vector<8x128xi32>
    %cst_77 = arith.constant 0.000000e+00 : f32
    %303 = vector.broadcast %cst_77 : f32 to vector<8x128xf32>
    %304 = arith.select %302, %295, %303 : vector<8x128xi1>, vector<8x128xf32>
    %305 = arith.select %302, %295, %245 : vector<8x128xi1>, vector<8x128xf32>
    %306 = arith.select %302, %293, %246 : vector<8x128xi1>, vector<8x128xf32>
    %307 = arith.cmpi eq, %c4_i32, %1 : i32
    %308 = vector.broadcast %307 : i1 to vector<1x128xi1>
    %309 = arith.andi %308, %5 : vector<1x128xi1>
    %310 = arith.cmpi eq, %c4_i32, %2 : i32
    %311 = vector.broadcast %310 : i1 to vector<1x128xi1>
    %312 = arith.andi %311, %6 : vector<1x128xi1>
    %313 = arith.ori %309, %312 : vector<1x128xi1>
    %314 = vector.shape_cast %313 : vector<1x128xi1> to vector<1x128xi1>
    %315 = vector.broadcast %314 : vector<1x128xi1> to vector<8x128xi1>
    %316 = arith.select %315, %304, %256 : vector<8x128xi1>, vector<8x128xf32>
    %c5_i32 = arith.constant 5 : i32
    %317 = arith.index_cast %c5_i32 : i32 to index
    %c0_78 = arith.constant 0 : index
    %c0_79 = arith.constant 0 : index
    %318 = vector.load %arg2[%317, %c0_78, %c0_79] : memref<8x8x64xbf16, #tpu.memory_space<vmem>>, vector<1x8x64xbf16>
    %319 = vector.shape_cast %318 : vector<1x8x64xbf16> to vector<8x64xbf16>
    %c7_i32_80 = arith.constant 7 : i32
    %320 = arith.subi %c7_i32_80, %c5_i32 : i32
    %321 = arith.index_cast %320 : i32 to index
    %c0_81 = arith.constant 0 : index
    %c0_82 = arith.constant 0 : index
    %322 = vector.load %arg2[%321, %c0_81, %c0_82] : memref<8x8x64xbf16, #tpu.memory_space<vmem>>, vector<1x8x64xbf16>
    %323 = vector.shape_cast %322 : vector<1x8x64xbf16> to vector<8x64xbf16>
    %cst_83 = arith.constant dense<0.000000e+00> : vector<8x512xf32>
    %324 = tpu.matmul %319, %8, %cst_83 {dimension_numbers = #tpu.dot_dimension_numbers<[1], [0], [0], [1], [0, 0, 1, 1], [], []>} : vector<8x64xbf16>, vector<64x512xbf16>, vector<8x512xf32> -> vector<8x512xf32>
    %cst_84 = arith.constant dense<0.000000e+00> : vector<8x512xf32>
    %325 = tpu.matmul %323, %9, %cst_84 {dimension_numbers = #tpu.dot_dimension_numbers<[1], [0], [0], [1], [0, 0, 1, 1], [], []>} : vector<8x64xbf16>, vector<64x512xbf16>, vector<8x512xf32> -> vector<8x512xf32>
    %326 = arith.addf %324, %325 : vector<8x512xf32>
    %327 = arith.truncf %305 : vector<8x128xf32> to vector<8x128xbf16>
    %cst_85 = arith.constant dense<0.000000e+00> : vector<8x512xf32>
    %328 = tpu.matmul %327, %10, %cst_85 {dimension_numbers = #tpu.dot_dimension_numbers<[1], [0], [0], [1], [0, 0, 1, 1], [], []>} : vector<8x128xbf16>, vector<128x512xbf16>, vector<8x512xf32> -> vector<8x512xf32>
    %329 = arith.addf %326, %328 : vector<8x512xf32>
    %330 = arith.addf %329, %13 : vector<8x512xf32>
    %331 = vector.extract_strided_slice %330 {offsets = [0, 0], sizes = [8, 128], strides = [1, 1]} : vector<8x512xf32> to vector<8x128xf32>
    %332 = arith.negf %331 : vector<8x128xf32>
    %333 = math.exp %332 : vector<8x128xf32>
    %cst_86 = arith.constant 1.000000e+00 : f32
    %334 = vector.broadcast %cst_86 : f32 to vector<8x128xf32>
    %335 = arith.addf %334, %333 : vector<8x128xf32>
    %336 = arith.divf %334, %335 : vector<8x128xf32>
    %337 = vector.extract_strided_slice %330 {offsets = [0, 128], sizes = [8, 128], strides = [1, 1]} : vector<8x512xf32> to vector<8x128xf32>
    %338 = arith.negf %337 : vector<8x128xf32>
    %339 = math.exp %338 : vector<8x128xf32>
    %cst_87 = arith.constant 1.000000e+00 : f32
    %340 = vector.broadcast %cst_87 : f32 to vector<8x128xf32>
    %341 = arith.addf %340, %339 : vector<8x128xf32>
    %342 = arith.divf %340, %341 : vector<8x128xf32>
    %343 = vector.extract_strided_slice %330 {offsets = [0, 256], sizes = [8, 128], strides = [1, 1]} : vector<8x512xf32> to vector<8x128xf32>
    %344 = math.tanh %343 : vector<8x128xf32>
    %345 = vector.extract_strided_slice %330 {offsets = [0, 384], sizes = [8, 128], strides = [1, 1]} : vector<8x512xf32> to vector<8x128xf32>
    %346 = arith.negf %345 : vector<8x128xf32>
    %347 = math.exp %346 : vector<8x128xf32>
    %cst_88 = arith.constant 1.000000e+00 : f32
    %348 = vector.broadcast %cst_88 : f32 to vector<8x128xf32>
    %349 = arith.addf %348, %347 : vector<8x128xf32>
    %350 = arith.divf %348, %349 : vector<8x128xf32>
    %351 = arith.mulf %342, %306 : vector<8x128xf32>
    %352 = arith.mulf %336, %344 : vector<8x128xf32>
    %353 = arith.addf %351, %352 : vector<8x128xf32>
    %354 = math.tanh %353 : vector<8x128xf32>
    %355 = arith.mulf %350, %354 : vector<8x128xf32>
    %c7_i32_89 = arith.constant 7 : i32
    %356 = arith.subi %c7_i32_89, %c5_i32 : i32
    %357 = vector.broadcast %c5_i32 : i32 to vector<1x128xi32>
    %358 = vector.broadcast %356 : i32 to vector<1x128xi32>
    %359 = arith.select %5, %357, %358 : vector<1x128xi1>, vector<1x128xi32>
    %360 = vector.broadcast %359 : vector<1x128xi32> to vector<8x128xi32>
    %361 = vector.broadcast %7 : vector<8x1xi32> to vector<8x128xi32>
    %362 = arith.cmpi slt, %360, %361 : vector<8x128xi32>
    %cst_90 = arith.constant 0.000000e+00 : f32
    %363 = vector.broadcast %cst_90 : f32 to vector<8x128xf32>
    %364 = arith.select %362, %355, %363 : vector<8x128xi1>, vector<8x128xf32>
    %365 = arith.select %362, %355, %305 : vector<8x128xi1>, vector<8x128xf32>
    %366 = arith.select %362, %353, %306 : vector<8x128xi1>, vector<8x128xf32>
    %367 = arith.cmpi eq, %c5_i32, %1 : i32
    %368 = vector.broadcast %367 : i1 to vector<1x128xi1>
    %369 = arith.andi %368, %5 : vector<1x128xi1>
    %370 = arith.cmpi eq, %c5_i32, %2 : i32
    %371 = vector.broadcast %370 : i1 to vector<1x128xi1>
    %372 = arith.andi %371, %6 : vector<1x128xi1>
    %373 = arith.ori %369, %372 : vector<1x128xi1>
    %374 = vector.shape_cast %373 : vector<1x128xi1> to vector<1x128xi1>
    %375 = vector.broadcast %374 : vector<1x128xi1> to vector<8x128xi1>
    %376 = arith.select %375, %364, %316 : vector<8x128xi1>, vector<8x128xf32>
    %c6_i32 = arith.constant 6 : i32
    %377 = arith.index_cast %c6_i32 : i32 to index
    %c0_91 = arith.constant 0 : index
    %c0_92 = arith.constant 0 : index
    %378 = vector.load %arg2[%377, %c0_91, %c0_92] : memref<8x8x64xbf16, #tpu.memory_space<vmem>>, vector<1x8x64xbf16>
    %379 = vector.shape_cast %378 : vector<1x8x64xbf16> to vector<8x64xbf16>
    %c7_i32_93 = arith.constant 7 : i32
    %380 = arith.subi %c7_i32_93, %c6_i32 : i32
    %381 = arith.index_cast %380 : i32 to index
    %c0_94 = arith.constant 0 : index
    %c0_95 = arith.constant 0 : index
    %382 = vector.load %arg2[%381, %c0_94, %c0_95] : memref<8x8x64xbf16, #tpu.memory_space<vmem>>, vector<1x8x64xbf16>
    %383 = vector.shape_cast %382 : vector<1x8x64xbf16> to vector<8x64xbf16>
    %cst_96 = arith.constant dense<0.000000e+00> : vector<8x512xf32>
    %384 = tpu.matmul %379, %8, %cst_96 {dimension_numbers = #tpu.dot_dimension_numbers<[1], [0], [0], [1], [0, 0, 1, 1], [], []>} : vector<8x64xbf16>, vector<64x512xbf16>, vector<8x512xf32> -> vector<8x512xf32>
    %cst_97 = arith.constant dense<0.000000e+00> : vector<8x512xf32>
    %385 = tpu.matmul %383, %9, %cst_97 {dimension_numbers = #tpu.dot_dimension_numbers<[1], [0], [0], [1], [0, 0, 1, 1], [], []>} : vector<8x64xbf16>, vector<64x512xbf16>, vector<8x512xf32> -> vector<8x512xf32>
    %386 = arith.addf %384, %385 : vector<8x512xf32>
    %387 = arith.truncf %365 : vector<8x128xf32> to vector<8x128xbf16>
    %cst_98 = arith.constant dense<0.000000e+00> : vector<8x512xf32>
    %388 = tpu.matmul %387, %10, %cst_98 {dimension_numbers = #tpu.dot_dimension_numbers<[1], [0], [0], [1], [0, 0, 1, 1], [], []>} : vector<8x128xbf16>, vector<128x512xbf16>, vector<8x512xf32> -> vector<8x512xf32>
    %389 = arith.addf %386, %388 : vector<8x512xf32>
    %390 = arith.addf %389, %13 : vector<8x512xf32>
    %391 = vector.extract_strided_slice %390 {offsets = [0, 0], sizes = [8, 128], strides = [1, 1]} : vector<8x512xf32> to vector<8x128xf32>
    %392 = arith.negf %391 : vector<8x128xf32>
    %393 = math.exp %392 : vector<8x128xf32>
    %cst_99 = arith.constant 1.000000e+00 : f32
    %394 = vector.broadcast %cst_99 : f32 to vector<8x128xf32>
    %395 = arith.addf %394, %393 : vector<8x128xf32>
    %396 = arith.divf %394, %395 : vector<8x128xf32>
    %397 = vector.extract_strided_slice %390 {offsets = [0, 128], sizes = [8, 128], strides = [1, 1]} : vector<8x512xf32> to vector<8x128xf32>
    %398 = arith.negf %397 : vector<8x128xf32>
    %399 = math.exp %398 : vector<8x128xf32>
    %cst_100 = arith.constant 1.000000e+00 : f32
    %400 = vector.broadcast %cst_100 : f32 to vector<8x128xf32>
    %401 = arith.addf %400, %399 : vector<8x128xf32>
    %402 = arith.divf %400, %401 : vector<8x128xf32>
    %403 = vector.extract_strided_slice %390 {offsets = [0, 256], sizes = [8, 128], strides = [1, 1]} : vector<8x512xf32> to vector<8x128xf32>
    %404 = math.tanh %403 : vector<8x128xf32>
    %405 = vector.extract_strided_slice %390 {offsets = [0, 384], sizes = [8, 128], strides = [1, 1]} : vector<8x512xf32> to vector<8x128xf32>
    %406 = arith.negf %405 : vector<8x128xf32>
    %407 = math.exp %406 : vector<8x128xf32>
    %cst_101 = arith.constant 1.000000e+00 : f32
    %408 = vector.broadcast %cst_101 : f32 to vector<8x128xf32>
    %409 = arith.addf %408, %407 : vector<8x128xf32>
    %410 = arith.divf %408, %409 : vector<8x128xf32>
    %411 = arith.mulf %402, %366 : vector<8x128xf32>
    %412 = arith.mulf %396, %404 : vector<8x128xf32>
    %413 = arith.addf %411, %412 : vector<8x128xf32>
    %414 = math.tanh %413 : vector<8x128xf32>
    %415 = arith.mulf %410, %414 : vector<8x128xf32>
    %c7_i32_102 = arith.constant 7 : i32
    %416 = arith.subi %c7_i32_102, %c6_i32 : i32
    %417 = vector.broadcast %c6_i32 : i32 to vector<1x128xi32>
    %418 = vector.broadcast %416 : i32 to vector<1x128xi32>
    %419 = arith.select %5, %417, %418 : vector<1x128xi1>, vector<1x128xi32>
    %420 = vector.broadcast %419 : vector<1x128xi32> to vector<8x128xi32>
    %421 = vector.broadcast %7 : vector<8x1xi32> to vector<8x128xi32>
    %422 = arith.cmpi slt, %420, %421 : vector<8x128xi32>
    %cst_103 = arith.constant 0.000000e+00 : f32
    %423 = vector.broadcast %cst_103 : f32 to vector<8x128xf32>
    %424 = arith.select %422, %415, %423 : vector<8x128xi1>, vector<8x128xf32>
    %425 = arith.select %422, %415, %365 : vector<8x128xi1>, vector<8x128xf32>
    %426 = arith.select %422, %413, %366 : vector<8x128xi1>, vector<8x128xf32>
    %427 = arith.cmpi eq, %c6_i32, %1 : i32
    %428 = vector.broadcast %427 : i1 to vector<1x128xi1>
    %429 = arith.andi %428, %5 : vector<1x128xi1>
    %430 = arith.cmpi eq, %c6_i32, %2 : i32
    %431 = vector.broadcast %430 : i1 to vector<1x128xi1>
    %432 = arith.andi %431, %6 : vector<1x128xi1>
    %433 = arith.ori %429, %432 : vector<1x128xi1>
    %434 = vector.shape_cast %433 : vector<1x128xi1> to vector<1x128xi1>
    %435 = vector.broadcast %434 : vector<1x128xi1> to vector<8x128xi1>
    %436 = arith.select %435, %424, %376 : vector<8x128xi1>, vector<8x128xf32>
    %c7_i32_104 = arith.constant 7 : i32
    %437 = arith.index_cast %c7_i32_104 : i32 to index
    %c0_105 = arith.constant 0 : index
    %c0_106 = arith.constant 0 : index
    %438 = vector.load %arg2[%437, %c0_105, %c0_106] : memref<8x8x64xbf16, #tpu.memory_space<vmem>>, vector<1x8x64xbf16>
    %439 = vector.shape_cast %438 : vector<1x8x64xbf16> to vector<8x64xbf16>
    %c7_i32_107 = arith.constant 7 : i32
    %440 = arith.subi %c7_i32_107, %c7_i32_104 : i32
    %441 = arith.index_cast %440 : i32 to index
    %c0_108 = arith.constant 0 : index
    %c0_109 = arith.constant 0 : index
    %442 = vector.load %arg2[%441, %c0_108, %c0_109] : memref<8x8x64xbf16, #tpu.memory_space<vmem>>, vector<1x8x64xbf16>
    %443 = vector.shape_cast %442 : vector<1x8x64xbf16> to vector<8x64xbf16>
    %cst_110 = arith.constant dense<0.000000e+00> : vector<8x512xf32>
    %444 = tpu.matmul %439, %8, %cst_110 {dimension_numbers = #tpu.dot_dimension_numbers<[1], [0], [0], [1], [0, 0, 1, 1], [], []>} : vector<8x64xbf16>, vector<64x512xbf16>, vector<8x512xf32> -> vector<8x512xf32>
    %cst_111 = arith.constant dense<0.000000e+00> : vector<8x512xf32>
    %445 = tpu.matmul %443, %9, %cst_111 {dimension_numbers = #tpu.dot_dimension_numbers<[1], [0], [0], [1], [0, 0, 1, 1], [], []>} : vector<8x64xbf16>, vector<64x512xbf16>, vector<8x512xf32> -> vector<8x512xf32>
    %446 = arith.addf %444, %445 : vector<8x512xf32>
    %447 = arith.truncf %425 : vector<8x128xf32> to vector<8x128xbf16>
    %cst_112 = arith.constant dense<0.000000e+00> : vector<8x512xf32>
    %448 = tpu.matmul %447, %10, %cst_112 {dimension_numbers = #tpu.dot_dimension_numbers<[1], [0], [0], [1], [0, 0, 1, 1], [], []>} : vector<8x128xbf16>, vector<128x512xbf16>, vector<8x512xf32> -> vector<8x512xf32>
    %449 = arith.addf %446, %448 : vector<8x512xf32>
    %450 = arith.addf %449, %13 : vector<8x512xf32>
    %451 = vector.extract_strided_slice %450 {offsets = [0, 0], sizes = [8, 128], strides = [1, 1]} : vector<8x512xf32> to vector<8x128xf32>
    %452 = arith.negf %451 : vector<8x128xf32>
    %453 = math.exp %452 : vector<8x128xf32>
    %cst_113 = arith.constant 1.000000e+00 : f32
    %454 = vector.broadcast %cst_113 : f32 to vector<8x128xf32>
    %455 = arith.addf %454, %453 : vector<8x128xf32>
    %456 = arith.divf %454, %455 : vector<8x128xf32>
    %457 = vector.extract_strided_slice %450 {offsets = [0, 128], sizes = [8, 128], strides = [1, 1]} : vector<8x512xf32> to vector<8x128xf32>
    %458 = arith.negf %457 : vector<8x128xf32>
    %459 = math.exp %458 : vector<8x128xf32>
    %cst_114 = arith.constant 1.000000e+00 : f32
    %460 = vector.broadcast %cst_114 : f32 to vector<8x128xf32>
    %461 = arith.addf %460, %459 : vector<8x128xf32>
    %462 = arith.divf %460, %461 : vector<8x128xf32>
    %463 = vector.extract_strided_slice %450 {offsets = [0, 256], sizes = [8, 128], strides = [1, 1]} : vector<8x512xf32> to vector<8x128xf32>
    %464 = math.tanh %463 : vector<8x128xf32>
    %465 = vector.extract_strided_slice %450 {offsets = [0, 384], sizes = [8, 128], strides = [1, 1]} : vector<8x512xf32> to vector<8x128xf32>
    %466 = arith.negf %465 : vector<8x128xf32>
    %467 = math.exp %466 : vector<8x128xf32>
    %cst_115 = arith.constant 1.000000e+00 : f32
    %468 = vector.broadcast %cst_115 : f32 to vector<8x128xf32>
    %469 = arith.addf %468, %467 : vector<8x128xf32>
    %470 = arith.divf %468, %469 : vector<8x128xf32>
    %471 = arith.mulf %462, %426 : vector<8x128xf32>
    %472 = arith.mulf %456, %464 : vector<8x128xf32>
    %473 = arith.addf %471, %472 : vector<8x128xf32>
    %474 = math.tanh %473 : vector<8x128xf32>
    %475 = arith.mulf %470, %474 : vector<8x128xf32>
    %c7_i32_116 = arith.constant 7 : i32
    %476 = arith.subi %c7_i32_116, %c7_i32_104 : i32
    %477 = vector.broadcast %c7_i32_104 : i32 to vector<1x128xi32>
    %478 = vector.broadcast %476 : i32 to vector<1x128xi32>
    %479 = arith.select %5, %477, %478 : vector<1x128xi1>, vector<1x128xi32>
    %480 = vector.broadcast %479 : vector<1x128xi32> to vector<8x128xi32>
    %481 = vector.broadcast %7 : vector<8x1xi32> to vector<8x128xi32>
    %482 = arith.cmpi slt, %480, %481 : vector<8x128xi32>
    %cst_117 = arith.constant 0.000000e+00 : f32
    %483 = vector.broadcast %cst_117 : f32 to vector<8x128xf32>
    %484 = arith.select %482, %475, %483 : vector<8x128xi1>, vector<8x128xf32>
    %485 = arith.select %482, %475, %425 : vector<8x128xi1>, vector<8x128xf32>
    %486 = arith.select %482, %473, %426 : vector<8x128xi1>, vector<8x128xf32>
    %487 = arith.cmpi eq, %c7_i32_104, %1 : i32
    %488 = vector.broadcast %487 : i1 to vector<1x128xi1>
    %489 = arith.andi %488, %5 : vector<1x128xi1>
    %490 = arith.cmpi eq, %c7_i32_104, %2 : i32
    %491 = vector.broadcast %490 : i1 to vector<1x128xi1>
    %492 = arith.andi %491, %6 : vector<1x128xi1>
    %493 = arith.ori %489, %492 : vector<1x128xi1>
    %494 = vector.shape_cast %493 : vector<1x128xi1> to vector<1x128xi1>
    %495 = vector.broadcast %494 : vector<1x128xi1> to vector<8x128xi1>
    %496 = arith.select %495, %484, %436 : vector<8x128xi1>, vector<8x128xf32>
    %c8_i32_118 = arith.constant 8 : i32
    %497 = arith.truncf %496 : vector<8x128xf32> to vector<8x128xbf16>
    %c0_119 = arith.constant 0 : index
    %c0_120 = arith.constant 0 : index
    %498 = vector.load %arg8[%c0_119, %c0_120] : memref<128x64xbf16, #tpu.memory_space<vmem>>, vector<128x64xbf16>
    %cst_121 = arith.constant dense<0.000000e+00> : vector<8x64xf32>
    %499 = tpu.matmul %497, %498, %cst_121 {dimension_numbers = #tpu.dot_dimension_numbers<[1], [0], [0], [1], [0, 0, 1, 1], [], []>} : vector<8x128xbf16>, vector<128x64xbf16>, vector<8x64xf32> -> vector<8x64xf32>
    %c0_122 = arith.constant 0 : index
    %c0_123 = arith.constant 0 : index
    %500 = vector.load %arg9[%c0_122, %c0_123] : memref<1x64xf32, #tpu.memory_space<vmem>>, vector<1x64xf32>
    %501 = vector.broadcast %500 : vector<1x64xf32> to vector<8x64xf32>
    %502 = arith.addf %499, %501 : vector<8x64xf32>
    %c0_124 = arith.constant 0 : index
    %c0_125 = arith.constant 0 : index
    %503 = vector.load %arg10[%c0_124, %c0_125] : memref<8x256xbf16, #tpu.memory_space<vmem>>, vector<8x256xbf16>
    %c0_126 = arith.constant 0 : index
    %c0_127 = arith.constant 0 : index
    %504 = vector.load %arg11[%c0_126, %c0_127] : memref<256x64xbf16, #tpu.memory_space<vmem>>, vector<256x64xbf16>
    %cst_128 = arith.constant dense<0.000000e+00> : vector<8x64xf32>
    %505 = tpu.matmul %503, %504, %cst_128 {dimension_numbers = #tpu.dot_dimension_numbers<[1], [0], [0], [1], [0, 0, 1, 1], [], []>} : vector<8x256xbf16>, vector<256x64xbf16>, vector<8x64xf32> -> vector<8x64xf32>
    %506 = arith.truncf %502 : vector<8x64xf32> to vector<8x64xbf16>
    %c0_129 = arith.constant 0 : index
    %c0_130 = arith.constant 0 : index
    %507 = vector.load %arg12[%c0_129, %c0_130] : memref<64x64xbf16, #tpu.memory_space<vmem>>, vector<64x64xbf16>
    %cst_131 = arith.constant dense<0.000000e+00> : vector<8x64xf32>
    %508 = tpu.matmul %506, %507, %cst_131 {dimension_numbers = #tpu.dot_dimension_numbers<[1], [0], [0], [1], [0, 0, 1, 1], [], []>} : vector<8x64xbf16>, vector<64x64xbf16>, vector<8x64xf32> -> vector<8x64xf32>
    %509 = arith.addf %505, %508 : vector<8x64xf32>
    %c0_132 = arith.constant 0 : index
    %c0_133 = arith.constant 0 : index
    %510 = vector.load %arg13[%c0_132, %c0_133] : memref<1x64xf32, #tpu.memory_space<vmem>>, vector<1x64xf32>
    %511 = vector.broadcast %510 : vector<1x64xf32> to vector<8x64xf32>
    %512 = arith.addf %509, %511 : vector<8x64xf32>
    %cst_134 = arith.constant 0.000000e+00 : f32
    %513 = vector.broadcast %cst_134 : f32 to vector<8x64xf32>
    %514 = arith.cmpf oge, %512, %513 : vector<8x64xf32>
    %cst_135 = arith.constant 0.00999999977 : f32
    %515 = vector.broadcast %cst_135 : f32 to vector<8x64xf32>
    %516 = arith.mulf %515, %512 : vector<8x64xf32>
    %517 = arith.select %514, %512, %516 : vector<8x64xi1>, vector<8x64xf32>
    %518 = arith.truncf %517 : vector<8x64xf32> to vector<8x64xbf16>
    %c0_136 = arith.constant 0 : index
    %c0_137 = arith.constant 0 : index
    %519 = vector.load %arg14[%c0_136, %c0_137] : memref<64x128xbf16, #tpu.memory_space<vmem>>, vector<64x128xbf16>
    %cst_138 = arith.constant dense<0.000000e+00> : vector<8x128xf32>
    %520 = tpu.matmul %518, %519, %cst_138 {dimension_numbers = #tpu.dot_dimension_numbers<[1], [0], [0], [1], [0, 0, 1, 1], [], []>} : vector<8x64xbf16>, vector<64x128xbf16>, vector<8x128xf32> -> vector<8x128xf32>
    %c0_139 = arith.constant 0 : index
    %c0_140 = arith.constant 0 : index
    %521 = vector.load %arg15[%c0_139, %c0_140] : memref<1x128xf32, #tpu.memory_space<vmem>>, vector<1x128xf32>
    %522 = vector.broadcast %521 : vector<1x128xf32> to vector<8x128xf32>
    %523 = arith.addf %520, %522 : vector<8x128xf32>
    %c0_141 = arith.constant 0 : index
    %c0_142 = arith.constant 0 : index
    %524 = vector.load %arg16[%c0_141, %c0_142] : memref<8x128xf32, #tpu.memory_space<vmem>>, vector<8x128xf32>
    tpu.vector_store %arg16[%c0_141, %c0_142], %523 {strides = array<i32>} : memref<8x128xf32, #tpu.memory_space<vmem>>, vector<8x128xf32>,
    return
  }
  func.func @transform_0(%arg0: i32, %arg1: memref<1xi32, #tpu.memory_space<smem>>) -> (i32, i32, i32) {
    %c0_i32 = arith.constant 0 : i32
    %c0_i32_0 = arith.constant 0 : i32
    %c0_i32_1 = arith.constant 0 : i32
    return %c0_i32, %arg0, %c0_i32_0 : i32, i32, i32
  }
  func.func @transform_1(%arg0: i32, %arg1: memref<1xi32, #tpu.memory_space<smem>>) -> (i32, i32) {
    %c0_i32 = arith.constant 0 : i32
    %c0_i32_0 = arith.constant 0 : i32
    return %arg0, %c0_i32 : i32, i32
  }
  func.func @transform_2(%arg0: i32, %arg1: memref<1xi32, #tpu.memory_space<smem>>) -> (i32, i32) {
    %c0_i32 = arith.constant 0 : i32
    %c0_i32_0 = arith.constant 0 : i32
    %c0_i32_1 = arith.constant 0 : i32
    return %c0_i32, %c0_i32_0 : i32, i32
  }
  func.func @transform_3(%arg0: i32, %arg1: memref<1xi32, #tpu.memory_space<smem>>) -> (i32, i32) {
    %c0_i32 = arith.constant 0 : i32
    %c0_i32_0 = arith.constant 0 : i32
    %c0_i32_1 = arith.constant 0 : i32
    return %c0_i32, %c0_i32_0 : i32, i32
  }
  func.func @transform_4(%arg0: i32, %arg1: memref<1xi32, #tpu.memory_space<smem>>) -> (i32, i32) {
    %c0_i32 = arith.constant 0 : i32
    %c0_i32_0 = arith.constant 0 : i32
    %c0_i32_1 = arith.constant 0 : i32
    return %c0_i32, %c0_i32_0 : i32, i32
  }
  func.func @transform_5(%arg0: i32, %arg1: memref<1xi32, #tpu.memory_space<smem>>) -> (i32, i32) {
    %c0_i32 = arith.constant 0 : i32
    %c0_i32_0 = arith.constant 0 : i32
    %c0_i32_1 = arith.constant 0 : i32
    return %c0_i32, %c0_i32_0 : i32, i32
  }
  func.func @transform_6(%arg0: i32, %arg1: memref<1xi32, #tpu.memory_space<smem>>) -> (i32, i32) {
    %c0_i32 = arith.constant 0 : i32
    %c0_i32_0 = arith.constant 0 : i32
    %c0_i32_1 = arith.constant 0 : i32
    return %c0_i32, %c0_i32_0 : i32, i32
  }
  func.func @transform_7(%arg0: i32, %arg1: memref<1xi32, #tpu.memory_space<smem>>) -> (i32, i32) {
    %c0_i32 = arith.constant 0 : i32
    %c0_i32_0 = arith.constant 0 : i32
    %c0_i32_1 = arith.constant 0 : i32
    return %c0_i32, %c0_i32_0 : i32, i32
  }
  func.func @transform_8(%arg0: i32, %arg1: memref<1xi32, #tpu.memory_space<smem>>) -> (i32, i32) {
    %c0_i32 = arith.constant 0 : i32
    %c0_i32_0 = arith.constant 0 : i32
    return %arg0, %c0_i32 : i32, i32
  }
  func.func @transform_9(%arg0: i32, %arg1: memref<1xi32, #tpu.memory_space<smem>>) -> (i32, i32) {
    %c0_i32 = arith.constant 0 : i32
    %c0_i32_0 = arith.constant 0 : i32
    %c0_i32_1 = arith.constant 0 : i32
    return %c0_i32, %c0_i32_0 : i32, i32
  }
  func.func @transform_10(%arg0: i32, %arg1: memref<1xi32, #tpu.memory_space<smem>>) -> (i32, i32) {
    %c0_i32 = arith.constant 0 : i32
    %c0_i32_0 = arith.constant 0 : i32
    %c0_i32_1 = arith.constant 0 : i32
    return %c0_i32, %c0_i32_0 : i32, i32
  }
  func.func @transform_11(%arg0: i32, %arg1: memref<1xi32, #tpu.memory_space<smem>>) -> (i32, i32) {
    %c0_i32 = arith.constant 0 : i32
    %c0_i32_0 = arith.constant 0 : i32
    %c0_i32_1 = arith.constant 0 : i32
    return %c0_i32, %c0_i32_0 : i32, i32
  }
  func.func @transform_12(%arg0: i32, %arg1: memref<1xi32, #tpu.memory_space<smem>>) -> (i32, i32) {
    %c0_i32 = arith.constant 0 : i32
    %c0_i32_0 = arith.constant 0 : i32
    %c0_i32_1 = arith.constant 0 : i32
    return %c0_i32, %c0_i32_0 : i32, i32
  }
  func.func @transform_13(%arg0: i32, %arg1: memref<1xi32, #tpu.memory_space<smem>>) -> (i32, i32) {
    %c0_i32 = arith.constant 0 : i32
    %c0_i32_0 = arith.constant 0 : i32
    %c0_i32_1 = arith.constant 0 : i32
    return %c0_i32, %c0_i32_0 : i32, i32
  }
  func.func @transform_14(%arg0: i32, %arg1: memref<1xi32, #tpu.memory_space<smem>>) -> (i32, i32) {
    %c0_i32 = arith.constant 0 : i32
    %c0_i32_0 = arith.constant 0 : i32
    return %arg0, %c0_i32 : i32, i32
  }
}

</mosaic_0001>

<llo_original>
// kernel: tpu_custom_call.1
$region0: #{tpu_custom_call.1}
  #allocation0 [shape = 'u32[]', space=smem, size = 0x4, offset = 0x4, fixed_abs, tag = 'smem constant byte address 0x4 - core index']
  #allocation1 [shape = 'u32[144,128]{1,0:T(1,128)}', space=vmem, size = 0x12000, scoped, tag = 'internal scratch']
  #allocation2 [shape = 's32[1]{0}', space=sflag, size = 0x4, scoped, tag = 'scoped memory for tpu_custom_call.1']
  #allocation3 [shape = 's32[1]{0:T(128)S(6)}', space=smem, size = 0x200, scoped, tag = 'prefetched SMEM operand 0']
  %s0 = inlined_call_operand.<no memory space> [shape: s32[1], index: 0, kind: input, shape index: {}]
  %s1 = inlined_call_operand.vmem [shape: bf16[8,8,64], index: 1, kind: input, shape index: {}]
  %s2 = inlined_call_operand.vmem [shape: s32[8,1], index: 2, kind: input, shape index: {}]
  %s3 = inlined_call_operand.hbm [shape: bf16[64,512], index: 3, kind: input, shape index: {}]
  %s4 = inlined_call_operand.hbm [shape: bf16[64,512], index: 4, kind: input, shape index: {}]
  %s5 = inlined_call_operand.vmem [shape: bf16[128,512], index: 5, kind: input, shape index: {}]
  %s6 = inlined_call_operand.vmem [shape: f32[1,512], index: 6, kind: input, shape index: {}]
  %s7 = inlined_call_operand.vmem [shape: bf16[128,64], index: 7, kind: input, shape index: {}]
  %s8 = inlined_call_operand.vmem [shape: f32[1,64], index: 8, kind: input, shape index: {}]
  %s9 = inlined_call_operand.vmem [shape: bf16[8,256], index: 9, kind: input, shape index: {}]
  %s10 = inlined_call_operand.vmem [shape: bf16[256,64], index: 10, kind: input, shape index: {}]
  %s11 = inlined_call_operand.hbm [shape: bf16[64,64], index: 11, kind: input, shape index: {}]
  %s12 = inlined_call_operand.vmem [shape: f32[1,64], index: 12, kind: input, shape index: {}]
  %s13 = inlined_call_operand.hbm [shape: bf16[64,128], index: 13, kind: input, shape index: {}]
  %s14 = inlined_call_operand.vmem [shape: f32[1,128], index: 14, kind: input, shape index: {}]
  %s15 = inlined_call_operand.hbm [shape: f32[8,128], index: 15, kind: output, shape index: {}]
  %s16 = sld [smem:[#allocation0]]
  $region82: #{tpu_custom_call.1} parent=0
    _
  %s18 = ssub.s32 1, %s16
  %s19 = scalar_select 0, %s18, %s16
  %20 = sst [smem:[#allocation3]] %s0
  $region1: #{tpu_custom_call.1} parent=0
    #allocation4 [shape = 'u8[65536]{0}', space=vmem, size = 0x10000, scoped, tag = 'input window, operand 3, single buffered']
    #allocation5 [shape = 's32[1]{0}', space=sflag, size = 0x4, scoped, tag = 'scoped memory for tpu_custom_call.1']
    #allocation6 [shape = 's32[1]{0}', space=sflag, size = 0x4, scoped, tag = 'scoped memory for tpu_custom_call.1']
    #allocation7 [shape = 'u8[65536]{0}', space=vmem, size = 0x10000, scoped, tag = 'input window, operand 4, single buffered']
    #allocation8 [shape = 's32[1]{0}', space=sflag, size = 0x4, scoped, tag = 'scoped memory for tpu_custom_call.1']
    #allocation9 [shape = 'u8[16384]{0}', space=vmem, size = 0x4000, scoped, tag = 'input window, operand 11, single buffered']
    #allocation10 [shape = 'u8[16384]{0}', space=vmem, size = 0x4000, scoped, tag = 'input window, operand 13, single buffered']
    #allocation11 [shape = 's32[1]{0}', space=sflag, size = 0x4, scoped, tag = 'scoped memory for tpu_custom_call.1']
    #allocation12 [shape = 'u8[4096]{0}', space=vmem, size = 0x1000, scoped, tag = 'output window, operand 0, single buffered']
    %21 = vsyncpa [#allocation5], 0
    %22 = vsyncpa [#allocation8], 0
    %23 = vsyncpa [#allocation11], 0
    %24 = vsyncpa [#allocation6], 0
    // Predicated region
    $region2: #{tpu_custom_call.1} parent=1 // pred_check
      _
    $region3: #{tpu_custom_call.1} parent=1 // pred_check_branch
      %26 = sbr.rel (0) target = $region5
    $region4: #{tpu_custom_call.1} parent=1 // pred_region
      _
    $region5: #{tpu_custom_call.1} parent=1 // pred_fallthru
      _
    // Predicated region
    $region6: #{tpu_custom_call.1} parent=1 // pred_check
      _
    $region7: #{tpu_custom_call.1} parent=1 // pred_check_branch
      %28 = sbr.rel (0) target = $region9
    $region8: #{tpu_custom_call.1} parent=1 // pred_region
      _
    $region9: #{tpu_custom_call.1} parent=1 // pred_fallthru
      _
    // Predicated region
    $region10: #{tpu_custom_call.1} parent=1 // pred_check
      _
    $region11: #{tpu_custom_call.1} parent=1 // pred_check_branch
      %30 = sbr.rel (0) target = $region13
    $region12: #{tpu_custom_call.1} parent=1 // pred_region
      %s32 = ssub.s32 2048, 2048
      %33 = vsyncadd [#allocation5], %s32
      %s34 = sshll.u32 [#allocation4], 4
      %s35 = int_to_ptr.vmem [resolvable:$true] %s34
      %40 = dma.hbm_to_vmem [thread:$0]  %s3, 2048, %s35, [#allocation5], 256, 256, 16
    $region13: #{tpu_custom_call.1} parent=1 // pred_fallthru
      _
    // Predicated region
    $region14: #{tpu_custom_call.1} parent=1 // pred_check
      _
    $region15: #{tpu_custom_call.1} parent=1 // pred_check_branch
      %42 = sbr.rel (0) target = $region17
    $region16: #{tpu_custom_call.1} parent=1 // pred_region
      %s44 = ssub.s32 2048, 2048
      %45 = vsyncadd [#allocation8], %s44
      %s46 = sshll.u32 [#allocation7], 4
      %s47 = int_to_ptr.vmem [resolvable:$true] %s46
      %52 = dma.hbm_to_vmem [thread:$0]  %s4, 2048, %s47, [#allocation8], 256, 256, 16
    $region17: #{tpu_custom_call.1} parent=1 // pred_fallthru
      _
    // Predicated region
    $region18: #{tpu_custom_call.1} parent=1 // pred_check
      _
    $region19: #{tpu_custom_call.1} parent=1 // pred_check_branch
      %54 = sbr.rel (0) target = $region21
    $region20: #{tpu_custom_call.1} parent=1 // pred_region
      _
    $region21: #{tpu_custom_call.1} parent=1 // pred_fallthru
      _
    // Predicated region
    $region22: #{tpu_custom_call.1} parent=1 // pred_check
      _
    $region23: #{tpu_custom_call.1} parent=1 // pred_check_branch
      %56 = sbr.rel (0) target = $region25
    $region24: #{tpu_custom_call.1} parent=1 // pred_region
      _
    $region25: #{tpu_custom_call.1} parent=1 // pred_fallthru
      _
    // Predicated region
    $region26: #{tpu_custom_call.1} parent=1 // pred_check
      _
    $region27: #{tpu_custom_call.1} parent=1 // pred_check_branch
      %58 = sbr.rel (0) target = $region29
    $region28: #{tpu_custom_call.1} parent=1 // pred_region
      _
    $region29: #{tpu_custom_call.1} parent=1 // pred_fallthru
      _
    // Predicated region
    $region30: #{tpu_custom_call.1} parent=1 // pred_check
      _
    $region31: #{tpu_custom_call.1} parent=1 // pred_check_branch
      %60 = sbr.rel (0) target = $region33
    $region32: #{tpu_custom_call.1} parent=1 // pred_region
      _
    $region33: #{tpu_custom_call.1} parent=1 // pred_fallthru
      _
    // Predicated region
    $region34: #{tpu_custom_call.1} parent=1 // pred_check
      _
    $region35: #{tpu_custom_call.1} parent=1 // pred_check_branch
      %62 = sbr.rel (0) target = $region37
    $region36: #{tpu_custom_call.1} parent=1 // pred_region
      _
    $region37: #{tpu_custom_call.1} parent=1 // pred_fallthru
      _
    // Predicated region
    $region38: #{tpu_custom_call.1} parent=1 // pred_check
      _
    $region39: #{tpu_custom_call.1} parent=1 // pred_check_branch
      %64 = sbr.rel (0) target = $region41
    $region40: #{tpu_custom_call.1} parent=1 // pred_region
      _
    $region41: #{tpu_custom_call.1} parent=1 // pred_fallthru
      _
    // Predicated region
    $region42: #{tpu_custom_call.1} parent=1 // pred_check
      _
    $region43: #{tpu_custom_call.1} parent=1 // pred_check_branch
      %66 = sbr.rel (0) target = $region45
    $region44: #{tpu_custom_call.1} parent=1 // pred_region
      %s68 = ssub.s32 512, 512
      %69 = vsyncadd [#allocation8], %s68
      %s70 = sshll.u32 [#allocation9], 4
      %s71 = int_to_ptr.vmem [resolvable:$true] %s70
      %76 = dma.hbm_to_vmem [thread:$0]  %s11, 512, %s71, [#allocation8], 64, 64, 4
    $region45: #{tpu_custom_call.1} parent=1 // pred_fallthru
      _
    // Predicated region
    $region46: #{tpu_custom_call.1} parent=1 // pred_check
      _
    $region47: #{tpu_custom_call.1} parent=1 // pred_check_branch
      %78 = sbr.rel (0) target = $region49
    $region48: #{tpu_custom_call.1} parent=1 // pred_region
      _
    $region49: #{tpu_custom_call.1} parent=1 // pred_fallthru
      _
    // Predicated region
    $region50: #{tpu_custom_call.1} parent=1 // pred_check
      _
    $region51: #{tpu_custom_call.1} parent=1 // pred_check_branch
      %80 = sbr.rel (0) target = $region53
    $region52: #{tpu_custom_call.1} parent=1 // pred_region
      %s82 = ssub.s32 512, 512
      %83 = vsyncadd [#allocation11], %s82
      %s84 = sshll.u32 [#allocation10], 4
      %s85 = int_to_ptr.vmem [resolvable:$true] %s84
      %90 = dma.hbm_to_vmem [thread:$0]  %s13, 512, %s85, [#allocation11], 64, 64, 4
    $region53: #{tpu_custom_call.1} parent=1 // pred_fallthru
      _
    // Predicated region
    $region54: #{tpu_custom_call.1} parent=1 // pred_check
      _
    $region55: #{tpu_custom_call.1} parent=1 // pred_check_branch
      %92 = sbr.rel (0) target = $region57
    $region56: #{tpu_custom_call.1} parent=1 // pred_region
      _
    $region57: #{tpu_custom_call.1} parent=1 // pred_fallthru
      _
    // Predicated region
    $region58: #{tpu_custom_call.1} parent=1 // pred_check
      _
    $region59: #{tpu_custom_call.1} parent=1 // pred_check_branch
      %94 = sbr.rel (0) target = $region61
    $region60: #{tpu_custom_call.1} parent=1 // pred_region
      %95 = dma.done [#allocation5], 2048
    $region61: #{tpu_custom_call.1} parent=1 // pred_fallthru
      _
    // Predicated region
    $region62: #{tpu_custom_call.1} parent=1 // pred_check
      _
    $region63: #{tpu_custom_call.1} parent=1 // pred_check_branch
      %97 = sbr.rel (0) target = $region65
    $region64: #{tpu_custom_call.1} parent=1 // pred_region
      %98 = dma.done [#allocation8], 2048
    $region65: #{tpu_custom_call.1} parent=1 // pred_fallthru
      _
    // Predicated region
    $region66: #{tpu_custom_call.1} parent=1 // pred_check
      _
    $region67: #{tpu_custom_call.1} parent=1 // pred_check_branch
      %100 = sbr.rel (0) target = $region69
    $region68: #{tpu_custom_call.1} parent=1 // pred_region
      %101 = dma.done [#allocation8], 512
    $region69: #{tpu_custom_call.1} parent=1 // pred_fallthru
      _
    // Predicated region
    $region70: #{tpu_custom_call.1} parent=1 // pred_check
      _
    $region71: #{tpu_custom_call.1} parent=1 // pred_check_branch
      %103 = sbr.rel (0) target = $region73
    $region72: #{tpu_custom_call.1} parent=1 // pred_region
      %104 = dma.done [#allocation11], 512
    $region73: #{tpu_custom_call.1} parent=1 // pred_fallthru
      _
    %s106 = sld [smem:[#allocation3]]
    %s107 = ssub.s32 %s106, 1
    %s108 = ssub.s32 8, %s106
    %v109 = vlaneseq
    %v110 = vand.u32 %v109, 127
    %vm111 = vcmp.lt.s32.totalorder %v110, 64
    %vm112 = vmxor %vm111, 1
    %v113 = vld [vmem:[%s2] sm:$0xff]
    %v114 = vld [vmem:[#allocation4] sm:$0xff]
    %v115 = vld [vmem:[#allocation4 + $0x8] sm:$0xff]
    %v116 = vld [vmem:[#allocation4 + $0x10] sm:$0xff]
    %v117 = vld [vmem:[#allocation4 + $0x18] sm:$0xff]
    %v118 = vld [vmem:[#allocation4 + $0x20] sm:$0xff]
    %v119 = vld [vmem:[#allocation4 + $0x28] sm:$0xff]
    %v120 = vld [vmem:[#allocation4 + $0x30] sm:$0xff]
    %v121 = vld [vmem:[#allocation4 + $0x38] sm:$0xff]
    %v122 = vld [vmem:[#allocation4 + $0x40] sm:$0xff]
    %v123 = vld [vmem:[#allocation4 + $0x48] sm:$0xff]
    %v124 = vld [vmem:[#allocation4 + $0x50] sm:$0xff]
    %v125 = vld [vmem:[#allocation4 + $0x58] sm:$0xff]
    %v126 = vld [vmem:[#allocation4 + $0x60] sm:$0xff]
    %v127 = vld [vmem:[#allocation4 + $0x68] sm:$0xff]
    %v128 = vld [vmem:[#allocation4 + $0x70] sm:$0xff]
    %v129 = vld [vmem:[#allocation4 + $0x78] sm:$0xff]
    %v130 = vld [vmem:[#allocation7] sm:$0xff]
    %v131 = vld [vmem:[#allocation7 + $0x8] sm:$0xff]
    %v132 = vld [vmem:[#allocation7 + $0x10] sm:$0xff]
    %v133 = vld [vmem:[#allocation7 + $0x18] sm:$0xff]
    %v134 = vld [vmem:[#allocation7 + $0x20] sm:$0xff]
    %v135 = vld [vmem:[#allocation7 + $0x28] sm:$0xff]
    %v136 = vld [vmem:[#allocation7 + $0x30] sm:$0xff]
    %v137 = vld [vmem:[#allocation7 + $0x38] sm:$0xff]
    %v138 = vld [vmem:[#allocation7 + $0x40] sm:$0xff]
    %v139 = vld [vmem:[#allocation7 + $0x48] sm:$0xff]
    %v140 = vld [vmem:[#allocation7 + $0x50] sm:$0xff]
    %v141 = vld [vmem:[#allocation7 + $0x58] sm:$0xff]
    %v142 = vld [vmem:[#allocation7 + $0x60] sm:$0xff]
    %v143 = vld [vmem:[#allocation7 + $0x68] sm:$0xff]
    %v144 = vld [vmem:[#allocation7 + $0x70] sm:$0xff]
    %v145 = vld [vmem:[#allocation7 + $0x78] sm:$0xff]
    %v146 = vld [vmem:[%s5] sm:$0xff]
    %v147 = vld [vmem:[%s5 + $0x8] sm:$0xff]
    %v148 = vld [vmem:[%s5 + $0x10] sm:$0xff]
    %v149 = vld [vmem:[%s5 + $0x18] sm:$0xff]
    %v150 = vld [vmem:[%s5 + $0x20] sm:$0xff]
    %v151 = vld [vmem:[%s5 + $0x28] sm:$0xff]
    %v152 = vld [vmem:[%s5 + $0x30] sm:$0xff]
    %v153 = vld [vmem:[%s5 + $0x38] sm:$0xff]
    %v154 = vld [vmem:[%s5 + $0x40] sm:$0xff]
    %v155 = vld [vmem:[%s5 + $0x48] sm:$0xff]
    %v156 = vld [vmem:[%s5 + $0x50] sm:$0xff]
    %v157 = vld [vmem:[%s5 + $0x58] sm:$0xff]
    %v158 = vld [vmem:[%s5 + $0x60] sm:$0xff]
    %v159 = vld [vmem:[%s5 + $0x68] sm:$0xff]
    %v160 = vld [vmem:[%s5 + $0x70] sm:$0xff]
    %v161 = vld [vmem:[%s5 + $0x78] sm:$0xff]
    %v162 = vld [vmem:[%s5 + $0x80] sm:$0xff]
    %v163 = vld [vmem:[%s5 + $0x88] sm:$0xff]
    %v164 = vld [vmem:[%s5 + $0x90] sm:$0xff]
    %v165 = vld [vmem:[%s5 + $0x98] sm:$0xff]
    %v166 = vld [vmem:[%s5 + $0xa0] sm:$0xff]
    %v167 = vld [vmem:[%s5 + $0xa8] sm:$0xff]
    %v168 = vld [vmem:[%s5 + $0xb0] sm:$0xff]
    %v169 = vld [vmem:[%s5 + $0xb8] sm:$0xff]
    %v170 = vld [vmem:[%s5 + $0xc0] sm:$0xff]
    %v171 = vld [vmem:[%s5 + $0xc8] sm:$0xff]
    %v172 = vld [vmem:[%s5 + $0xd0] sm:$0xff]
    %v173 = vld [vmem:[%s5 + $0xd8] sm:$0xff]
    %v174 = vld [vmem:[%s5 + $0xe0] sm:$0xff]
    %v175 = vld [vmem:[%s5 + $0xe8] sm:$0xff]
    %v176 = vld [vmem:[%s5 + $0xf0] sm:$0xff]
    %v177 = vld [vmem:[%s5 + $0xf8] sm:$0xff]
    %v178 = vld [vmem:[%s6] sm:$0xf]
    %v180 = vlaneseq
    %v181 = vshrl.u32 %v180, 7
    %v182 = vsub.s32 0, %v181
    %v183 = vrot.slane %v178, %v182
    %v184 = vlaneseq
    %v185 = vshrl.u32 %v184, 7
    %v186 = vsub.s32 1, %v185
    %v187 = vrot.slane %v178, %v186
    %v188 = vlaneseq
    %v189 = vshrl.u32 %v188, 7
    %v190 = vsub.s32 2, %v189
    %v191 = vrot.slane %v178, %v190
    %v192 = vlaneseq
    %v193 = vshrl.u32 %v192, 7
    %v194 = vsub.s32 3, %v193
    %v195 = vrot.slane %v178, %v194
    %v200 = vld [vmem:[%s1] sm:$0xf]
    %s201 = scalar_lea.vmem %s1, 28
    %v202 = vld [vmem:[%s201] sm:$0xf]
    %v219 = vunpack.c.l.b16 %v130
    %v220 = vunpack.c.h.b16 %v130
    %v221 = vunpack.c.l.b16 %v131
    %v222 = vunpack.c.h.b16 %v131
    %v223 = vunpack.c.l.b16 %v132
    %v224 = vunpack.c.h.b16 %v132
    %v225 = vunpack.c.l.b16 %v133
    %v226 = vunpack.c.h.b16 %v133
    %v227 = vunpack.c.l.b16 %v134
    %v228 = vunpack.c.h.b16 %v134
    %v229 = vunpack.c.l.b16 %v135
    %v230 = vunpack.c.h.b16 %v135
    %v231 = vunpack.c.l.b16 %v136
    %v232 = vunpack.c.h.b16 %v136
    %v233 = vunpack.c.l.b16 %v137
    %v234 = vunpack.c.h.b16 %v137
    %v235 = vunpack.c.l.b16 %v138
    %v236 = vunpack.c.h.b16 %v138
    %v237 = vunpack.c.l.b16 %v139
    %v238 = vunpack.c.h.b16 %v139
    %v239 = vunpack.c.l.b16 %v140
    %v240 = vunpack.c.h.b16 %v140
    %v241 = vunpack.c.l.b16 %v141
    %v242 = vunpack.c.h.b16 %v141
    %v243 = vunpack.c.l.b16 %v142
    %v244 = vunpack.c.h.b16 %v142
    %v245 = vunpack.c.l.b16 %v143
    %v246 = vunpack.c.h.b16 %v143
    %v247 = vunpack.c.l.b16 %v144
    %v248 = vunpack.c.h.b16 %v144
    %v249 = vunpack.c.l.b16 %v145
    %v250 = vunpack.c.h.b16 %v145
    %v251 = vpack.c.b16 %v223, %v219
    %v252 = vpack.c.b16 %v224, %v220
    %v253 = vpack.c.b16 %v225, %v221
    %v254 = vpack.c.b16 %v226, %v222
    %v255 = vpack.c.b16 %v231, %v227
    %v256 = vpack.c.b16 %v232, %v228
    %v257 = vpack.c.b16 %v233, %v229
    %v258 = vpack.c.b16 %v234, %v230
    %v259 = vpack.c.b16 %v239, %v235
    %v260 = vpack.c.b16 %v240, %v236
    %v261 = vpack.c.b16 %v241, %v237
    %v262 = vpack.c.b16 %v242, %v238
    %v263 = vpack.c.b16 %v247, %v243
    %v264 = vpack.c.b16 %v248, %v244
    %v265 = vpack.c.b16 %v249, %v245
    %v266 = vpack.c.b16 %v250, %v246
    %vm283 = vcmask 523264
    %v285 = vsel %vm283, %v202, 0
    %287 = vmatprep.subr.bf16.mxu0 0
    %288 = vmatpush1.bf16.msra.mxu0 0
    %289 = vmatprep.subr.bf16.mxu0 0
    %290 = vmatpush1.bf16.msra.mxu0 0
    %291 = vmatprep.subr.bf16.mxu0 0
    %292 = vmatpush1.bf16.msra.mxu0 0
    %293 = vmatprep.subr.bf16.mxu0 0
    %294 = vmatpush1.bf16.msra.mxu0 0
    %295 = vmatprep.subr.bf16.mxu0 %v264
    %296 = vmatpush1.bf16.msra.mxu0 %v263
    %297 = vmatprep.subr.bf16.mxu0 %v260
    %298 = vmatpush1.bf16.msra.mxu0 %v259
    %299 = vmatprep.subr.bf16.mxu0 %v256
    %300 = vmatpush1.bf16.msra.mxu0 %v255
    %301 = vmatprep.subr.bf16.mxu0 %v252
    %302 = vmatpush1.bf16.msra.mxu0 %v251
    %303 = vmatprep.subr.bf16.mxu0 0
    %304 = vmatpush2.bf16.msra.mxu0 0
    %305 = vmatprep.subr.bf16.mxu0 0
    %306 = vmatpush2.bf16.msra.mxu0 0
    %307 = vmatprep.subr.bf16.mxu0 0
    %308 = vmatpush2.bf16.msra.mxu0 0
    %309 = vmatprep.subr.bf16.mxu0 0
    %310 = vmatpush2.bf16.msra.mxu0 0
    %311 = vmatprep.subr.bf16.mxu0 0
    %312 = vmatpush2.bf16.msra.mxu0 0
    %313 = vmatprep.subr.bf16.mxu0 0
    %314 = vmatpush2.bf16.msra.mxu0 0
    %315 = vmatprep.subr.bf16.mxu0 0
    %316 = vmatpush2.bf16.msra.mxu0 0
    %317 = vmatprep.subr.bf16.mxu0 0
    %318 = vmatpush2.bf16.msra.mxu0 0
    %319 = vmatprep.mubr.bf16.mxu0 0
    %320 = vmatmul.mubr.bf16.gmra.mxu0 %v285
    %v321 = vpop.f32.mrf.mxu0
    %v322 = vadd.f32 0.0, %v321
    %v323 = vpop.f32.mrf.mxu0
    %v324 = vadd.f32 0.0, %v323
    %v325 = vpop.f32.mrf.mxu0
    %v326 = vpop.f32.mrf.mxu0
    %327 = vdwg.mxu0
    %328 = vmatprep.subr.bf16.mxu0 0
    %329 = vmatpush1.bf16.msra.mxu0 0
    %330 = vmatprep.subr.bf16.mxu0 0
    %331 = vmatpush1.bf16.msra.mxu0 0
    %332 = vmatprep.subr.bf16.mxu0 0
    %333 = vmatpush1.bf16.msra.mxu0 0
    %334 = vmatprep.subr.bf16.mxu0 0
    %335 = vmatpush1.bf16.msra.mxu0 0
    %336 = vmatprep.subr.bf16.mxu0 %v266
    %337 = vmatpush1.bf16.msra.mxu0 %v265
    %338 = vmatprep.subr.bf16.mxu0 %v262
    %339 = vmatpush1.bf16.msra.mxu0 %v261
    %340 = vmatprep.subr.bf16.mxu0 %v258
    %341 = vmatpush1.bf16.msra.mxu0 %v257
    %342 = vmatprep.subr.bf16.mxu0 %v254
    %343 = vmatpush1.bf16.msra.mxu0 %v253
    %344 = vmatprep.subr.bf16.mxu0 0
    %345 = vmatpush2.bf16.msra.mxu0 0
    %346 = vmatprep.subr.bf16.mxu0 0
    %347 = vmatpush2.bf16.msra.mxu0 0
    %348 = vmatprep.subr.bf16.mxu0 0
    %349 = vmatpush2.bf16.msra.mxu0 0
    %350 = vmatprep.subr.bf16.mxu0 0
    %351 = vmatpush2.bf16.msra.mxu0 0
    %352 = vmatprep.subr.bf16.mxu0 0
    %353 = vmatpush2.bf16.msra.mxu0 0
    %354 = vmatprep.subr.bf16.mxu0 0
    %355 = vmatpush2.bf16.msra.mxu0 0
    %356 = vmatprep.subr.bf16.mxu0 0
    %357 = vmatpush2.bf16.msra.mxu0 0
    %358 = vmatprep.subr.bf16.mxu0 0
    %359 = vmatpush2.bf16.msra.mxu0 0
    %360 = vmatprep.mubr.bf16.mxu0 0
    %361 = vmatmul.mubr.bf16.gmra.mxu0 %v285
    %v362 = vpop.f32.mrf.mxu0
    %v363 = vadd.f32 0.0, %v362
    %v364 = vpop.f32.mrf.mxu0
    %v365 = vadd.f32 0.0, %v364
    %v366 = vpop.f32.mrf.mxu0
    %v367 = vpop.f32.mrf.mxu0
    %368 = vdwg.mxu0
    %v385 = vunpack.c.l.b16 %v114
    %v386 = vunpack.c.h.b16 %v114
    %v387 = vunpack.c.l.b16 %v115
    %v388 = vunpack.c.h.b16 %v115
    %v389 = vunpack.c.l.b16 %v116
    %v390 = vunpack.c.h.b16 %v116
    %v391 = vunpack.c.l.b16 %v117
    %v392 = vunpack.c.h.b16 %v117
    %v393 = vunpack.c.l.b16 %v118
    %v394 = vunpack.c.h.b16 %v118
    %v395 = vunpack.c.l.b16 %v119
    %v396 = vunpack.c.h.b16 %v119
    %v397 = vunpack.c.l.b16 %v120
    %v398 = vunpack.c.h.b16 %v120
    %v399 = vunpack.c.l.b16 %v121
    %v400 = vunpack.c.h.b16 %v121
    %v401 = vunpack.c.l.b16 %v122
    %v402 = vunpack.c.h.b16 %v122
    %v403 = vunpack.c.l.b16 %v123
    %v404 = vunpack.c.h.b16 %v123
    %v405 = vunpack.c.l.b16 %v124
    %v406 = vunpack.c.h.b16 %v124
    %v407 = vunpack.c.l.b16 %v125
    %v408 = vunpack.c.h.b16 %v125
    %v409 = vunpack.c.l.b16 %v126
    %v410 = vunpack.c.h.b16 %v126
    %v411 = vunpack.c.l.b16 %v127
    %v412 = vunpack.c.h.b16 %v127
    %v413 = vunpack.c.l.b16 %v128
    %v414 = vunpack.c.h.b16 %v128
    %v415 = vunpack.c.l.b16 %v129
    %v416 = vunpack.c.h.b16 %v129
    %v417 = vpack.c.b16 %v389, %v385
    %v418 = vpack.c.b16 %v390, %v386
    %v419 = vpack.c.b16 %v391, %v387
    %v420 = vpack.c.b16 %v392, %v388
    %v421 = vpack.c.b16 %v397, %v393
    %v422 = vpack.c.b16 %v398, %v394
    %v423 = vpack.c.b16 %v399, %v395
    %v424 = vpack.c.b16 %v400, %v396
    %v425 = vpack.c.b16 %v405, %v401
    %v426 = vpack.c.b16 %v406, %v402
    %v427 = vpack.c.b16 %v407, %v403
    %v428 = vpack.c.b16 %v408, %v404
    %v429 = vpack.c.b16 %v413, %v409
    %v430 = vpack.c.b16 %v414, %v410
    %v431 = vpack.c.b16 %v415, %v411
    %v432 = vpack.c.b16 %v416, %v412
    %v450 = vsel %vm283, %v200, 0
    %452 = vmatprep.subr.bf16.mxu0 0
    %453 = vmatpush1.bf16.msra.mxu0 0
    %454 = vmatprep.subr.bf16.mxu0 0
    %455 = vmatpush1.bf16.msra.mxu0 0
    %456 = vmatprep.subr.bf16.mxu0 0
    %457 = vmatpush1.bf16.msra.mxu0 0
    %458 = vmatprep.subr.bf16.mxu0 0
    %459 = vmatpush1.bf16.msra.mxu0 0
    %460 = vmatprep.subr.bf16.mxu0 %v430
    %461 = vmatpush1.bf16.msra.mxu0 %v429
    %462 = vmatprep.subr.bf16.mxu0 %v426
    %463 = vmatpush1.bf16.msra.mxu0 %v425
    %464 = vmatprep.subr.bf16.mxu0 %v422
    %465 = vmatpush1.bf16.msra.mxu0 %v421
    %466 = vmatprep.subr.bf16.mxu0 %v418
    %467 = vmatpush1.bf16.msra.mxu0 %v417
    %468 = vmatprep.subr.bf16.mxu0 0
    %469 = vmatpush2.bf16.msra.mxu0 0
    %470 = vmatprep.subr.bf16.mxu0 0
    %471 = vmatpush2.bf16.msra.mxu0 0
    %472 = vmatprep.subr.bf16.mxu0 0
    %473 = vmatpush2.bf16.msra.mxu0 0
    %474 = vmatprep.subr.bf16.mxu0 0
    %475 = vmatpush2.bf16.msra.mxu0 0
    %476 = vmatprep.subr.bf16.mxu0 0
    %477 = vmatpush2.bf16.msra.mxu0 0
    %478 = vmatprep.subr.bf16.mxu0 0
    %479 = vmatpush2.bf16.msra.mxu0 0
    %480 = vmatprep.subr.bf16.mxu0 0
    %481 = vmatpush2.bf16.msra.mxu0 0
    %482 = vmatprep.subr.bf16.mxu0 0
    %483 = vmatpush2.bf16.msra.mxu0 0
    %484 = vmatprep.mubr.bf16.mxu0 0
    %485 = vmatmul.mubr.bf16.gmra.mxu0 %v450
    %v486 = vpop.f32.mrf.mxu0
    %v487 = vadd.f32 %v322, %v486
    %v488 = vpop.f32.mrf.mxu0
    %v489 = vadd.f32 %v324, %v488
    %v490 = vpop.f32.mrf.mxu0
    %v491 = vpop.f32.mrf.mxu0
    %492 = vdwg.mxu0
    %493 = vmatprep.subr.bf16.mxu0 0
    %494 = vmatpush1.bf16.msra.mxu0 0
    %495 = vmatprep.subr.bf16.mxu0 0
    %496 = vmatpush1.bf16.msra.mxu0 0
    %497 = vmatprep.subr.bf16.mxu0 0
    %498 = vmatpush1.bf16.msra.mxu0 0
    %499 = vmatprep.subr.bf16.mxu0 0
    %500 = vmatpush1.bf16.msra.mxu0 0
    %501 = vmatprep.subr.bf16.mxu0 %v432
    %502 = vmatpush1.bf16.msra.mxu0 %v431
    %503 = vmatprep.subr.bf16.mxu0 %v428
    %504 = vmatpush1.bf16.msra.mxu0 %v427
    %505 = vmatprep.subr.bf16.mxu0 %v424
    %506 = vmatpush1.bf16.msra.mxu0 %v423
    %507 = vmatprep.subr.bf16.mxu0 %v420
    %508 = vmatpush1.bf16.msra.mxu0 %v419
    %509 = vmatprep.subr.bf16.mxu0 0
    %510 = vmatpush2.bf16.msra.mxu0 0
    %511 = vmatprep.subr.bf16.mxu0 0
    %512 = vmatpush2.bf16.msra.mxu0 0
    %513 = vmatprep.subr.bf16.mxu0 0
    %514 = vmatpush2.bf16.msra.mxu0 0
    %515 = vmatprep.subr.bf16.mxu0 0
    %516 = vmatpush2.bf16.msra.mxu0 0
    %517 = vmatprep.subr.bf16.mxu0 0
    %518 = vmatpush2.bf16.msra.mxu0 0
    %519 = vmatprep.subr.bf16.mxu0 0
    %520 = vmatpush2.bf16.msra.mxu0 0
    %521 = vmatprep.subr.bf16.mxu0 0
    %522 = vmatpush2.bf16.msra.mxu0 0
    %523 = vmatprep.subr.bf16.mxu0 0
    %524 = vmatpush2.bf16.msra.mxu0 0
    %525 = vmatprep.mubr.bf16.mxu0 0
    %526 = vmatmul.mubr.bf16.gmra.mxu0 %v450
    %v527 = vpop.f32.mrf.mxu0
    %v528 = vadd.f32 %v363, %v527
    %v529 = vpop.f32.mrf.mxu0
    %v530 = vadd.f32 %v365, %v529
    %v531 = vpop.f32.mrf.mxu0
    %v532 = vpop.f32.mrf.mxu0
    %533 = vdwg.mxu0
    %v566 = vunpack.c.l.b16 %v146
    %v567 = vunpack.c.h.b16 %v146
    %v568 = vunpack.c.l.b16 %v147
    %v569 = vunpack.c.h.b16 %v147
    %v570 = vunpack.c.l.b16 %v148
    %v571 = vunpack.c.h.b16 %v148
    %v572 = vunpack.c.l.b16 %v149
    %v573 = vunpack.c.h.b16 %v149
    %v574 = vunpack.c.l.b16 %v150
    %v575 = vunpack.c.h.b16 %v150
    %v576 = vunpack.c.l.b16 %v151
    %v577 = vunpack.c.h.b16 %v151
    %v578 = vunpack.c.l.b16 %v152
    %v579 = vunpack.c.h.b16 %v152
    %v580 = vunpack.c.l.b16 %v153
    %v581 = vunpack.c.h.b16 %v153
    %v582 = vunpack.c.l.b16 %v154
    %v583 = vunpack.c.h.b16 %v154
    %v584 = vunpack.c.l.b16 %v155
    %v585 = vunpack.c.h.b16 %v155
    %v586 = vunpack.c.l.b16 %v156
    %v587 = vunpack.c.h.b16 %v156
    %v588 = vunpack.c.l.b16 %v157
    %v589 = vunpack.c.h.b16 %v157
    %v590 = vunpack.c.l.b16 %v158
    %v591 = vunpack.c.h.b16 %v158
    %v592 = vunpack.c.l.b16 %v159
    %v593 = vunpack.c.h.b16 %v159
    %v594 = vunpack.c.l.b16 %v160
    %v595 = vunpack.c.h.b16 %v160
    %v596 = vunpack.c.l.b16 %v161
    %v597 = vunpack.c.h.b16 %v161
    %v598 = vunpack.c.l.b16 %v162
    %v599 = vunpack.c.h.b16 %v162
    %v600 = vunpack.c.l.b16 %v163
    %v601 = vunpack.c.h.b16 %v163
    %v602 = vunpack.c.l.b16 %v164
    %v603 = vunpack.c.h.b16 %v164
    %v604 = vunpack.c.l.b16 %v165
    %v605 = vunpack.c.h.b16 %v165
    %v606 = vunpack.c.l.b16 %v166
    %v607 = vunpack.c.h.b16 %v166
    %v608 = vunpack.c.l.b16 %v167
    %v609 = vunpack.c.h.b16 %v167
    %v610 = vunpack.c.l.b16 %v168
    %v611 = vunpack.c.h.b16 %v168
    %v612 = vunpack.c.l.b16 %v169
    %v613 = vunpack.c.h.b16 %v169
    %v614 = vunpack.c.l.b16 %v170
    %v615 = vunpack.c.h.b16 %v170
    %v616 = vunpack.c.l.b16 %v171
    %v617 = vunpack.c.h.b16 %v171
    %v618 = vunpack.c.l.b16 %v172
    %v619 = vunpack.c.h.b16 %v172
    %v620 = vunpack.c.l.b16 %v173
    %v621 = vunpack.c.h.b16 %v173
    %v622 = vunpack.c.l.b16 %v174
    %v623 = vunpack.c.h.b16 %v174
    %v624 = vunpack.c.l.b16 %v175
    %v625 = vunpack.c.h.b16 %v175
    %v626 = vunpack.c.l.b16 %v176
    %v627 = vunpack.c.h.b16 %v176
    %v628 = vunpack.c.l.b16 %v177
    %v629 = vunpack.c.h.b16 %v177
    %v630 = vpack.c.b16 %v570, %v566
    %v631 = vpack.c.b16 %v571, %v567
    %v632 = vpack.c.b16 %v572, %v568
    %v633 = vpack.c.b16 %v573, %v569
    %v634 = vpack.c.b16 %v578, %v574
    %v635 = vpack.c.b16 %v579, %v575
    %v636 = vpack.c.b16 %v580, %v576
    %v637 = vpack.c.b16 %v581, %v577
    %v638 = vpack.c.b16 %v586, %v582
    %v639 = vpack.c.b16 %v587, %v583
    %v640 = vpack.c.b16 %v588, %v584
    %v641 = vpack.c.b16 %v589, %v585
    %v642 = vpack.c.b16 %v594, %v590
    %v643 = vpack.c.b16 %v595, %v591
    %v644 = vpack.c.b16 %v596, %v592
    %v645 = vpack.c.b16 %v597, %v593
    %v646 = vpack.c.b16 %v602, %v598
    %v647 = vpack.c.b16 %v603, %v599
    %v648 = vpack.c.b16 %v604, %v600
    %v649 = vpack.c.b16 %v605, %v601
    %v650 = vpack.c.b16 %v610, %v606
    %v651 = vpack.c.b16 %v611, %v607
    %v652 = vpack.c.b16 %v612, %v608
    %v653 = vpack.c.b16 %v613, %v609
    %v654 = vpack.c.b16 %v618, %v614
    %v655 = vpack.c.b16 %v619, %v615
    %v656 = vpack.c.b16 %v620, %v616
    %v657 = vpack.c.b16 %v621, %v617
    %v658 = vpack.c.b16 %v626, %v622
    %v659 = vpack.c.b16 %v627, %v623
    %v660 = vpack.c.b16 %v628, %v624
    %v661 = vpack.c.b16 %v629, %v625
    %694 = vmatprep.subr.bf16.mxu0 %v659
    %695 = vmatpush1.bf16.msra.mxu0 %v658
    %696 = vmatprep.subr.bf16.mxu0 %v655
    %697 = vmatpush1.bf16.msra.mxu0 %v654
    %698 = vmatprep.subr.bf16.mxu0 %v651
    %699 = vmatpush1.bf16.msra.mxu0 %v650
    %700 = vmatprep.subr.bf16.mxu0 %v647
    %701 = vmatpush1.bf16.msra.mxu0 %v646
    %702 = vmatprep.subr.bf16.mxu0 %v643
    %703 = vmatpush1.bf16.msra.mxu0 %v642
    %704 = vmatprep.subr.bf16.mxu0 %v639
    %705 = vmatpush1.bf16.msra.mxu0 %v638
    %706 = vmatprep.subr.bf16.mxu0 %v635
    %707 = vmatpush1.bf16.msra.mxu0 %v634
    %708 = vmatprep.subr.bf16.mxu0 %v631
    %709 = vmatpush1.bf16.msra.mxu0 %v630
    %710 = vmatprep.subr.bf16.mxu0 0
    %711 = vmatpush2.bf16.msra.mxu0 0
    %712 = vmatprep.subr.bf16.mxu0 0
    %713 = vmatpush2.bf16.msra.mxu0 0
    %714 = vmatprep.subr.bf16.mxu0 0
    %715 = vmatpush2.bf16.msra.mxu0 0
    %716 = vmatprep.subr.bf16.mxu0 0
    %717 = vmatpush2.bf16.msra.mxu0 0
    %718 = vmatprep.subr.bf16.mxu0 0
    %719 = vmatpush2.bf16.msra.mxu0 0
    %720 = vmatprep.subr.bf16.mxu0 0
    %721 = vmatpush2.bf16.msra.mxu0 0
    %722 = vmatprep.subr.bf16.mxu0 0
    %723 = vmatpush2.bf16.msra.mxu0 0
    %724 = vmatprep.subr.bf16.mxu0 0
    %725 = vmatpush2.bf16.msra.mxu0 0
    %726 = vmatprep.mubr.bf16.mxu0 0
    %727 = vmatmul.mubr.bf16.gmra.mxu0 0
    %v728 = vpop.f32.mrf.mxu0
    %v729 = vadd.f32 0.0, %v728
    %v730 = vpop.f32.mrf.mxu0
    %v731 = vadd.f32 0.0, %v730
    %v732 = vpop.f32.mrf.mxu0
    %v733 = vpop.f32.mrf.mxu0
    %734 = vdwg.mxu0
    %735 = vmatprep.subr.bf16.mxu0 %v661
    %736 = vmatpush1.bf16.msra.mxu0 %v660
    %737 = vmatprep.subr.bf16.mxu0 %v657
    %738 = vmatpush1.bf16.msra.mxu0 %v656
    %739 = vmatprep.subr.bf16.mxu0 %v653
    %740 = vmatpush1.bf16.msra.mxu0 %v652
    %741 = vmatprep.subr.bf16.mxu0 %v649
    %742 = vmatpush1.bf16.msra.mxu0 %v648
    %743 = vmatprep.subr.bf16.mxu0 %v645
    %744 = vmatpush1.bf16.msra.mxu0 %v644
    %745 = vmatprep.subr.bf16.mxu0 %v641
    %746 = vmatpush1.bf16.msra.mxu0 %v640
    %747 = vmatprep.subr.bf16.mxu0 %v637
    %748 = vmatpush1.bf16.msra.mxu0 %v636
    %749 = vmatprep.subr.bf16.mxu0 %v633
    %750 = vmatpush1.bf16.msra.mxu0 %v632
    %751 = vmatprep.subr.bf16.mxu0 0
    %752 = vmatpush2.bf16.msra.mxu0 0
    %753 = vmatprep.subr.bf16.mxu0 0
    %754 = vmatpush2.bf16.msra.mxu0 0
    %755 = vmatprep.subr.bf16.mxu0 0
    %756 = vmatpush2.bf16.msra.mxu0 0
    %757 = vmatprep.subr.bf16.mxu0 0
    %758 = vmatpush2.bf16.msra.mxu0 0
    %759 = vmatprep.subr.bf16.mxu0 0
    %760 = vmatpush2.bf16.msra.mxu0 0
    %761 = vmatprep.subr.bf16.mxu0 0
    %762 = vmatpush2.bf16.msra.mxu0 0
    %763 = vmatprep.subr.bf16.mxu0 0
    %764 = vmatpush2.bf16.msra.mxu0 0
    %765 = vmatprep.subr.bf16.mxu0 0
    %766 = vmatpush2.bf16.msra.mxu0 0
    %767 = vmatprep.mubr.bf16.mxu0 0
    %768 = vmatmul.mubr.bf16.gmra.mxu0 0
    %v769 = vpop.f32.mrf.mxu0
    %v770 = vadd.f32 0.0, %v769
    %v771 = vpop.f32.mrf.mxu0
    %v772 = vadd.f32 0.0, %v771
    %v773 = vpop.f32.mrf.mxu0
    %v774 = vpop.f32.mrf.mxu0
    %775 = vdwg.mxu0
    %v776 = vadd.f32 %v487, %v729
    %v777 = vadd.f32 %v489, %v731
    %v778 = vadd.f32 %v528, %v770
    %v779 = vadd.f32 %v530, %v772
    %v780 = vadd.f32 %v776, %v183
    %v781 = vadd.f32 %v777, %v187
    %v782 = vadd.f32 %v778, %v191
    %v783 = vadd.f32 %v779, %v195
    %v784 = vxor.u32 %v780, 2147483648
    %v785 = vmul.f32 %v784, 1.442695
    %v786 = vpow.pop %v785
    %v787 = vadd.f32 %v786, 1.0
    %v788 = vrcp.pop %v787
    %v789 = vmul.f32 1.0, %v788
    %v790 = vxor.u32 %v781, 2147483648
    %v791 = vmul.f32 %v790, 1.442695
    %v792 = vpow.pop %v791
    %v793 = vadd.f32 %v792, 1.0
    %v794 = vrcp.pop %v793
    %v795 = vmul.f32 1.0, %v794
    %v796 = vtanh.pop %v782
    %v797 = vxor.u32 %v783, 2147483648
    %v798 = vmul.f32 %v797, 1.442695
    %v799 = vpow.pop %v798
    %v800 = vadd.f32 %v799, 1.0
    %v801 = vrcp.pop %v800
    %v802 = vmul.f32 1.0, %v801
    %v803 = vmul.f32 %v795, 0.0
    %v804 = vmul.f32 %v789, %v796
    %v805 = vadd.f32 %v803, %v804
    %v806 = vtanh.pop %v805
    %v807 = vmul.f32 %v802, %v806
    %v808 = vsel %vm111, 0, 7
    %809 = vset.pattern.permute.xlu0 0
    %810 = vperm.xlu0 %809, %v113
    %v811 = vpop.permute.xlu0 %810
    %vm812 = vcmp.lt.s32.totalorder %v808, %v811
    %v813 = vsel %vm812, %v807, 0.0
    %v814 = vsel %vm812, %v805, 0.0
    %p815 = scmp.eq.s32.totalorder %s107, 0
    %s816 = scalar_select %p815, 1, 0
    %v817 = vstv %s816
    %vm818 = vcmp.eq.s32.totalorder %v817, 1
    %vm819 = vmand %vm818, %vm111
    %p820 = scmp.eq.s32.totalorder %s108, 0
    %s821 = scalar_select %p820, 1, 0
    %v822 = vstv %s821
    %vm823 = vcmp.eq.s32.totalorder %v822, 1
    %vm824 = vmand %vm823, %vm112
    %vm825 = vmor %vm819, %vm824
    %v826 = vsel %vm825, 1, 0
    %vm827 = vcmp.eq.s32.totalorder %v826, 1
    %v828 = vsel %vm827, %v813, 0.0
    %s829 = scalar_lea.vmem %s1, 4
    %v830 = vld [vmem:[%s829] sm:$0xf]
    %s831 = scalar_lea.vmem %s1, 24
    %v832 = vld [vmem:[%s831] sm:$0xf]
    %v834 = vsel %vm283, %v832, 0
    %836 = vmatprep.subr.bf16.mxu0 0
    %837 = vmatpush1.bf16.msra.mxu0 0
    %838 = vmatprep.subr.bf16.mxu0 0
    %839 = vmatpush1.bf16.msra.mxu0 0
    %840 = vmatprep.subr.bf16.mxu0 0
    %841 = vmatpush1.bf16.msra.mxu0 0
    %842 = vmatprep.subr.bf16.mxu0 0
    %843 = vmatpush1.bf16.msra.mxu0 0
    %844 = vmatprep.subr.bf16.mxu0 %v264
    %845 = vmatpush1.bf16.msra.mxu0 %v263
    %846 = vmatprep.subr.bf16.mxu0 %v260
    %847 = vmatpush1.bf16.msra.mxu0 %v259
    %848 = vmatprep.subr.bf16.mxu0 %v256
    %849 = vmatpush1.bf16.msra.mxu0 %v255
    %850 = vmatprep.subr.bf16.mxu0 %v252
    %851 = vmatpush1.bf16.msra.mxu0 %v251
    %852 = vmatprep.subr.bf16.mxu0 0
    %853 = vmatpush2.bf16.msra.mxu0 0
    %854 = vmatprep.subr.bf16.mxu0 0
    %855 = vmatpush2.bf16.msra.mxu0 0
    %856 = vmatprep.subr.bf16.mxu0 0
    %857 = vmatpush2.bf16.msra.mxu0 0
    %858 = vmatprep.subr.bf16.mxu0 0
    %859 = vmatpush2.bf16.msra.mxu0 0
    %860 = vmatprep.subr.bf16.mxu0 0
    %861 = vmatpush2.bf16.msra.mxu0 0
    %862 = vmatprep.subr.bf16.mxu0 0
    %863 = vmatpush2.bf16.msra.mxu0 0
    %864 = vmatprep.subr.bf16.mxu0 0
    %865 = vmatpush2.bf16.msra.mxu0 0
    %866 = vmatprep.subr.bf16.mxu0 0
    %867 = vmatpush2.bf16.msra.mxu0 0
    %868 = vmatprep.mubr.bf16.mxu0 0
    %869 = vmatmul.mubr.bf16.gmra.mxu0 %v834
    %v870 = vpop.f32.mrf.mxu0
    %v871 = vadd.f32 0.0, %v870
    %v872 = vpop.f32.mrf.mxu0
    %v873 = vadd.f32 0.0, %v872
    %v874 = vpop.f32.mrf.mxu0
    %v875 = vpop.f32.mrf.mxu0
    %876 = vdwg.mxu0
    %877 = vmatprep.subr.bf16.mxu0 0
    %878 = vmatpush1.bf16.msra.mxu0 0
    %879 = vmatprep.subr.bf16.mxu0 0
    %880 = vmatpush1.bf16.msra.mxu0 0
    %881 = vmatprep.subr.bf16.mxu0 0
    %882 = vmatpush1.bf16.msra.mxu0 0
    %883 = vmatprep.subr.bf16.mxu0 0
    %884 = vmatpush1.bf16.msra.mxu0 0
    %885 = vmatprep.subr.bf16.mxu0 %v266
    %886 = vmatpush1.bf16.msra.mxu0 %v265
    %887 = vmatprep.subr.bf16.mxu0 %v262
    %888 = vmatpush1.bf16.msra.mxu0 %v261
    %889 = vmatprep.subr.bf16.mxu0 %v258
    %890 = vmatpush1.bf16.msra.mxu0 %v257
    %891 = vmatprep.subr.bf16.mxu0 %v254
    %892 = vmatpush1.bf16.msra.mxu0 %v253
    %893 = vmatprep.subr.bf16.mxu0 0
    %894 = vmatpush2.bf16.msra.mxu0 0
    %895 = vmatprep.subr.bf16.mxu0 0
    %896 = vmatpush2.bf16.msra.mxu0 0
    %897 = vmatprep.subr.bf16.mxu0 0
    %898 = vmatpush2.bf16.msra.mxu0 0
    %899 = vmatprep.subr.bf16.mxu0 0
    %900 = vmatpush2.bf16.msra.mxu0 0
    %901 = vmatprep.subr.bf16.mxu0 0
    %902 = vmatpush2.bf16.msra.mxu0 0
    %903 = vmatprep.subr.bf16.mxu0 0
    %904 = vmatpush2.bf16.msra.mxu0 0
    %905 = vmatprep.subr.bf16.mxu0 0
    %906 = vmatpush2.bf16.msra.mxu0 0
    %907 = vmatprep.subr.bf16.mxu0 0
    %908 = vmatpush2.bf16.msra.mxu0 0
    %909 = vmatprep.mubr.bf16.mxu0 0
    %910 = vmatmul.mubr.bf16.gmra.mxu0 %v834
    %v911 = vpop.f32.mrf.mxu0
    %v912 = vadd.f32 0.0, %v911
    %v913 = vpop.f32.mrf.mxu0
    %v914 = vadd.f32 0.0, %v913
    %v915 = vpop.f32.mrf.mxu0
    %v916 = vpop.f32.mrf.mxu0
    %917 = vdwg.mxu0
    %v919 = vsel %vm283, %v830, 0
    %921 = vmatprep.subr.bf16.mxu0 0
    %922 = vmatpush1.bf16.msra.mxu0 0
    %923 = vmatprep.subr.bf16.mxu0 0
    %924 = vmatpush1.bf16.msra.mxu0 0
    %925 = vmatprep.subr.bf16.mxu0 0
    %926 = vmatpush1.bf16.msra.mxu0 0
    %927 = vmatprep.subr.bf16.mxu0 0
    %928 = vmatpush1.bf16.msra.mxu0 0
    %929 = vmatprep.subr.bf16.mxu0 %v430
    %930 = vmatpush1.bf16.msra.mxu0 %v429
    %931 = vmatprep.subr.bf16.mxu0 %v426
    %932 = vmatpush1.bf16.msra.mxu0 %v425
    %933 = vmatprep.subr.bf16.mxu0 %v422
    %934 = vmatpush1.bf16.msra.mxu0 %v421
    %935 = vmatprep.subr.bf16.mxu0 %v418
    %936 = vmatpush1.bf16.msra.mxu0 %v417
    %937 = vmatprep.subr.bf16.mxu0 0
    %938 = vmatpush2.bf16.msra.mxu0 0
    %939 = vmatprep.subr.bf16.mxu0 0
    %940 = vmatpush2.bf16.msra.mxu0 0
    %941 = vmatprep.subr.bf16.mxu0 0
    %942 = vmatpush2.bf16.msra.mxu0 0
    %943 = vmatprep.subr.bf16.mxu0 0
    %944 = vmatpush2.bf16.msra.mxu0 0
    %945 = vmatprep.subr.bf16.mxu0 0
    %946 = vmatpush2.bf16.msra.mxu0 0
    %947 = vmatprep.subr.bf16.mxu0 0
    %948 = vmatpush2.bf16.msra.mxu0 0
    %949 = vmatprep.subr.bf16.mxu0 0
    %950 = vmatpush2.bf16.msra.mxu0 0
    %951 = vmatprep.subr.bf16.mxu0 0
    %952 = vmatpush2.bf16.msra.mxu0 0
    %953 = vmatprep.mubr.bf16.mxu0 0
    %954 = vmatmul.mubr.bf16.gmra.mxu0 %v919
    %v955 = vpop.f32.mrf.mxu0
    %v956 = vadd.f32 %v871, %v955
    %v957 = vpop.f32.mrf.mxu0
    %v958 = vadd.f32 %v873, %v957
    %v959 = vpop.f32.mrf.mxu0
    %v960 = vpop.f32.mrf.mxu0
    %961 = vdwg.mxu0
    %962 = vmatprep.subr.bf16.mxu0 0
    %963 = vmatpush1.bf16.msra.mxu0 0
    %964 = vmatprep.subr.bf16.mxu0 0
    %965 = vmatpush1.bf16.msra.mxu0 0
    %966 = vmatprep.subr.bf16.mxu0 0
    %967 = vmatpush1.bf16.msra.mxu0 0
    %968 = vmatprep.subr.bf16.mxu0 0
    %969 = vmatpush1.bf16.msra.mxu0 0
    %970 = vmatprep.subr.bf16.mxu0 %v432
    %971 = vmatpush1.bf16.msra.mxu0 %v431
    %972 = vmatprep.subr.bf16.mxu0 %v428
    %973 = vmatpush1.bf16.msra.mxu0 %v427
    %974 = vmatprep.subr.bf16.mxu0 %v424
    %975 = vmatpush1.bf16.msra.mxu0 %v423
    %976 = vmatprep.subr.bf16.mxu0 %v420
    %977 = vmatpush1.bf16.msra.mxu0 %v419
    %978 = vmatprep.subr.bf16.mxu0 0
    %979 = vmatpush2.bf16.msra.mxu0 0
    %980 = vmatprep.subr.bf16.mxu0 0
    %981 = vmatpush2.bf16.msra.mxu0 0
    %982 = vmatprep.subr.bf16.mxu0 0
    %983 = vmatpush2.bf16.msra.mxu0 0
    %984 = vmatprep.subr.bf16.mxu0 0
    %985 = vmatpush2.bf16.msra.mxu0 0
    %986 = vmatprep.subr.bf16.mxu0 0
    %987 = vmatpush2.bf16.msra.mxu0 0
    %988 = vmatprep.subr.bf16.mxu0 0
    %989 = vmatpush2.bf16.msra.mxu0 0
    %990 = vmatprep.subr.bf16.mxu0 0
    %991 = vmatpush2.bf16.msra.mxu0 0
    %992 = vmatprep.subr.bf16.mxu0 0
    %993 = vmatpush2.bf16.msra.mxu0 0
    %994 = vmatprep.mubr.bf16.mxu0 0
    %995 = vmatmul.mubr.bf16.gmra.mxu0 %v919
    %v996 = vpop.f32.mrf.mxu0
    %v997 = vadd.f32 %v912, %v996
    %v998 = vpop.f32.mrf.mxu0
    %v999 = vadd.f32 %v914, %v998
    %v1000 = vpop.f32.mrf.mxu0
    %v1001 = vpop.f32.mrf.mxu0
    %1002 = vdwg.mxu0
    %v1003 = vpack.c.bf16 %v813, %v813
    %1004 = vmatprep.subr.bf16.mxu0 %v659
    %1005 = vmatpush1.bf16.msra.mxu0 %v658
    %1006 = vmatprep.subr.bf16.mxu0 %v655
    %1007 = vmatpush1.bf16.msra.mxu0 %v654
    %1008 = vmatprep.subr.bf16.mxu0 %v651
    %1009 = vmatpush1.bf16.msra.mxu0 %v650
    %1010 = vmatprep.subr.bf16.mxu0 %v647
    %1011 = vmatpush1.bf16.msra.mxu0 %v646
    %1012 = vmatprep.subr.bf16.mxu0 %v643
    %1013 = vmatpush1.bf16.msra.mxu0 %v642
    %1014 = vmatprep.subr.bf16.mxu0 %v639
    %1015 = vmatpush1.bf16.msra.mxu0 %v638
    %1016 = vmatprep.subr.bf16.mxu0 %v635
    %1017 = vmatpush1.bf16.msra.mxu0 %v634
    %1018 = vmatprep.subr.bf16.mxu0 %v631
    %1019 = vmatpush1.bf16.msra.mxu0 %v630
    %1020 = vmatprep.subr.bf16.mxu0 0
    %1021 = vmatpush2.bf16.msra.mxu0 0
    %1022 = vmatprep.subr.bf16.mxu0 0
    %1023 = vmatpush2.bf16.msra.mxu0 0
    %1024 = vmatprep.subr.bf16.mxu0 0
    %1025 = vmatpush2.bf16.msra.mxu0 0
    %1026 = vmatprep.subr.bf16.mxu0 0
    %1027 = vmatpush2.bf16.msra.mxu0 0
    %1028 = vmatprep.subr.bf16.mxu0 0
    %1029 = vmatpush2.bf16.msra.mxu0 0
    %1030 = vmatprep.subr.bf16.mxu0 0
    %1031 = vmatpush2.bf16.msra.mxu0 0
    %1032 = vmatprep.subr.bf16.mxu0 0
    %1033 = vmatpush2.bf16.msra.mxu0 0
    %1034 = vmatprep.subr.bf16.mxu0 0
    %1035 = vmatpush2.bf16.msra.mxu0 0
    %1036 = vmatprep.mubr.bf16.mxu0 0
    %1037 = vmatmul.mubr.bf16.gmra.mxu0 %v1003
    %v1038 = vpop.f32.mrf.mxu0
    %v1039 = vadd.f32 0.0, %v1038
    %v1040 = vpop.f32.mrf.mxu0
    %v1041 = vadd.f32 0.0, %v1040
    %v1042 = vpop.f32.mrf.mxu0
    %v1043 = vpop.f32.mrf.mxu0
    %1044 = vdwg.mxu0
    %1045 = vmatprep.subr.bf16.mxu0 %v661
    %1046 = vmatpush1.bf16.msra.mxu0 %v660
    %1047 = vmatprep.subr.bf16.mxu0 %v657
    %1048 = vmatpush1.bf16.msra.mxu0 %v656
    %1049 = vmatprep.subr.bf16.mxu0 %v653
    %1050 = vmatpush1.bf16.msra.mxu0 %v652
    %1051 = vmatprep.subr.bf16.mxu0 %v649
    %1052 = vmatpush1.bf16.msra.mxu0 %v648
    %1053 = vmatprep.subr.bf16.mxu0 %v645
    %1054 = vmatpush1.bf16.msra.mxu0 %v644
    %1055 = vmatprep.subr.bf16.mxu0 %v641
    %1056 = vmatpush1.bf16.msra.mxu0 %v640
    %1057 = vmatprep.subr.bf16.mxu0 %v637
    %1058 = vmatpush1.bf16.msra.mxu0 %v636
    %1059 = vmatprep.subr.bf16.mxu0 %v633
    %1060 = vmatpush1.bf16.msra.mxu0 %v632
    %1061 = vmatprep.subr.bf16.mxu0 0
    %1062 = vmatpush2.bf16.msra.mxu0 0
    %1063 = vmatprep.subr.bf16.mxu0 0
    %1064 = vmatpush2.bf16.msra.mxu0 0
    %1065 = vmatprep.subr.bf16.mxu0 0
    %1066 = vmatpush2.bf16.msra.mxu0 0
    %1067 = vmatprep.subr.bf16.mxu0 0
    %1068 = vmatpush2.bf16.msra.mxu0 0
    %1069 = vmatprep.subr.bf16.mxu0 0
    %1070 = vmatpush2.bf16.msra.mxu0 0
    %1071 = vmatprep.subr.bf16.mxu0 0
    %1072 = vmatpush2.bf16.msra.mxu0 0
    %1073 = vmatprep.subr.bf16.mxu0 0
    %1074 = vmatpush2.bf16.msra.mxu0 0
    %1075 = vmatprep.subr.bf16.mxu0 0
    %1076 = vmatpush2.bf16.msra.mxu0 0
    %1077 = vmatprep.mubr.bf16.mxu0 0
    %1078 = vmatmul.mubr.bf16.gmra.mxu0 %v1003
    %v1079 = vpop.f32.mrf.mxu0
    %v1080 = vadd.f32 0.0, %v1079
    %v1081 = vpop.f32.mrf.mxu0
    %v1082 = vadd.f32 0.0, %v1081
    %v1083 = vpop.f32.mrf.mxu0
    %v1084 = vpop.f32.mrf.mxu0
    %1085 = vdwg.mxu0
    %v1086 = vadd.f32 %v956, %v1039
    %v1087 = vadd.f32 %v958, %v1041
    %v1088 = vadd.f32 %v997, %v1080
    %v1089 = vadd.f32 %v999, %v1082
    %v1090 = vadd.f32 %v1086, %v183
    %v1091 = vadd.f32 %v1087, %v187
    %v1092 = vadd.f32 %v1088, %v191
    %v1093 = vadd.f32 %v1089, %v195
    %v1094 = vxor.u32 %v1090, 2147483648
    %v1095 = vmul.f32 %v1094, 1.442695
    %v1096 = vpow.pop %v1095
    %v1097 = vadd.f32 %v1096, 1.0
    %v1098 = vrcp.pop %v1097
    %v1099 = vmul.f32 1.0, %v1098
    %v1100 = vxor.u32 %v1091, 2147483648
    %v1101 = vmul.f32 %v1100, 1.442695
    %v1102 = vpow.pop %v1101
    %v1103 = vadd.f32 %v1102, 1.0
    %v1104 = vrcp.pop %v1103
    %v1105 = vmul.f32 1.0, %v1104
    %v1106 = vtanh.pop %v1092
    %v1107 = vxor.u32 %v1093, 2147483648
    %v1108 = vmul.f32 %v1107, 1.442695
    %v1109 = vpow.pop %v1108
    %v1110 = vadd.f32 %v1109, 1.0
    %v1111 = vrcp.pop %v1110
    %v1112 = vmul.f32 1.0, %v1111
    %v1113 = vmul.f32 %v1105, %v814
    %v1114 = vmul.f32 %v1099, %v1106
    %v1115 = vadd.f32 %v1113, %v1114
    %v1116 = vtanh.pop %v1115
    %v1117 = vmul.f32 %v1112, %v1116
    %v1118 = vsel %vm111, 1, 6
    %vm1119 = vcmp.lt.s32.totalorder %v1118, %v811
    %v1120 = vsel %vm1119, %v1117, 0.0
    %v1121 = vsel %vm1119, %v1117, %v813
    %v1122 = vsel %vm1119, %v1115, %v814
    %p1123 = scmp.eq.s32.totalorder %s107, 1
    %s1124 = scalar_select %p1123, 1, 0
    %v1125 = vstv %s1124
    %vm1126 = vcmp.eq.s32.totalorder %v1125, 1
    %vm1127 = vmand %vm1126, %vm111
    %p1128 = scmp.eq.s32.totalorder %s108, 1
    %s1129 = scalar_select %p1128, 1, 0
    %v1130 = vstv %s1129
    %vm1131 = vcmp.eq.s32.totalorder %v1130, 1
    %vm1132 = vmand %vm1131, %vm112
    %vm1133 = vmor %vm1127, %vm1132
    %v1134 = vsel %vm1133, 1, 0
    %vm1135 = vcmp.eq.s32.totalorder %v1134, 1
    %v1136 = vsel %vm1135, %v1120, %v828
    %s1137 = scalar_lea.vmem %s1, 8
    %v1138 = vld [vmem:[%s1137] sm:$0xf]
    %s1139 = scalar_lea.vmem %s1, 20
    %v1140 = vld [vmem:[%s1139] sm:$0xf]
    %v1142 = vsel %vm283, %v1140, 0
    %1144 = vmatprep.subr.bf16.mxu0 0
    %1145 = vmatpush1.bf16.msra.mxu0 0
    %1146 = vmatprep.subr.bf16.mxu0 0
    %1147 = vmatpush1.bf16.msra.mxu0 0
    %1148 = vmatprep.subr.bf16.mxu0 0
    %1149 = vmatpush1.bf16.msra.mxu0 0
    %1150 = vmatprep.subr.bf16.mxu0 0
    %1151 = vmatpush1.bf16.msra.mxu0 0
    %1152 = vmatprep.subr.bf16.mxu0 %v264
    %1153 = vmatpush1.bf16.msra.mxu0 %v263
    %1154 = vmatprep.subr.bf16.mxu0 %v260
    %1155 = vmatpush1.bf16.msra.mxu0 %v259
    %1156 = vmatprep.subr.bf16.mxu0 %v256
    %1157 = vmatpush1.bf16.msra.mxu0 %v255
    %1158 = vmatprep.subr.bf16.mxu0 %v252
    %1159 = vmatpush1.bf16.msra.mxu0 %v251
    %1160 = vmatprep.subr.bf16.mxu0 0
    %1161 = vmatpush2.bf16.msra.mxu0 0
    %1162 = vmatprep.subr.bf16.mxu0 0
    %1163 = vmatpush2.bf16.msra.mxu0 0
    %1164 = vmatprep.subr.bf16.mxu0 0
    %1165 = vmatpush2.bf16.msra.mxu0 0
    %1166 = vmatprep.subr.bf16.mxu0 0
    %1167 = vmatpush2.bf16.msra.mxu0 0
    %1168 = vmatprep.subr.bf16.mxu0 0
    %1169 = vmatpush2.bf16.msra.mxu0 0
    %1170 = vmatprep.subr.bf16.mxu0 0
    %1171 = vmatpush2.bf16.msra.mxu0 0
    %1172 = vmatprep.subr.bf16.mxu0 0
    %1173 = vmatpush2.bf16.msra.mxu0 0
    %1174 = vmatprep.subr.bf16.mxu0 0
    %1175 = vmatpush2.bf16.msra.mxu0 0
    %1176 = vmatprep.mubr.bf16.mxu0 0
    %1177 = vmatmul.mubr.bf16.gmra.mxu0 %v1142
    %v1178 = vpop.f32.mrf.mxu0
    %v1179 = vadd.f32 0.0, %v1178
    %v1180 = vpop.f32.mrf.mxu0
    %v1181 = vadd.f32 0.0, %v1180
    %v1182 = vpop.f32.mrf.mxu0
    %v1183 = vpop.f32.mrf.mxu0
    %1184 = vdwg.mxu0
    %1185 = vmatprep.subr.bf16.mxu0 0
    %1186 = vmatpush1.bf16.msra.mxu0 0
    %1187 = vmatprep.subr.bf16.mxu0 0
    %1188 = vmatpush1.bf16.msra.mxu0 0
    %1189 = vmatprep.subr.bf16.mxu0 0
    %1190 = vmatpush1.bf16.msra.mxu0 0
    %1191 = vmatprep.subr.bf16.mxu0 0
    %1192 = vmatpush1.bf16.msra.mxu0 0
    %1193 = vmatprep.subr.bf16.mxu0 %v266
    %1194 = vmatpush1.bf16.msra.mxu0 %v265
    %1195 = vmatprep.subr.bf16.mxu0 %v262
    %1196 = vmatpush1.bf16.msra.mxu0 %v261
    %1197 = vmatprep.subr.bf16.mxu0 %v258
    %1198 = vmatpush1.bf16.msra.mxu0 %v257
    %1199 = vmatprep.subr.bf16.mxu0 %v254
    %1200 = vmatpush1.bf16.msra.mxu0 %v253
    %1201 = vmatprep.subr.bf16.mxu0 0
    %1202 = vmatpush2.bf16.msra.mxu0 0
    %1203 = vmatprep.subr.bf16.mxu0 0
    %1204 = vmatpush2.bf16.msra.mxu0 0
    %1205 = vmatprep.subr.bf16.mxu0 0
    %1206 = vmatpush2.bf16.msra.mxu0 0
    %1207 = vmatprep.subr.bf16.mxu0 0
    %1208 = vmatpush2.bf16.msra.mxu0 0
    %1209 = vmatprep.subr.bf16.mxu0 0
    %1210 = vmatpush2.bf16.msra.mxu0 0
    %1211 = vmatprep.subr.bf16.mxu0 0
    %1212 = vmatpush2.bf16.msra.mxu0 0
    %1213 = vmatprep.subr.bf16.mxu0 0
    %1214 = vmatpush2.bf16.msra.mxu0 0
    %1215 = vmatprep.subr.bf16.mxu0 0
    %1216 = vmatpush2.bf16.msra.mxu0 0
    %1217 = vmatprep.mubr.bf16.mxu0 0
    %1218 = vmatmul.mubr.bf16.gmra.mxu0 %v1142
    %v1219 = vpop.f32.mrf.mxu0
    %v1220 = vadd.f32 0.0, %v1219
    %v1221 = vpop.f32.mrf.mxu0
    %v1222 = vadd.f32 0.0, %v1221
    %v1223 = vpop.f32.mrf.mxu0
    %v1224 = vpop.f32.mrf.mxu0
    %1225 = vdwg.mxu0
    %v1227 = vsel %vm283, %v1138, 0
    %1229 = vmatprep.subr.bf16.mxu0 0
    %1230 = vmatpush1.bf16.msra.mxu0 0
    %1231 = vmatprep.subr.bf16.mxu0 0
    %1232 = vmatpush1.bf16.msra.mxu0 0
    %1233 = vmatprep.subr.bf16.mxu0 0
    %1234 = vmatpush1.bf16.msra.mxu0 0
    %1235 = vmatprep.subr.bf16.mxu0 0
    %1236 = vmatpush1.bf16.msra.mxu0 0
    %1237 = vmatprep.subr.bf16.mxu0 %v430
    %1238 = vmatpush1.bf16.msra.mxu0 %v429
    %1239 = vmatprep.subr.bf16.mxu0 %v426
    %1240 = vmatpush1.bf16.msra.mxu0 %v425
    %1241 = vmatprep.subr.bf16.mxu0 %v422
    %1242 = vmatpush1.bf16.msra.mxu0 %v421
    %1243 = vmatprep.subr.bf16.mxu0 %v418
    %1244 = vmatpush1.bf16.msra.mxu0 %v417
    %1245 = vmatprep.subr.bf16.mxu0 0
    %1246 = vmatpush2.bf16.msra.mxu0 0
    %1247 = vmatprep.subr.bf16.mxu0 0
    %1248 = vmatpush2.bf16.msra.mxu0 0
    %1249 = vmatprep.subr.bf16.mxu0 0
    %1250 = vmatpush2.bf16.msra.mxu0 0
    %1251 = vmatprep.subr.bf16.mxu0 0
    %1252 = vmatpush2.bf16.msra.mxu0 0
    %1253 = vmatprep.subr.bf16.mxu0 0
    %1254 = vmatpush2.bf16.msra.mxu0 0
    %1255 = vmatprep.subr.bf16.mxu0 0
    %1256 = vmatpush2.bf16.msra.mxu0 0
    %1257 = vmatprep.subr.bf16.mxu0 0
    %1258 = vmatpush2.bf16.msra.mxu0 0
    %1259 = vmatprep.subr.bf16.mxu0 0
    %1260 = vmatpush2.bf16.msra.mxu0 0
    %1261 = vmatprep.mubr.bf16.mxu0 0
    %1262 = vmatmul.mubr.bf16.gmra.mxu0 %v1227
    %v1263 = vpop.f32.mrf.mxu0
    %v1264 = vadd.f32 %v1179, %v1263
    %v1265 = vpop.f32.mrf.mxu0
    %v1266 = vadd.f32 %v1181, %v1265
    %v1267 = vpop.f32.mrf.mxu0
    %v1268 = vpop.f32.mrf.mxu0
    %1269 = vdwg.mxu0
    %1270 = vmatprep.subr.bf16.mxu0 0
    %1271 = vmatpush1.bf16.msra.mxu0 0
    %1272 = vmatprep.subr.bf16.mxu0 0
    %1273 = vmatpush1.bf16.msra.mxu0 0
    %1274 = vmatprep.subr.bf16.mxu0 0
    %1275 = vmatpush1.bf16.msra.mxu0 0
    %1276 = vmatprep.subr.bf16.mxu0 0
    %1277 = vmatpush1.bf16.msra.mxu0 0
    %1278 = vmatprep.subr.bf16.mxu0 %v432
    %1279 = vmatpush1.bf16.msra.mxu0 %v431
    %1280 = vmatprep.subr.bf16.mxu0 %v428
    %1281 = vmatpush1.bf16.msra.mxu0 %v427
    %1282 = vmatprep.subr.bf16.mxu0 %v424
    %1283 = vmatpush1.bf16.msra.mxu0 %v423
    %1284 = vmatprep.subr.bf16.mxu0 %v420
    %1285 = vmatpush1.bf16.msra.mxu0 %v419
    %1286 = vmatprep.subr.bf16.mxu0 0
    %1287 = vmatpush2.bf16.msra.mxu0 0
    %1288 = vmatprep.subr.bf16.mxu0 0
    %1289 = vmatpush2.bf16.msra.mxu0 0
    %1290 = vmatprep.subr.bf16.mxu0 0
    %1291 = vmatpush2.bf16.msra.mxu0 0
    %1292 = vmatprep.subr.bf16.mxu0 0
    %1293 = vmatpush2.bf16.msra.mxu0 0
    %1294 = vmatprep.subr.bf16.mxu0 0
    %1295 = vmatpush2.bf16.msra.mxu0 0
    %1296 = vmatprep.subr.bf16.mxu0 0
    %1297 = vmatpush2.bf16.msra.mxu0 0
    %1298 = vmatprep.subr.bf16.mxu0 0
    %1299 = vmatpush2.bf16.msra.mxu0 0
    %1300 = vmatprep.subr.bf16.mxu0 0
    %1301 = vmatpush2.bf16.msra.mxu0 0
    %1302 = vmatprep.mubr.bf16.mxu0 0
    %1303 = vmatmul.mubr.bf16.gmra.mxu0 %v1227
    %v1304 = vpop.f32.mrf.mxu0
    %v1305 = vadd.f32 %v1220, %v1304
    %v1306 = vpop.f32.mrf.mxu0
    %v1307 = vadd.f32 %v1222, %v1306
    %v1308 = vpop.f32.mrf.mxu0
    %v1309 = vpop.f32.mrf.mxu0
    %1310 = vdwg.mxu0
    %v1311 = vpack.c.bf16 %v1121, %v1121
    %1312 = vmatprep.subr.bf16.mxu0 %v659
    %1313 = vmatpush1.bf16.msra.mxu0 %v658
    %1314 = vmatprep.subr.bf16.mxu0 %v655
    %1315 = vmatpush1.bf16.msra.mxu0 %v654
    %1316 = vmatprep.subr.bf16.mxu0 %v651
    %1317 = vmatpush1.bf16.msra.mxu0 %v650
    %1318 = vmatprep.subr.bf16.mxu0 %v647
    %1319 = vmatpush1.bf16.msra.mxu0 %v646
    %1320 = vmatprep.subr.bf16.mxu0 %v643
    %1321 = vmatpush1.bf16.msra.mxu0 %v642
    %1322 = vmatprep.subr.bf16.mxu0 %v639
    %1323 = vmatpush1.bf16.msra.mxu0 %v638
    %1324 = vmatprep.subr.bf16.mxu0 %v635
    %1325 = vmatpush1.bf16.msra.mxu0 %v634
    %1326 = vmatprep.subr.bf16.mxu0 %v631
    %1327 = vmatpush1.bf16.msra.mxu0 %v630
    %1328 = vmatprep.subr.bf16.mxu0 0
    %1329 = vmatpush2.bf16.msra.mxu0 0
    %1330 = vmatprep.subr.bf16.mxu0 0
    %1331 = vmatpush2.bf16.msra.mxu0 0
    %1332 = vmatprep.subr.bf16.mxu0 0
    %1333 = vmatpush2.bf16.msra.mxu0 0
    %1334 = vmatprep.subr.bf16.mxu0 0
    %1335 = vmatpush2.bf16.msra.mxu0 0
    %1336 = vmatprep.subr.bf16.mxu0 0
    %1337 = vmatpush2.bf16.msra.mxu0 0
    %1338 = vmatprep.subr.bf16.mxu0 0
    %1339 = vmatpush2.bf16.msra.mxu0 0
    %1340 = vmatprep.subr.bf16.mxu0 0
    %1341 = vmatpush2.bf16.msra.mxu0 0
    %1342 = vmatprep.subr.bf16.mxu0 0
    %1343 = vmatpush2.bf16.msra.mxu0 0
    %1344 = vmatprep.mubr.bf16.mxu0 0
    %1345 = vmatmul.mubr.bf16.gmra.mxu0 %v1311
    %v1346 = vpop.f32.mrf.mxu0
    %v1347 = vadd.f32 0.0, %v1346
    %v1348 = vpop.f32.mrf.mxu0
    %v1349 = vadd.f32 0.0, %v1348
    %v1350 = vpop.f32.mrf.mxu0
    %v1351 = vpop.f32.mrf.mxu0
    %1352 = vdwg.mxu0
    %1353 = vmatprep.subr.bf16.mxu0 %v661
    %1354 = vmatpush1.bf16.msra.mxu0 %v660
    %1355 = vmatprep.subr.bf16.mxu0 %v657
    %1356 = vmatpush1.bf16.msra.mxu0 %v656
    %1357 = vmatprep.subr.bf16.mxu0 %v653
    %1358 = vmatpush1.bf16.msra.mxu0 %v652
    %1359 = vmatprep.subr.bf16.mxu0 %v649
    %1360 = vmatpush1.bf16.msra.mxu0 %v648
    %1361 = vmatprep.subr.bf16.mxu0 %v645
    %1362 = vmatpush1.bf16.msra.mxu0 %v644
    %1363 = vmatprep.subr.bf16.mxu0 %v641
    %1364 = vmatpush1.bf16.msra.mxu0 %v640
    %1365 = vmatprep.subr.bf16.mxu0 %v637
    %1366 = vmatpush1.bf16.msra.mxu0 %v636
    %1367 = vmatprep.subr.bf16.mxu0 %v633
    %1368 = vmatpush1.bf16.msra.mxu0 %v632
    %1369 = vmatprep.subr.bf16.mxu0 0
    %1370 = vmatpush2.bf16.msra.mxu0 0
    %1371 = vmatprep.subr.bf16.mxu0 0
    %1372 = vmatpush2.bf16.msra.mxu0 0
    %1373 = vmatprep.subr.bf16.mxu0 0
    %1374 = vmatpush2.bf16.msra.mxu0 0
    %1375 = vmatprep.subr.bf16.mxu0 0
    %1376 = vmatpush2.bf16.msra.mxu0 0
    %1377 = vmatprep.subr.bf16.mxu0 0
    %1378 = vmatpush2.bf16.msra.mxu0 0
    %1379 = vmatprep.subr.bf16.mxu0 0
    %1380 = vmatpush2.bf16.msra.mxu0 0
    %1381 = vmatprep.subr.bf16.mxu0 0
    %1382 = vmatpush2.bf16.msra.mxu0 0
    %1383 = vmatprep.subr.bf16.mxu0 0
    %1384 = vmatpush2.bf16.msra.mxu0 0
    %1385 = vmatprep.mubr.bf16.mxu0 0
    %1386 = vmatmul.mubr.bf16.gmra.mxu0 %v1311
    %v1387 = vpop.f32.mrf.mxu0
    %v1388 = vadd.f32 0.0, %v1387
    %v1389 = vpop.f32.mrf.mxu0
    %v1390 = vadd.f32 0.0, %v1389
    %v1391 = vpop.f32.mrf.mxu0
    %v1392 = vpop.f32.mrf.mxu0
    %1393 = vdwg.mxu0
    %v1394 = vadd.f32 %v1264, %v1347
    %v1395 = vadd.f32 %v1266, %v1349
    %v1396 = vadd.f32 %v1305, %v1388
    %v1397 = vadd.f32 %v1307, %v1390
    %v1398 = vadd.f32 %v1394, %v183
    %v1399 = vadd.f32 %v1395, %v187
    %v1400 = vadd.f32 %v1396, %v191
    %v1401 = vadd.f32 %v1397, %v195
    %v1402 = vxor.u32 %v1398, 2147483648
    %v1403 = vmul.f32 %v1402, 1.442695
    %v1404 = vpow.pop %v1403
    %v1405 = vadd.f32 %v1404, 1.0
    %v1406 = vrcp.pop %v1405
    %v1407 = vmul.f32 1.0, %v1406
    %v1408 = vxor.u32 %v1399, 2147483648
    %v1409 = vmul.f32 %v1408, 1.442695
    %v1410 = vpow.pop %v1409
    %v1411 = vadd.f32 %v1410, 1.0
    %v1412 = vrcp.pop %v1411
    %v1413 = vmul.f32 1.0, %v1412
    %v1414 = vtanh.pop %v1400
    %v1415 = vxor.u32 %v1401, 2147483648
    %v1416 = vmul.f32 %v1415, 1.442695
    %v1417 = vpow.pop %v1416
    %v1418 = vadd.f32 %v1417, 1.0
    %v1419 = vrcp.pop %v1418
    %v1420 = vmul.f32 1.0, %v1419
    %v1421 = vmul.f32 %v1413, %v1122
    %v1422 = vmul.f32 %v1407, %v1414
    %v1423 = vadd.f32 %v1421, %v1422
    %v1424 = vtanh.pop %v1423
    %v1425 = vmul.f32 %v1420, %v1424
    %v1426 = vsel %vm111, 2, 5
    %vm1427 = vcmp.lt.s32.totalorder %v1426, %v811
    %v1428 = vsel %vm1427, %v1425, 0.0
    %v1429 = vsel %vm1427, %v1425, %v1121
    %v1430 = vsel %vm1427, %v1423, %v1122
    %p1431 = scmp.eq.s32.totalorder %s107, 2
    %s1432 = scalar_select %p1431, 1, 0
    %v1433 = vstv %s1432
    %vm1434 = vcmp.eq.s32.totalorder %v1433, 1
    %vm1435 = vmand %vm1434, %vm111
    %p1436 = scmp.eq.s32.totalorder %s108, 2
    %s1437 = scalar_select %p1436, 1, 0
    %v1438 = vstv %s1437
    %vm1439 = vcmp.eq.s32.totalorder %v1438, 1
    %vm1440 = vmand %vm1439, %vm112
    %vm1441 = vmor %vm1435, %vm1440
    %v1442 = vsel %vm1441, 1, 0
    %vm1443 = vcmp.eq.s32.totalorder %v1442, 1
    %v1444 = vsel %vm1443, %v1428, %v1136
    %s1445 = scalar_lea.vmem %s1, 12
    %v1446 = vld [vmem:[%s1445] sm:$0xf]
    %s1447 = scalar_lea.vmem %s1, 16
    %v1448 = vld [vmem:[%s1447] sm:$0xf]
    %v1450 = vsel %vm283, %v1448, 0
    %1452 = vmatprep.subr.bf16.mxu0 0
    %1453 = vmatpush1.bf16.msra.mxu0 0
    %1454 = vmatprep.subr.bf16.mxu0 0
    %1455 = vmatpush1.bf16.msra.mxu0 0
    %1456 = vmatprep.subr.bf16.mxu0 0
    %1457 = vmatpush1.bf16.msra.mxu0 0
    %1458 = vmatprep.subr.bf16.mxu0 0
    %1459 = vmatpush1.bf16.msra.mxu0 0
    %1460 = vmatprep.subr.bf16.mxu0 %v264
    %1461 = vmatpush1.bf16.msra.mxu0 %v263
    %1462 = vmatprep.subr.bf16.mxu0 %v260
    %1463 = vmatpush1.bf16.msra.mxu0 %v259
    %1464 = vmatprep.subr.bf16.mxu0 %v256
    %1465 = vmatpush1.bf16.msra.mxu0 %v255
    %1466 = vmatprep.subr.bf16.mxu0 %v252
    %1467 = vmatpush1.bf16.msra.mxu0 %v251
    %1468 = vmatprep.subr.bf16.mxu0 0
    %1469 = vmatpush2.bf16.msra.mxu0 0
    %1470 = vmatprep.subr.bf16.mxu0 0
    %1471 = vmatpush2.bf16.msra.mxu0 0
    %1472 = vmatprep.subr.bf16.mxu0 0
    %1473 = vmatpush2.bf16.msra.mxu0 0
    %1474 = vmatprep.subr.bf16.mxu0 0
    %1475 = vmatpush2.bf16.msra.mxu0 0
    %1476 = vmatprep.subr.bf16.mxu0 0
    %1477 = vmatpush2.bf16.msra.mxu0 0
    %1478 = vmatprep.subr.bf16.mxu0 0
    %1479 = vmatpush2.bf16.msra.mxu0 0
    %1480 = vmatprep.subr.bf16.mxu0 0
    %1481 = vmatpush2.bf16.msra.mxu0 0
    %1482 = vmatprep.subr.bf16.mxu0 0
    %1483 = vmatpush2.bf16.msra.mxu0 0
    %1484 = vmatprep.mubr.bf16.mxu0 0
    %1485 = vmatmul.mubr.bf16.gmra.mxu0 %v1450
    %v1486 = vpop.f32.mrf.mxu0
    %v1487 = vadd.f32 0.0, %v1486
    %v1488 = vpop.f32.mrf.mxu0
    %v1489 = vadd.f32 0.0, %v1488
    %v1490 = vpop.f32.mrf.mxu0
    %v1491 = vpop.f32.mrf.mxu0
    %1492 = vdwg.mxu0
    %1493 = vmatprep.subr.bf16.mxu0 0
    %1494 = vmatpush1.bf16.msra.mxu0 0
    %1495 = vmatprep.subr.bf16.mxu0 0
    %1496 = vmatpush1.bf16.msra.mxu0 0
    %1497 = vmatprep.subr.bf16.mxu0 0
    %1498 = vmatpush1.bf16.msra.mxu0 0
    %1499 = vmatprep.subr.bf16.mxu0 0
    %1500 = vmatpush1.bf16.msra.mxu0 0
    %1501 = vmatprep.subr.bf16.mxu0 %v266
    %1502 = vmatpush1.bf16.msra.mxu0 %v265
    %1503 = vmatprep.subr.bf16.mxu0 %v262
    %1504 = vmatpush1.bf16.msra.mxu0 %v261
    %1505 = vmatprep.subr.bf16.mxu0 %v258
    %1506 = vmatpush1.bf16.msra.mxu0 %v257
    %1507 = vmatprep.subr.bf16.mxu0 %v254
    %1508 = vmatpush1.bf16.msra.mxu0 %v253
    %1509 = vmatprep.subr.bf16.mxu0 0
    %1510 = vmatpush2.bf16.msra.mxu0 0
    %1511 = vmatprep.subr.bf16.mxu0 0
    %1512 = vmatpush2.bf16.msra.mxu0 0
    %1513 = vmatprep.subr.bf16.mxu0 0
    %1514 = vmatpush2.bf16.msra.mxu0 0
    %1515 = vmatprep.subr.bf16.mxu0 0
    %1516 = vmatpush2.bf16.msra.mxu0 0
    %1517 = vmatprep.subr.bf16.mxu0 0
    %1518 = vmatpush2.bf16.msra.mxu0 0
    %1519 = vmatprep.subr.bf16.mxu0 0
    %1520 = vmatpush2.bf16.msra.mxu0 0
    %1521 = vmatprep.subr.bf16.mxu0 0
    %1522 = vmatpush2.bf16.msra.mxu0 0
    %1523 = vmatprep.subr.bf16.mxu0 0
    %1524 = vmatpush2.bf16.msra.mxu0 0
    %1525 = vmatprep.mubr.bf16.mxu0 0
    %1526 = vmatmul.mubr.bf16.gmra.mxu0 %v1450
    %v1527 = vpop.f32.mrf.mxu0
    %v1528 = vadd.f32 0.0, %v1527
    %v1529 = vpop.f32.mrf.mxu0
    %v1530 = vadd.f32 0.0, %v1529
    %v1531 = vpop.f32.mrf.mxu0
    %v1532 = vpop.f32.mrf.mxu0
    %1533 = vdwg.mxu0
    %v1535 = vsel %vm283, %v1446, 0
    %1537 = vmatprep.subr.bf16.mxu0 0
    %1538 = vmatpush1.bf16.msra.mxu0 0
    %1539 = vmatprep.subr.bf16.mxu0 0
    %1540 = vmatpush1.bf16.msra.mxu0 0
    %1541 = vmatprep.subr.bf16.mxu0 0
    %1542 = vmatpush1.bf16.msra.mxu0 0
    %1543 = vmatprep.subr.bf16.mxu0 0
    %1544 = vmatpush1.bf16.msra.mxu0 0
    %1545 = vmatprep.subr.bf16.mxu0 %v430
    %1546 = vmatpush1.bf16.msra.mxu0 %v429
    %1547 = vmatprep.subr.bf16.mxu0 %v426
    %1548 = vmatpush1.bf16.msra.mxu0 %v425
    %1549 = vmatprep.subr.bf16.mxu0 %v422
    %1550 = vmatpush1.bf16.msra.mxu0 %v421
    %1551 = vmatprep.subr.bf16.mxu0 %v418
    %1552 = vmatpush1.bf16.msra.mxu0 %v417
    %1553 = vmatprep.subr.bf16.mxu0 0
    %1554 = vmatpush2.bf16.msra.mxu0 0
    %1555 = vmatprep.subr.bf16.mxu0 0
    %1556 = vmatpush2.bf16.msra.mxu0 0
    %1557 = vmatprep.subr.bf16.mxu0 0
    %1558 = vmatpush2.bf16.msra.mxu0 0
    %1559 = vmatprep.subr.bf16.mxu0 0
    %1560 = vmatpush2.bf16.msra.mxu0 0
    %1561 = vmatprep.subr.bf16.mxu0 0
    %1562 = vmatpush2.bf16.msra.mxu0 0
    %1563 = vmatprep.subr.bf16.mxu0 0
    %1564 = vmatpush2.bf16.msra.mxu0 0
    %1565 = vmatprep.subr.bf16.mxu0 0
    %1566 = vmatpush2.bf16.msra.mxu0 0
    %1567 = vmatprep.subr.bf16.mxu0 0
    %1568 = vmatpush2.bf16.msra.mxu0 0
    %1569 = vmatprep.mubr.bf16.mxu0 0
    %1570 = vmatmul.mubr.bf16.gmra.mxu0 %v1535
    %v1571 = vpop.f32.mrf.mxu0
    %v1572 = vadd.f32 %v1487, %v1571
    %v1573 = vpop.f32.mrf.mxu0
    %v1574 = vadd.f32 %v1489, %v1573
    %v1575 = vpop.f32.mrf.mxu0
    %v1576 = vpop.f32.mrf.mxu0
    %1577 = vdwg.mxu0
    %1578 = vmatprep.subr.bf16.mxu0 0
    %1579 = vmatpush1.bf16.msra.mxu0 0
    %1580 = vmatprep.subr.bf16.mxu0 0
    %1581 = vmatpush1.bf16.msra.mxu0 0
    %1582 = vmatprep.subr.bf16.mxu0 0
    %1583 = vmatpush1.bf16.msra.mxu0 0
    %1584 = vmatprep.subr.bf16.mxu0 0
    %1585 = vmatpush1.bf16.msra.mxu0 0
    %1586 = vmatprep.subr.bf16.mxu0 %v432
    %1587 = vmatpush1.bf16.msra.mxu0 %v431
    %1588 = vmatprep.subr.bf16.mxu0 %v428
    %1589 = vmatpush1.bf16.msra.mxu0 %v427
    %1590 = vmatprep.subr.bf16.mxu0 %v424
    %1591 = vmatpush1.bf16.msra.mxu0 %v423
    %1592 = vmatprep.subr.bf16.mxu0 %v420
    %1593 = vmatpush1.bf16.msra.mxu0 %v419
    %1594 = vmatprep.subr.bf16.mxu0 0
    %1595 = vmatpush2.bf16.msra.mxu0 0
    %1596 = vmatprep.subr.bf16.mxu0 0
    %1597 = vmatpush2.bf16.msra.mxu0 0
    %1598 = vmatprep.subr.bf16.mxu0 0
    %1599 = vmatpush2.bf16.msra.mxu0 0
    %1600 = vmatprep.subr.bf16.mxu0 0
    %1601 = vmatpush2.bf16.msra.mxu0 0
    %1602 = vmatprep.subr.bf16.mxu0 0
    %1603 = vmatpush2.bf16.msra.mxu0 0
    %1604 = vmatprep.subr.bf16.mxu0 0
    %1605 = vmatpush2.bf16.msra.mxu0 0
    %1606 = vmatprep.subr.bf16.mxu0 0
    %1607 = vmatpush2.bf16.msra.mxu0 0
    %1608 = vmatprep.subr.bf16.mxu0 0
    %1609 = vmatpush2.bf16.msra.mxu0 0
    %1610 = vmatprep.mubr.bf16.mxu0 0
    %1611 = vmatmul.mubr.bf16.gmra.mxu0 %v1535
    %v1612 = vpop.f32.mrf.mxu0
    %v1613 = vadd.f32 %v1528, %v1612
    %v1614 = vpop.f32.mrf.mxu0
    %v1615 = vadd.f32 %v1530, %v1614
    %v1616 = vpop.f32.mrf.mxu0
    %v1617 = vpop.f32.mrf.mxu0
    %1618 = vdwg.mxu0
    %v1619 = vpack.c.bf16 %v1429, %v1429
    %1620 = vmatprep.subr.bf16.mxu0 %v659
    %1621 = vmatpush1.bf16.msra.mxu0 %v658
    %1622 = vmatprep.subr.bf16.mxu0 %v655
    %1623 = vmatpush1.bf16.msra.mxu0 %v654
    %1624 = vmatprep.subr.bf16.mxu0 %v651
    %1625 = vmatpush1.bf16.msra.mxu0 %v650
    %1626 = vmatprep.subr.bf16.mxu0 %v647
    %1627 = vmatpush1.bf16.msra.mxu0 %v646
    %1628 = vmatprep.subr.bf16.mxu0 %v643
    %1629 = vmatpush1.bf16.msra.mxu0 %v642
    %1630 = vmatprep.subr.bf16.mxu0 %v639
    %1631 = vmatpush1.bf16.msra.mxu0 %v638
    %1632 = vmatprep.subr.bf16.mxu0 %v635
    %1633 = vmatpush1.bf16.msra.mxu0 %v634
    %1634 = vmatprep.subr.bf16.mxu0 %v631
    %1635 = vmatpush1.bf16.msra.mxu0 %v630
    %1636 = vmatprep.subr.bf16.mxu0 0
    %1637 = vmatpush2.bf16.msra.mxu0 0
    %1638 = vmatprep.subr.bf16.mxu0 0
    %1639 = vmatpush2.bf16.msra.mxu0 0
    %1640 = vmatprep.subr.bf16.mxu0 0
    %1641 = vmatpush2.bf16.msra.mxu0 0
    %1642 = vmatprep.subr.bf16.mxu0 0
    %1643 = vmatpush2.bf16.msra.mxu0 0
    %1644 = vmatprep.subr.bf16.mxu0 0
    %1645 = vmatpush2.bf16.msra.mxu0 0
    %1646 = vmatprep.subr.bf16.mxu0 0
    %1647 = vmatpush2.bf16.msra.mxu0 0
    %1648 = vmatprep.subr.bf16.mxu0 0
    %1649 = vmatpush2.bf16.msra.mxu0 0
    %1650 = vmatprep.subr.bf16.mxu0 0
    %1651 = vmatpush2.bf16.msra.mxu0 0
    %1652 = vmatprep.mubr.bf16.mxu0 0
    %1653 = vmatmul.mubr.bf16.gmra.mxu0 %v1619
    %v1654 = vpop.f32.mrf.mxu0
    %v1655 = vadd.f32 0.0, %v1654
    %v1656 = vpop.f32.mrf.mxu0
    %v1657 = vadd.f32 0.0, %v1656
    %v1658 = vpop.f32.mrf.mxu0
    %v1659 = vpop.f32.mrf.mxu0
    %1660 = vdwg.mxu0
    %1661 = vmatprep.subr.bf16.mxu0 %v661
    %1662 = vmatpush1.bf16.msra.mxu0 %v660
    %1663 = vmatprep.subr.bf16.mxu0 %v657
    %1664 = vmatpush1.bf16.msra.mxu0 %v656
    %1665 = vmatprep.subr.bf16.mxu0 %v653
    %1666 = vmatpush1.bf16.msra.mxu0 %v652
    %1667 = vmatprep.subr.bf16.mxu0 %v649
    %1668 = vmatpush1.bf16.msra.mxu0 %v648
    %1669 = vmatprep.subr.bf16.mxu0 %v645
    %1670 = vmatpush1.bf16.msra.mxu0 %v644
    %1671 = vmatprep.subr.bf16.mxu0 %v641
    %1672 = vmatpush1.bf16.msra.mxu0 %v640
    %1673 = vmatprep.subr.bf16.mxu0 %v637
    %1674 = vmatpush1.bf16.msra.mxu0 %v636
    %1675 = vmatprep.subr.bf16.mxu0 %v633
    %1676 = vmatpush1.bf16.msra.mxu0 %v632
    %1677 = vmatprep.subr.bf16.mxu0 0
    %1678 = vmatpush2.bf16.msra.mxu0 0
    %1679 = vmatprep.subr.bf16.mxu0 0
    %1680 = vmatpush2.bf16.msra.mxu0 0
    %1681 = vmatprep.subr.bf16.mxu0 0
    %1682 = vmatpush2.bf16.msra.mxu0 0
    %1683 = vmatprep.subr.bf16.mxu0 0
    %1684 = vmatpush2.bf16.msra.mxu0 0
    %1685 = vmatprep.subr.bf16.mxu0 0
    %1686 = vmatpush2.bf16.msra.mxu0 0
    %1687 = vmatprep.subr.bf16.mxu0 0
    %1688 = vmatpush2.bf16.msra.mxu0 0
    %1689 = vmatprep.subr.bf16.mxu0 0
    %1690 = vmatpush2.bf16.msra.mxu0 0
    %1691 = vmatprep.subr.bf16.mxu0 0
    %1692 = vmatpush2.bf16.msra.mxu0 0
    %1693 = vmatprep.mubr.bf16.mxu0 0
    %1694 = vmatmul.mubr.bf16.gmra.mxu0 %v1619
    %v1695 = vpop.f32.mrf.mxu0
    %v1696 = vadd.f32 0.0, %v1695
    %v1697 = vpop.f32.mrf.mxu0
    %v1698 = vadd.f32 0.0, %v1697
    %v1699 = vpop.f32.mrf.mxu0
    %v1700 = vpop.f32.mrf.mxu0
    %1701 = vdwg.mxu0
    %v1702 = vadd.f32 %v1572, %v1655
    %v1703 = vadd.f32 %v1574, %v1657
    %v1704 = vadd.f32 %v1613, %v1696
    %v1705 = vadd.f32 %v1615, %v1698
    %v1706 = vadd.f32 %v1702, %v183
    %v1707 = vadd.f32 %v1703, %v187
    %v1708 = vadd.f32 %v1704, %v191
    %v1709 = vadd.f32 %v1705, %v195
    %v1710 = vxor.u32 %v1706, 2147483648
    %v1711 = vmul.f32 %v1710, 1.442695
    %v1712 = vpow.pop %v1711
    %v1713 = vadd.f32 %v1712, 1.0
    %v1714 = vrcp.pop %v1713
    %v1715 = vmul.f32 1.0, %v1714
    %v1716 = vxor.u32 %v1707, 2147483648
    %v1717 = vmul.f32 %v1716, 1.442695
    %v1718 = vpow.pop %v1717
    %v1719 = vadd.f32 %v1718, 1.0
    %v1720 = vrcp.pop %v1719
    %v1721 = vmul.f32 1.0, %v1720
    %v1722 = vtanh.pop %v1708
    %v1723 = vxor.u32 %v1709, 2147483648
    %v1724 = vmul.f32 %v1723, 1.442695
    %v1725 = vpow.pop %v1724
    %v1726 = vadd.f32 %v1725, 1.0
    %v1727 = vrcp.pop %v1726
    %v1728 = vmul.f32 1.0, %v1727
    %v1729 = vmul.f32 %v1721, %v1430
    %v1730 = vmul.f32 %v1715, %v1722
    %v1731 = vadd.f32 %v1729, %v1730
    %v1732 = vtanh.pop %v1731
    %v1733 = vmul.f32 %v1728, %v1732
    %v1734 = vsel %vm111, 3, 4
    %vm1735 = vcmp.lt.s32.totalorder %v1734, %v811
    %v1736 = vsel %vm1735, %v1733, 0.0
    %v1737 = vsel %vm1735, %v1733, %v1429
    %v1738 = vsel %vm1735, %v1731, %v1430
    %p1739 = scmp.eq.s32.totalorder %s107, 3
    %s1740 = scalar_select %p1739, 1, 0
    %v1741 = vstv %s1740
    %vm1742 = vcmp.eq.s32.totalorder %v1741, 1
    %vm1743 = vmand %vm1742, %vm111
    %p1744 = scmp.eq.s32.totalorder %s108, 3
    %s1745 = scalar_select %p1744, 1, 0
    %v1746 = vstv %s1745
    %vm1747 = vcmp.eq.s32.totalorder %v1746, 1
    %vm1748 = vmand %vm1747, %vm112
    %vm1749 = vmor %vm1743, %vm1748
    %v1750 = vsel %vm1749, 1, 0
    %vm1751 = vcmp.eq.s32.totalorder %v1750, 1
    %v1752 = vsel %vm1751, %v1736, %v1444
    %1753 = vmatprep.subr.bf16.mxu0 0
    %1754 = vmatpush1.bf16.msra.mxu0 0
    %1755 = vmatprep.subr.bf16.mxu0 0
    %1756 = vmatpush1.bf16.msra.mxu0 0
    %1757 = vmatprep.subr.bf16.mxu0 0
    %1758 = vmatpush1.bf16.msra.mxu0 0
    %1759 = vmatprep.subr.bf16.mxu0 0
    %1760 = vmatpush1.bf16.msra.mxu0 0
    %1761 = vmatprep.subr.bf16.mxu0 %v264
    %1762 = vmatpush1.bf16.msra.mxu0 %v263
    %1763 = vmatprep.subr.bf16.mxu0 %v260
    %1764 = vmatpush1.bf16.msra.mxu0 %v259
    %1765 = vmatprep.subr.bf16.mxu0 %v256
    %1766 = vmatpush1.bf16.msra.mxu0 %v255
    %1767 = vmatprep.subr.bf16.mxu0 %v252
    %1768 = vmatpush1.bf16.msra.mxu0 %v251
    %1769 = vmatprep.subr.bf16.mxu0 0
    %1770 = vmatpush2.bf16.msra.mxu0 0
    %1771 = vmatprep.subr.bf16.mxu0 0
    %1772 = vmatpush2.bf16.msra.mxu0 0
    %1773 = vmatprep.subr.bf16.mxu0 0
    %1774 = vmatpush2.bf16.msra.mxu0 0
    %1775 = vmatprep.subr.bf16.mxu0 0
    %1776 = vmatpush2.bf16.msra.mxu0 0
    %1777 = vmatprep.subr.bf16.mxu0 0
    %1778 = vmatpush2.bf16.msra.mxu0 0
    %1779 = vmatprep.subr.bf16.mxu0 0
    %1780 = vmatpush2.bf16.msra.mxu0 0
    %1781 = vmatprep.subr.bf16.mxu0 0
    %1782 = vmatpush2.bf16.msra.mxu0 0
    %1783 = vmatprep.subr.bf16.mxu0 0
    %1784 = vmatpush2.bf16.msra.mxu0 0
    %1785 = vmatprep.mubr.bf16.mxu0 0
    %1786 = vmatmul.mubr.bf16.gmra.mxu0 %v1535
    %v1787 = vpop.f32.mrf.mxu0
    %v1788 = vadd.f32 0.0, %v1787
    %v1789 = vpop.f32.mrf.mxu0
    %v1790 = vadd.f32 0.0, %v1789
    %v1791 = vpop.f32.mrf.mxu0
    %v1792 = vpop.f32.mrf.mxu0
    %1793 = vdwg.mxu0
    %1794 = vmatprep.subr.bf16.mxu0 0
    %1795 = vmatpush1.bf16.msra.mxu0 0
    %1796 = vmatprep.subr.bf16.mxu0 0
    %1797 = vmatpush1.bf16.msra.mxu0 0
    %1798 = vmatprep.subr.bf16.mxu0 0
    %1799 = vmatpush1.bf16.msra.mxu0 0
    %1800 = vmatprep.subr.bf16.mxu0 0
    %1801 = vmatpush1.bf16.msra.mxu0 0
    %1802 = vmatprep.subr.bf16.mxu0 %v266
    %1803 = vmatpush1.bf16.msra.mxu0 %v265
    %1804 = vmatprep.subr.bf16.mxu0 %v262
    %1805 = vmatpush1.bf16.msra.mxu0 %v261
    %1806 = vmatprep.subr.bf16.mxu0 %v258
    %1807 = vmatpush1.bf16.msra.mxu0 %v257
    %1808 = vmatprep.subr.bf16.mxu0 %v254
    %1809 = vmatpush1.bf16.msra.mxu0 %v253
    %1810 = vmatprep.subr.bf16.mxu0 0
    %1811 = vmatpush2.bf16.msra.mxu0 0
    %1812 = vmatprep.subr.bf16.mxu0 0
    %1813 = vmatpush2.bf16.msra.mxu0 0
    %1814 = vmatprep.subr.bf16.mxu0 0
    %1815 = vmatpush2.bf16.msra.mxu0 0
    %1816 = vmatprep.subr.bf16.mxu0 0
    %1817 = vmatpush2.bf16.msra.mxu0 0
    %1818 = vmatprep.subr.bf16.mxu0 0
    %1819 = vmatpush2.bf16.msra.mxu0 0
    %1820 = vmatprep.subr.bf16.mxu0 0
    %1821 = vmatpush2.bf16.msra.mxu0 0
    %1822 = vmatprep.subr.bf16.mxu0 0
    %1823 = vmatpush2.bf16.msra.mxu0 0
    %1824 = vmatprep.subr.bf16.mxu0 0
    %1825 = vmatpush2.bf16.msra.mxu0 0
    %1826 = vmatprep.mubr.bf16.mxu0 0
    %1827 = vmatmul.mubr.bf16.gmra.mxu0 %v1535
    %v1828 = vpop.f32.mrf.mxu0
    %v1829 = vadd.f32 0.0, %v1828
    %v1830 = vpop.f32.mrf.mxu0
    %v1831 = vadd.f32 0.0, %v1830
    %v1832 = vpop.f32.mrf.mxu0
    %v1833 = vpop.f32.mrf.mxu0
    %1834 = vdwg.mxu0
    %1835 = vmatprep.subr.bf16.mxu0 0
    %1836 = vmatpush1.bf16.msra.mxu0 0
    %1837 = vmatprep.subr.bf16.mxu0 0
    %1838 = vmatpush1.bf16.msra.mxu0 0
    %1839 = vmatprep.subr.bf16.mxu0 0
    %1840 = vmatpush1.bf16.msra.mxu0 0
    %1841 = vmatprep.subr.bf16.mxu0 0
    %1842 = vmatpush1.bf16.msra.mxu0 0
    %1843 = vmatprep.subr.bf16.mxu0 %v430
    %1844 = vmatpush1.bf16.msra.mxu0 %v429
    %1845 = vmatprep.subr.bf16.mxu0 %v426
    %1846 = vmatpush1.bf16.msra.mxu0 %v425
    %1847 = vmatprep.subr.bf16.mxu0 %v422
    %1848 = vmatpush1.bf16.msra.mxu0 %v421
    %1849 = vmatprep.subr.bf16.mxu0 %v418
    %1850 = vmatpush1.bf16.msra.mxu0 %v417
    %1851 = vmatprep.subr.bf16.mxu0 0
    %1852 = vmatpush2.bf16.msra.mxu0 0
    %1853 = vmatprep.subr.bf16.mxu0 0
    %1854 = vmatpush2.bf16.msra.mxu0 0
    %1855 = vmatprep.subr.bf16.mxu0 0
    %1856 = vmatpush2.bf16.msra.mxu0 0
    %1857 = vmatprep.subr.bf16.mxu0 0
    %1858 = vmatpush2.bf16.msra.mxu0 0
    %1859 = vmatprep.subr.bf16.mxu0 0
    %1860 = vmatpush2.bf16.msra.mxu0 0
    %1861 = vmatprep.subr.bf16.mxu0 0
    %1862 = vmatpush2.bf16.msra.mxu0 0
    %1863 = vmatprep.subr.bf16.mxu0 0
    %1864 = vmatpush2.bf16.msra.mxu0 0
    %1865 = vmatprep.subr.bf16.mxu0 0
    %1866 = vmatpush2.bf16.msra.mxu0 0
    %1867 = vmatprep.mubr.bf16.mxu0 0
    %1868 = vmatmul.mubr.bf16.gmra.mxu0 %v1450
    %v1869 = vpop.f32.mrf.mxu0
    %v1870 = vadd.f32 %v1788, %v1869
    %v1871 = vpop.f32.mrf.mxu0
    %v1872 = vadd.f32 %v1790, %v1871
    %v1873 = vpop.f32.mrf.mxu0
    %v1874 = vpop.f32.mrf.mxu0
    %1875 = vdwg.mxu0
    %1876 = vmatprep.subr.bf16.mxu0 0
    %1877 = vmatpush1.bf16.msra.mxu0 0
    %1878 = vmatprep.subr.bf16.mxu0 0
    %1879 = vmatpush1.bf16.msra.mxu0 0
    %1880 = vmatprep.subr.bf16.mxu0 0
    %1881 = vmatpush1.bf16.msra.mxu0 0
    %1882 = vmatprep.subr.bf16.mxu0 0
    %1883 = vmatpush1.bf16.msra.mxu0 0
    %1884 = vmatprep.subr.bf16.mxu0 %v432
    %1885 = vmatpush1.bf16.msra.mxu0 %v431
    %1886 = vmatprep.subr.bf16.mxu0 %v428
    %1887 = vmatpush1.bf16.msra.mxu0 %v427
    %1888 = vmatprep.subr.bf16.mxu0 %v424
    %1889 = vmatpush1.bf16.msra.mxu0 %v423
    %1890 = vmatprep.subr.bf16.mxu0 %v420
    %1891 = vmatpush1.bf16.msra.mxu0 %v419
    %1892 = vmatprep.subr.bf16.mxu0 0
    %1893 = vmatpush2.bf16.msra.mxu0 0
    %1894 = vmatprep.subr.bf16.mxu0 0
    %1895 = vmatpush2.bf16.msra.mxu0 0
    %1896 = vmatprep.subr.bf16.mxu0 0
    %1897 = vmatpush2.bf16.msra.mxu0 0
    %1898 = vmatprep.subr.bf16.mxu0 0
    %1899 = vmatpush2.bf16.msra.mxu0 0
    %1900 = vmatprep.subr.bf16.mxu0 0
    %1901 = vmatpush2.bf16.msra.mxu0 0
    %1902 = vmatprep.subr.bf16.mxu0 0
    %1903 = vmatpush2.bf16.msra.mxu0 0
    %1904 = vmatprep.subr.bf16.mxu0 0
    %1905 = vmatpush2.bf16.msra.mxu0 0
    %1906 = vmatprep.subr.bf16.mxu0 0
    %1907 = vmatpush2.bf16.msra.mxu0 0
    %1908 = vmatprep.mubr.bf16.mxu0 0
    %1909 = vmatmul.mubr.bf16.gmra.mxu0 %v1450
    %v1910 = vpop.f32.mrf.mxu0
    %v1911 = vadd.f32 %v1829, %v1910
    %v1912 = vpop.f32.mrf.mxu0
    %v1913 = vadd.f32 %v1831, %v1912
    %v1914 = vpop.f32.mrf.mxu0
    %v1915 = vpop.f32.mrf.mxu0
    %1916 = vdwg.mxu0
    %v1917 = vpack.c.bf16 %v1737, %v1737
    %1918 = vmatprep.subr.bf16.mxu0 %v659
    %1919 = vmatpush1.bf16.msra.mxu0 %v658
    %1920 = vmatprep.subr.bf16.mxu0 %v655
    %1921 = vmatpush1.bf16.msra.mxu0 %v654
    %1922 = vmatprep.subr.bf16.mxu0 %v651
    %1923 = vmatpush1.bf16.msra.mxu0 %v650
    %1924 = vmatprep.subr.bf16.mxu0 %v647
    %1925 = vmatpush1.bf16.msra.mxu0 %v646
    %1926 = vmatprep.subr.bf16.mxu0 %v643
    %1927 = vmatpush1.bf16.msra.mxu0 %v642
    %1928 = vmatprep.subr.bf16.mxu0 %v639
    %1929 = vmatpush1.bf16.msra.mxu0 %v638
    %1930 = vmatprep.subr.bf16.mxu0 %v635
    %1931 = vmatpush1.bf16.msra.mxu0 %v634
    %1932 = vmatprep.subr.bf16.mxu0 %v631
    %1933 = vmatpush1.bf16.msra.mxu0 %v630
    %1934 = vmatprep.subr.bf16.mxu0 0
    %1935 = vmatpush2.bf16.msra.mxu0 0
    %1936 = vmatprep.subr.bf16.mxu0 0
    %1937 = vmatpush2.bf16.msra.mxu0 0
    %1938 = vmatprep.subr.bf16.mxu0 0
    %1939 = vmatpush2.bf16.msra.mxu0 0
    %1940 = vmatprep.subr.bf16.mxu0 0
    %1941 = vmatpush2.bf16.msra.mxu0 0
    %1942 = vmatprep.subr.bf16.mxu0 0
    %1943 = vmatpush2.bf16.msra.mxu0 0
    %1944 = vmatprep.subr.bf16.mxu0 0
    %1945 = vmatpush2.bf16.msra.mxu0 0
    %1946 = vmatprep.subr.bf16.mxu0 0
    %1947 = vmatpush2.bf16.msra.mxu0 0
    %1948 = vmatprep.subr.bf16.mxu0 0
    %1949 = vmatpush2.bf16.msra.mxu0 0
    %1950 = vmatprep.mubr.bf16.mxu0 0
    %1951 = vmatmul.mubr.bf16.gmra.mxu0 %v1917
    %v1952 = vpop.f32.mrf.mxu0
    %v1953 = vadd.f32 0.0, %v1952
    %v1954 = vpop.f32.mrf.mxu0
    %v1955 = vadd.f32 0.0, %v1954
    %v1956 = vpop.f32.mrf.mxu0
    %v1957 = vpop.f32.mrf.mxu0
    %1958 = vdwg.mxu0
    %1959 = vmatprep.subr.bf16.mxu0 %v661
    %1960 = vmatpush1.bf16.msra.mxu0 %v660
    %1961 = vmatprep.subr.bf16.mxu0 %v657
    %1962 = vmatpush1.bf16.msra.mxu0 %v656
    %1963 = vmatprep.subr.bf16.mxu0 %v653
    %1964 = vmatpush1.bf16.msra.mxu0 %v652
    %1965 = vmatprep.subr.bf16.mxu0 %v649
    %1966 = vmatpush1.bf16.msra.mxu0 %v648
    %1967 = vmatprep.subr.bf16.mxu0 %v645
    %1968 = vmatpush1.bf16.msra.mxu0 %v644
    %1969 = vmatprep.subr.bf16.mxu0 %v641
    %1970 = vmatpush1.bf16.msra.mxu0 %v640
    %1971 = vmatprep.subr.bf16.mxu0 %v637
    %1972 = vmatpush1.bf16.msra.mxu0 %v636
    %1973 = vmatprep.subr.bf16.mxu0 %v633
    %1974 = vmatpush1.bf16.msra.mxu0 %v632
    %1975 = vmatprep.subr.bf16.mxu0 0
    %1976 = vmatpush2.bf16.msra.mxu0 0
    %1977 = vmatprep.subr.bf16.mxu0 0
    %1978 = vmatpush2.bf16.msra.mxu0 0
    %1979 = vmatprep.subr.bf16.mxu0 0
    %1980 = vmatpush2.bf16.msra.mxu0 0
    %1981 = vmatprep.subr.bf16.mxu0 0
    %1982 = vmatpush2.bf16.msra.mxu0 0
    %1983 = vmatprep.subr.bf16.mxu0 0
    %1984 = vmatpush2.bf16.msra.mxu0 0
    %1985 = vmatprep.subr.bf16.mxu0 0
    %1986 = vmatpush2.bf16.msra.mxu0 0
    %1987 = vmatprep.subr.bf16.mxu0 0
    %1988 = vmatpush2.bf16.msra.mxu0 0
    %1989 = vmatprep.subr.bf16.mxu0 0
    %1990 = vmatpush2.bf16.msra.mxu0 0
    %1991 = vmatprep.mubr.bf16.mxu0 0
    %1992 = vmatmul.mubr.bf16.gmra.mxu0 %v1917
    %v1993 = vpop.f32.mrf.mxu0
    %v1994 = vadd.f32 0.0, %v1993
    %v1995 = vpop.f32.mrf.mxu0
    %v1996 = vadd.f32 0.0, %v1995
    %v1997 = vpop.f32.mrf.mxu0
    %v1998 = vpop.f32.mrf.mxu0
    %1999 = vdwg.mxu0
    %v2000 = vadd.f32 %v1870, %v1953
    %v2001 = vadd.f32 %v1872, %v1955
    %v2002 = vadd.f32 %v1911, %v1994
    %v2003 = vadd.f32 %v1913, %v1996
    %v2004 = vadd.f32 %v2000, %v183
    %v2005 = vadd.f32 %v2001, %v187
    %v2006 = vadd.f32 %v2002, %v191
    %v2007 = vadd.f32 %v2003, %v195
    %v2008 = vxor.u32 %v2004, 2147483648
    %v2009 = vmul.f32 %v2008, 1.442695
    %v2010 = vpow.pop %v2009
    %v2011 = vadd.f32 %v2010, 1.0
    %v2012 = vrcp.pop %v2011
    %v2013 = vmul.f32 1.0, %v2012
    %v2014 = vxor.u32 %v2005, 2147483648
    %v2015 = vmul.f32 %v2014, 1.442695
    %v2016 = vpow.pop %v2015
    %v2017 = vadd.f32 %v2016, 1.0
    %v2018 = vrcp.pop %v2017
    %v2019 = vmul.f32 1.0, %v2018
    %v2020 = vtanh.pop %v2006
    %v2021 = vxor.u32 %v2007, 2147483648
    %v2022 = vmul.f32 %v2021, 1.442695
    %v2023 = vpow.pop %v2022
    %v2024 = vadd.f32 %v2023, 1.0
    %v2025 = vrcp.pop %v2024
    %v2026 = vmul.f32 1.0, %v2025
    %v2027 = vmul.f32 %v2019, %v1738
    %v2028 = vmul.f32 %v2013, %v2020
    %v2029 = vadd.f32 %v2027, %v2028
    %v2030 = vtanh.pop %v2029
    %v2031 = vmul.f32 %v2026, %v2030
    %v2032 = vsel %vm111, 4, 3
    %vm2033 = vcmp.lt.s32.totalorder %v2032, %v811
    %v2034 = vsel %vm2033, %v2031, 0.0
    %v2035 = vsel %vm2033, %v2031, %v1737
    %v2036 = vsel %vm2033, %v2029, %v1738
    %p2037 = scmp.eq.s32.totalorder %s107, 4
    %s2038 = scalar_select %p2037, 1, 0
    %v2039 = vstv %s2038
    %vm2040 = vcmp.eq.s32.totalorder %v2039, 1
    %vm2041 = vmand %vm2040, %vm111
    %p2042 = scmp.eq.s32.totalorder %s108, 4
    %s2043 = scalar_select %p2042, 1, 0
    %v2044 = vstv %s2043
    %vm2045 = vcmp.eq.s32.totalorder %v2044, 1
    %vm2046 = vmand %vm2045, %vm112
    %vm2047 = vmor %vm2041, %vm2046
    %v2048 = vsel %vm2047, 1, 0
    %vm2049 = vcmp.eq.s32.totalorder %v2048, 1
    %v2050 = vsel %vm2049, %v2034, %v1752
    %2051 = vmatprep.subr.bf16.mxu0 0
    %2052 = vmatpush1.bf16.msra.mxu0 0
    %2053 = vmatprep.subr.bf16.mxu0 0
    %2054 = vmatpush1.bf16.msra.mxu0 0
    %2055 = vmatprep.subr.bf16.mxu0 0
    %2056 = vmatpush1.bf16.msra.mxu0 0
    %2057 = vmatprep.subr.bf16.mxu0 0
    %2058 = vmatpush1.bf16.msra.mxu0 0
    %2059 = vmatprep.subr.bf16.mxu0 %v264
    %2060 = vmatpush1.bf16.msra.mxu0 %v263
    %2061 = vmatprep.subr.bf16.mxu0 %v260
    %2062 = vmatpush1.bf16.msra.mxu0 %v259
    %2063 = vmatprep.subr.bf16.mxu0 %v256
    %2064 = vmatpush1.bf16.msra.mxu0 %v255
    %2065 = vmatprep.subr.bf16.mxu0 %v252
    %2066 = vmatpush1.bf16.msra.mxu0 %v251
    %2067 = vmatprep.subr.bf16.mxu0 0
    %2068 = vmatpush2.bf16.msra.mxu0 0
    %2069 = vmatprep.subr.bf16.mxu0 0
    %2070 = vmatpush2.bf16.msra.mxu0 0
    %2071 = vmatprep.subr.bf16.mxu0 0
    %2072 = vmatpush2.bf16.msra.mxu0 0
    %2073 = vmatprep.subr.bf16.mxu0 0
    %2074 = vmatpush2.bf16.msra.mxu0 0
    %2075 = vmatprep.subr.bf16.mxu0 0
    %2076 = vmatpush2.bf16.msra.mxu0 0
    %2077 = vmatprep.subr.bf16.mxu0 0
    %2078 = vmatpush2.bf16.msra.mxu0 0
    %2079 = vmatprep.subr.bf16.mxu0 0
    %2080 = vmatpush2.bf16.msra.mxu0 0
    %2081 = vmatprep.subr.bf16.mxu0 0
    %2082 = vmatpush2.bf16.msra.mxu0 0
    %2083 = vmatprep.mubr.bf16.mxu0 0
    %2084 = vmatmul.mubr.bf16.gmra.mxu0 %v1227
    %v2085 = vpop.f32.mrf.mxu0
    %v2086 = vadd.f32 0.0, %v2085
    %v2087 = vpop.f32.mrf.mxu0
    %v2088 = vadd.f32 0.0, %v2087
    %v2089 = vpop.f32.mrf.mxu0
    %v2090 = vpop.f32.mrf.mxu0
    %2091 = vdwg.mxu0
    %2092 = vmatprep.subr.bf16.mxu0 0
    %2093 = vmatpush1.bf16.msra.mxu0 0
    %2094 = vmatprep.subr.bf16.mxu0 0
    %2095 = vmatpush1.bf16.msra.mxu0 0
    %2096 = vmatprep.subr.bf16.mxu0 0
    %2097 = vmatpush1.bf16.msra.mxu0 0
    %2098 = vmatprep.subr.bf16.mxu0 0
    %2099 = vmatpush1.bf16.msra.mxu0 0
    %2100 = vmatprep.subr.bf16.mxu0 %v266
    %2101 = vmatpush1.bf16.msra.mxu0 %v265
    %2102 = vmatprep.subr.bf16.mxu0 %v262
    %2103 = vmatpush1.bf16.msra.mxu0 %v261
    %2104 = vmatprep.subr.bf16.mxu0 %v258
    %2105 = vmatpush1.bf16.msra.mxu0 %v257
    %2106 = vmatprep.subr.bf16.mxu0 %v254
    %2107 = vmatpush1.bf16.msra.mxu0 %v253
    %2108 = vmatprep.subr.bf16.mxu0 0
    %2109 = vmatpush2.bf16.msra.mxu0 0
    %2110 = vmatprep.subr.bf16.mxu0 0
    %2111 = vmatpush2.bf16.msra.mxu0 0
    %2112 = vmatprep.subr.bf16.mxu0 0
    %2113 = vmatpush2.bf16.msra.mxu0 0
    %2114 = vmatprep.subr.bf16.mxu0 0
    %2115 = vmatpush2.bf16.msra.mxu0 0
    %2116 = vmatprep.subr.bf16.mxu0 0
    %2117 = vmatpush2.bf16.msra.mxu0 0
    %2118 = vmatprep.subr.bf16.mxu0 0
    %2119 = vmatpush2.bf16.msra.mxu0 0
    %2120 = vmatprep.subr.bf16.mxu0 0
    %2121 = vmatpush2.bf16.msra.mxu0 0
    %2122 = vmatprep.subr.bf16.mxu0 0
    %2123 = vmatpush2.bf16.msra.mxu0 0
    %2124 = vmatprep.mubr.bf16.mxu0 0
    %2125 = vmatmul.mubr.bf16.gmra.mxu0 %v1227
    %v2126 = vpop.f32.mrf.mxu0
    %v2127 = vadd.f32 0.0, %v2126
    %v2128 = vpop.f32.mrf.mxu0
    %v2129 = vadd.f32 0.0, %v2128
    %v2130 = vpop.f32.mrf.mxu0
    %v2131 = vpop.f32.mrf.mxu0
    %2132 = vdwg.mxu0
    %2133 = vmatprep.subr.bf16.mxu0 0
    %2134 = vmatpush1.bf16.msra.mxu0 0
    %2135 = vmatprep.subr.bf16.mxu0 0
    %2136 = vmatpush1.bf16.msra.mxu0 0
    %2137 = vmatprep.subr.bf16.mxu0 0
    %2138 = vmatpush1.bf16.msra.mxu0 0
    %2139 = vmatprep.subr.bf16.mxu0 0
    %2140 = vmatpush1.bf16.msra.mxu0 0
    %2141 = vmatprep.subr.bf16.mxu0 %v430
    %2142 = vmatpush1.bf16.msra.mxu0 %v429
    %2143 = vmatprep.subr.bf16.mxu0 %v426
    %2144 = vmatpush1.bf16.msra.mxu0 %v425
    %2145 = vmatprep.subr.bf16.mxu0 %v422
    %2146 = vmatpush1.bf16.msra.mxu0 %v421
    %2147 = vmatprep.subr.bf16.mxu0 %v418
    %2148 = vmatpush1.bf16.msra.mxu0 %v417
    %2149 = vmatprep.subr.bf16.mxu0 0
    %2150 = vmatpush2.bf16.msra.mxu0 0
    %2151 = vmatprep.subr.bf16.mxu0 0
    %2152 = vmatpush2.bf16.msra.mxu0 0
    %2153 = vmatprep.subr.bf16.mxu0 0
    %2154 = vmatpush2.bf16.msra.mxu0 0
    %2155 = vmatprep.subr.bf16.mxu0 0
    %2156 = vmatpush2.bf16.msra.mxu0 0
    %2157 = vmatprep.subr.bf16.mxu0 0
    %2158 = vmatpush2.bf16.msra.mxu0 0
    %2159 = vmatprep.subr.bf16.mxu0 0
    %2160 = vmatpush2.bf16.msra.mxu0 0
    %2161 = vmatprep.subr.bf16.mxu0 0
    %2162 = vmatpush2.bf16.msra.mxu0 0
    %2163 = vmatprep.subr.bf16.mxu0 0
    %2164 = vmatpush2.bf16.msra.mxu0 0
    %2165 = vmatprep.mubr.bf16.mxu0 0
    %2166 = vmatmul.mubr.bf16.gmra.mxu0 %v1142
    %v2167 = vpop.f32.mrf.mxu0
    %v2168 = vadd.f32 %v2086, %v2167
    %v2169 = vpop.f32.mrf.mxu0
    %v2170 = vadd.f32 %v2088, %v2169
    %v2171 = vpop.f32.mrf.mxu0
    %v2172 = vpop.f32.mrf.mxu0
    %2173 = vdwg.mxu0
    %2174 = vmatprep.subr.bf16.mxu0 0
    %2175 = vmatpush1.bf16.msra.mxu0 0
    %2176 = vmatprep.subr.bf16.mxu0 0
    %2177 = vmatpush1.bf16.msra.mxu0 0
    %2178 = vmatprep.subr.bf16.mxu0 0
    %2179 = vmatpush1.bf16.msra.mxu0 0
    %2180 = vmatprep.subr.bf16.mxu0 0
    %2181 = vmatpush1.bf16.msra.mxu0 0
    %2182 = vmatprep.subr.bf16.mxu0 %v432
    %2183 = vmatpush1.bf16.msra.mxu0 %v431
    %2184 = vmatprep.subr.bf16.mxu0 %v428
    %2185 = vmatpush1.bf16.msra.mxu0 %v427
    %2186 = vmatprep.subr.bf16.mxu0 %v424
    %2187 = vmatpush1.bf16.msra.mxu0 %v423
    %2188 = vmatprep.subr.bf16.mxu0 %v420
    %2189 = vmatpush1.bf16.msra.mxu0 %v419
    %2190 = vmatprep.subr.bf16.mxu0 0
    %2191 = vmatpush2.bf16.msra.mxu0 0
    %2192 = vmatprep.subr.bf16.mxu0 0
    %2193 = vmatpush2.bf16.msra.mxu0 0
    %2194 = vmatprep.subr.bf16.mxu0 0
    %2195 = vmatpush2.bf16.msra.mxu0 0
    %2196 = vmatprep.subr.bf16.mxu0 0
    %2197 = vmatpush2.bf16.msra.mxu0 0
    %2198 = vmatprep.subr.bf16.mxu0 0
    %2199 = vmatpush2.bf16.msra.mxu0 0
    %2200 = vmatprep.subr.bf16.mxu0 0
    %2201 = vmatpush2.bf16.msra.mxu0 0
    %2202 = vmatprep.subr.bf16.mxu0 0
    %2203 = vmatpush2.bf16.msra.mxu0 0
    %2204 = vmatprep.subr.bf16.mxu0 0
    %2205 = vmatpush2.bf16.msra.mxu0 0
    %2206 = vmatprep.mubr.bf16.mxu0 0
    %2207 = vmatmul.mubr.bf16.gmra.mxu0 %v1142
    %v2208 = vpop.f32.mrf.mxu0
    %v2209 = vadd.f32 %v2127, %v2208
    %v2210 = vpop.f32.mrf.mxu0
    %v2211 = vadd.f32 %v2129, %v2210
    %v2212 = vpop.f32.mrf.mxu0
    %v2213 = vpop.f32.mrf.mxu0
    %2214 = vdwg.mxu0
    %v2215 = vpack.c.bf16 %v2035, %v2035
    %2216 = vmatprep.subr.bf16.mxu0 %v659
    %2217 = vmatpush1.bf16.msra.mxu0 %v658
    %2218 = vmatprep.subr.bf16.mxu0 %v655
    %2219 = vmatpush1.bf16.msra.mxu0 %v654
    %2220 = vmatprep.subr.bf16.mxu0 %v651
    %2221 = vmatpush1.bf16.msra.mxu0 %v650
    %2222 = vmatprep.subr.bf16.mxu0 %v647
    %2223 = vmatpush1.bf16.msra.mxu0 %v646
    %2224 = vmatprep.subr.bf16.mxu0 %v643
    %2225 = vmatpush1.bf16.msra.mxu0 %v642
    %2226 = vmatprep.subr.bf16.mxu0 %v639
    %2227 = vmatpush1.bf16.msra.mxu0 %v638
    %2228 = vmatprep.subr.bf16.mxu0 %v635
    %2229 = vmatpush1.bf16.msra.mxu0 %v634
    %2230 = vmatprep.subr.bf16.mxu0 %v631
    %2231 = vmatpush1.bf16.msra.mxu0 %v630
    %2232 = vmatprep.subr.bf16.mxu0 0
    %2233 = vmatpush2.bf16.msra.mxu0 0
    %2234 = vmatprep.subr.bf16.mxu0 0
    %2235 = vmatpush2.bf16.msra.mxu0 0
    %2236 = vmatprep.subr.bf16.mxu0 0
    %2237 = vmatpush2.bf16.msra.mxu0 0
    %2238 = vmatprep.subr.bf16.mxu0 0
    %2239 = vmatpush2.bf16.msra.mxu0 0
    %2240 = vmatprep.subr.bf16.mxu0 0
    %2241 = vmatpush2.bf16.msra.mxu0 0
    %2242 = vmatprep.subr.bf16.mxu0 0
    %2243 = vmatpush2.bf16.msra.mxu0 0
    %2244 = vmatprep.subr.bf16.mxu0 0
    %2245 = vmatpush2.bf16.msra.mxu0 0
    %2246 = vmatprep.subr.bf16.mxu0 0
    %2247 = vmatpush2.bf16.msra.mxu0 0
    %2248 = vmatprep.mubr.bf16.mxu0 0
    %2249 = vmatmul.mubr.bf16.gmra.mxu0 %v2215
    %v2250 = vpop.f32.mrf.mxu0
    %v2251 = vadd.f32 0.0, %v2250
    %v2252 = vpop.f32.mrf.mxu0
    %v2253 = vadd.f32 0.0, %v2252
    %v2254 = vpop.f32.mrf.mxu0
    %v2255 = vpop.f32.mrf.mxu0
    %2256 = vdwg.mxu0
    %2257 = vmatprep.subr.bf16.mxu0 %v661
    %2258 = vmatpush1.bf16.msra.mxu0 %v660
    %2259 = vmatprep.subr.bf16.mxu0 %v657
    %2260 = vmatpush1.bf16.msra.mxu0 %v656
    %2261 = vmatprep.subr.bf16.mxu0 %v653
    %2262 = vmatpush1.bf16.msra.mxu0 %v652
    %2263 = vmatprep.subr.bf16.mxu0 %v649
    %2264 = vmatpush1.bf16.msra.mxu0 %v648
    %2265 = vmatprep.subr.bf16.mxu0 %v645
    %2266 = vmatpush1.bf16.msra.mxu0 %v644
    %2267 = vmatprep.subr.bf16.mxu0 %v641
    %2268 = vmatpush1.bf16.msra.mxu0 %v640
    %2269 = vmatprep.subr.bf16.mxu0 %v637
    %2270 = vmatpush1.bf16.msra.mxu0 %v636
    %2271 = vmatprep.subr.bf16.mxu0 %v633
    %2272 = vmatpush1.bf16.msra.mxu0 %v632
    %2273 = vmatprep.subr.bf16.mxu0 0
    %2274 = vmatpush2.bf16.msra.mxu0 0
    %2275 = vmatprep.subr.bf16.mxu0 0
    %2276 = vmatpush2.bf16.msra.mxu0 0
    %2277 = vmatprep.subr.bf16.mxu0 0
    %2278 = vmatpush2.bf16.msra.mxu0 0
    %2279 = vmatprep.subr.bf16.mxu0 0
    %2280 = vmatpush2.bf16.msra.mxu0 0
    %2281 = vmatprep.subr.bf16.mxu0 0
    %2282 = vmatpush2.bf16.msra.mxu0 0
    %2283 = vmatprep.subr.bf16.mxu0 0
    %2284 = vmatpush2.bf16.msra.mxu0 0
    %2285 = vmatprep.subr.bf16.mxu0 0
    %2286 = vmatpush2.bf16.msra.mxu0 0
    %2287 = vmatprep.subr.bf16.mxu0 0
    %2288 = vmatpush2.bf16.msra.mxu0 0
    %2289 = vmatprep.mubr.bf16.mxu0 0
    %2290 = vmatmul.mubr.bf16.gmra.mxu0 %v2215
    %v2291 = vpop.f32.mrf.mxu0
    %v2292 = vadd.f32 0.0, %v2291
    %v2293 = vpop.f32.mrf.mxu0
    %v2294 = vadd.f32 0.0, %v2293
    %v2295 = vpop.f32.mrf.mxu0
    %v2296 = vpop.f32.mrf.mxu0
    %2297 = vdwg.mxu0
    %v2298 = vadd.f32 %v2168, %v2251
    %v2299 = vadd.f32 %v2170, %v2253
    %v2300 = vadd.f32 %v2209, %v2292
    %v2301 = vadd.f32 %v2211, %v2294
    %v2302 = vadd.f32 %v2298, %v183
    %v2303 = vadd.f32 %v2299, %v187
    %v2304 = vadd.f32 %v2300, %v191
    %v2305 = vadd.f32 %v2301, %v195
    %v2306 = vxor.u32 %v2302, 2147483648
    %v2307 = vmul.f32 %v2306, 1.442695
    %v2308 = vpow.pop %v2307
    %v2309 = vadd.f32 %v2308, 1.0
    %v2310 = vrcp.pop %v2309
    %v2311 = vmul.f32 1.0, %v2310
    %v2312 = vxor.u32 %v2303, 2147483648
    %v2313 = vmul.f32 %v2312, 1.442695
    %v2314 = vpow.pop %v2313
    %v2315 = vadd.f32 %v2314, 1.0
    %v2316 = vrcp.pop %v2315
    %v2317 = vmul.f32 1.0, %v2316
    %v2318 = vtanh.pop %v2304
    %v2319 = vxor.u32 %v2305, 2147483648
    %v2320 = vmul.f32 %v2319, 1.442695
    %v2321 = vpow.pop %v2320
    %v2322 = vadd.f32 %v2321, 1.0
    %v2323 = vrcp.pop %v2322
    %v2324 = vmul.f32 1.0, %v2323
    %v2325 = vmul.f32 %v2317, %v2036
    %v2326 = vmul.f32 %v2311, %v2318
    %v2327 = vadd.f32 %v2325, %v2326
    %v2328 = vtanh.pop %v2327
    %v2329 = vmul.f32 %v2324, %v2328
    %v2330 = vsel %vm111, 5, 2
    %vm2331 = vcmp.lt.s32.totalorder %v2330, %v811
    %v2332 = vsel %vm2331, %v2329, 0.0
    %v2333 = vsel %vm2331, %v2329, %v2035
    %v2334 = vsel %vm2331, %v2327, %v2036
    %p2335 = scmp.eq.s32.totalorder %s107, 5
    %s2336 = scalar_select %p2335, 1, 0
    %v2337 = vstv %s2336
    %vm2338 = vcmp.eq.s32.totalorder %v2337, 1
    %vm2339 = vmand %vm2338, %vm111
    %p2340 = scmp.eq.s32.totalorder %s108, 5
    %s2341 = scalar_select %p2340, 1, 0
    %v2342 = vstv %s2341
    %vm2343 = vcmp.eq.s32.totalorder %v2342, 1
    %vm2344 = vmand %vm2343, %vm112
    %vm2345 = vmor %vm2339, %vm2344
    %v2346 = vsel %vm2345, 1, 0
    %vm2347 = vcmp.eq.s32.totalorder %v2346, 1
    %v2348 = vsel %vm2347, %v2332, %v2050
    %2349 = vmatprep.subr.bf16.mxu0 0
    %2350 = vmatpush1.bf16.msra.mxu0 0
    %2351 = vmatprep.subr.bf16.mxu0 0
    %2352 = vmatpush1.bf16.msra.mxu0 0
    %2353 = vmatprep.subr.bf16.mxu0 0
    %2354 = vmatpush1.bf16.msra.mxu0 0
    %2355 = vmatprep.subr.bf16.mxu0 0
    %2356 = vmatpush1.bf16.msra.mxu0 0
    %2357 = vmatprep.subr.bf16.mxu0 %v264
    %2358 = vmatpush1.bf16.msra.mxu0 %v263
    %2359 = vmatprep.subr.bf16.mxu0 %v260
    %2360 = vmatpush1.bf16.msra.mxu0 %v259
    %2361 = vmatprep.subr.bf16.mxu0 %v256
    %2362 = vmatpush1.bf16.msra.mxu0 %v255
    %2363 = vmatprep.subr.bf16.mxu0 %v252
    %2364 = vmatpush1.bf16.msra.mxu0 %v251
    %2365 = vmatprep.subr.bf16.mxu0 0
    %2366 = vmatpush2.bf16.msra.mxu0 0
    %2367 = vmatprep.subr.bf16.mxu0 0
    %2368 = vmatpush2.bf16.msra.mxu0 0
    %2369 = vmatprep.subr.bf16.mxu0 0
    %2370 = vmatpush2.bf16.msra.mxu0 0
    %2371 = vmatprep.subr.bf16.mxu0 0
    %2372 = vmatpush2.bf16.msra.mxu0 0
    %2373 = vmatprep.subr.bf16.mxu0 0
    %2374 = vmatpush2.bf16.msra.mxu0 0
    %2375 = vmatprep.subr.bf16.mxu0 0
    %2376 = vmatpush2.bf16.msra.mxu0 0
    %2377 = vmatprep.subr.bf16.mxu0 0
    %2378 = vmatpush2.bf16.msra.mxu0 0
    %2379 = vmatprep.subr.bf16.mxu0 0
    %2380 = vmatpush2.bf16.msra.mxu0 0
    %2381 = vmatprep.mubr.bf16.mxu0 0
    %2382 = vmatmul.mubr.bf16.gmra.mxu0 %v919
    %v2383 = vpop.f32.mrf.mxu0
    %v2384 = vadd.f32 0.0, %v2383
    %v2385 = vpop.f32.mrf.mxu0
    %v2386 = vadd.f32 0.0, %v2385
    %v2387 = vpop.f32.mrf.mxu0
    %v2388 = vpop.f32.mrf.mxu0
    %2389 = vdwg.mxu0
    %2390 = vmatprep.subr.bf16.mxu0 0
    %2391 = vmatpush1.bf16.msra.mxu0 0
    %2392 = vmatprep.subr.bf16.mxu0 0
    %2393 = vmatpush1.bf16.msra.mxu0 0
    %2394 = vmatprep.subr.bf16.mxu0 0
    %2395 = vmatpush1.bf16.msra.mxu0 0
    %2396 = vmatprep.subr.bf16.mxu0 0
    %2397 = vmatpush1.bf16.msra.mxu0 0
    %2398 = vmatprep.subr.bf16.mxu0 %v266
    %2399 = vmatpush1.bf16.msra.mxu0 %v265
    %2400 = vmatprep.subr.bf16.mxu0 %v262
    %2401 = vmatpush1.bf16.msra.mxu0 %v261
    %2402 = vmatprep.subr.bf16.mxu0 %v258
    %2403 = vmatpush1.bf16.msra.mxu0 %v257
    %2404 = vmatprep.subr.bf16.mxu0 %v254
    %2405 = vmatpush1.bf16.msra.mxu0 %v253
    %2406 = vmatprep.subr.bf16.mxu0 0
    %2407 = vmatpush2.bf16.msra.mxu0 0
    %2408 = vmatprep.subr.bf16.mxu0 0
    %2409 = vmatpush2.bf16.msra.mxu0 0
    %2410 = vmatprep.subr.bf16.mxu0 0
    %2411 = vmatpush2.bf16.msra.mxu0 0
    %2412 = vmatprep.subr.bf16.mxu0 0
    %2413 = vmatpush2.bf16.msra.mxu0 0
    %2414 = vmatprep.subr.bf16.mxu0 0
    %2415 = vmatpush2.bf16.msra.mxu0 0
    %2416 = vmatprep.subr.bf16.mxu0 0
    %2417 = vmatpush2.bf16.msra.mxu0 0
    %2418 = vmatprep.subr.bf16.mxu0 0
    %2419 = vmatpush2.bf16.msra.mxu0 0
    %2420 = vmatprep.subr.bf16.mxu0 0
    %2421 = vmatpush2.bf16.msra.mxu0 0
    %2422 = vmatprep.mubr.bf16.mxu0 0
    %2423 = vmatmul.mubr.bf16.gmra.mxu0 %v919
    %v2424 = vpop.f32.mrf.mxu0
    %v2425 = vadd.f32 0.0, %v2424
    %v2426 = vpop.f32.mrf.mxu0
    %v2427 = vadd.f32 0.0, %v2426
    %v2428 = vpop.f32.mrf.mxu0
    %v2429 = vpop.f32.mrf.mxu0
    %2430 = vdwg.mxu0
    %2431 = vmatprep.subr.bf16.mxu0 0
    %2432 = vmatpush1.bf16.msra.mxu0 0
    %2433 = vmatprep.subr.bf16.mxu0 0
    %2434 = vmatpush1.bf16.msra.mxu0 0
    %2435 = vmatprep.subr.bf16.mxu0 0
    %2436 = vmatpush1.bf16.msra.mxu0 0
    %2437 = vmatprep.subr.bf16.mxu0 0
    %2438 = vmatpush1.bf16.msra.mxu0 0
    %2439 = vmatprep.subr.bf16.mxu0 %v430
    %2440 = vmatpush1.bf16.msra.mxu0 %v429
    %2441 = vmatprep.subr.bf16.mxu0 %v426
    %2442 = vmatpush1.bf16.msra.mxu0 %v425
    %2443 = vmatprep.subr.bf16.mxu0 %v422
    %2444 = vmatpush1.bf16.msra.mxu0 %v421
    %2445 = vmatprep.subr.bf16.mxu0 %v418
    %2446 = vmatpush1.bf16.msra.mxu0 %v417
    %2447 = vmatprep.subr.bf16.mxu0 0
    %2448 = vmatpush2.bf16.msra.mxu0 0
    %2449 = vmatprep.subr.bf16.mxu0 0
    %2450 = vmatpush2.bf16.msra.mxu0 0
    %2451 = vmatprep.subr.bf16.mxu0 0
    %2452 = vmatpush2.bf16.msra.mxu0 0
    %2453 = vmatprep.subr.bf16.mxu0 0
    %2454 = vmatpush2.bf16.msra.mxu0 0
    %2455 = vmatprep.subr.bf16.mxu0 0
    %2456 = vmatpush2.bf16.msra.mxu0 0
    %2457 = vmatprep.subr.bf16.mxu0 0
    %2458 = vmatpush2.bf16.msra.mxu0 0
    %2459 = vmatprep.subr.bf16.mxu0 0
    %2460 = vmatpush2.bf16.msra.mxu0 0
    %2461 = vmatprep.subr.bf16.mxu0 0
    %2462 = vmatpush2.bf16.msra.mxu0 0
    %2463 = vmatprep.mubr.bf16.mxu0 0
    %2464 = vmatmul.mubr.bf16.gmra.mxu0 %v834
    %v2465 = vpop.f32.mrf.mxu0
    %v2466 = vadd.f32 %v2384, %v2465
    %v2467 = vpop.f32.mrf.mxu0
    %v2468 = vadd.f32 %v2386, %v2467
    %v2469 = vpop.f32.mrf.mxu0
    %v2470 = vpop.f32.mrf.mxu0
    %2471 = vdwg.mxu0
    %2472 = vmatprep.subr.bf16.mxu0 0
    %2473 = vmatpush1.bf16.msra.mxu0 0
    %2474 = vmatprep.subr.bf16.mxu0 0
    %2475 = vmatpush1.bf16.msra.mxu0 0
    %2476 = vmatprep.subr.bf16.mxu0 0
    %2477 = vmatpush1.bf16.msra.mxu0 0
    %2478 = vmatprep.subr.bf16.mxu0 0
    %2479 = vmatpush1.bf16.msra.mxu0 0
    %2480 = vmatprep.subr.bf16.mxu0 %v432
    %2481 = vmatpush1.bf16.msra.mxu0 %v431
    %2482 = vmatprep.subr.bf16.mxu0 %v428
    %2483 = vmatpush1.bf16.msra.mxu0 %v427
    %2484 = vmatprep.subr.bf16.mxu0 %v424
    %2485 = vmatpush1.bf16.msra.mxu0 %v423
    %2486 = vmatprep.subr.bf16.mxu0 %v420
    %2487 = vmatpush1.bf16.msra.mxu0 %v419
    %2488 = vmatprep.subr.bf16.mxu0 0
    %2489 = vmatpush2.bf16.msra.mxu0 0
    %2490 = vmatprep.subr.bf16.mxu0 0
    %2491 = vmatpush2.bf16.msra.mxu0 0
    %2492 = vmatprep.subr.bf16.mxu0 0
    %2493 = vmatpush2.bf16.msra.mxu0 0
    %2494 = vmatprep.subr.bf16.mxu0 0
    %2495 = vmatpush2.bf16.msra.mxu0 0
    %2496 = vmatprep.subr.bf16.mxu0 0
    %2497 = vmatpush2.bf16.msra.mxu0 0
    %2498 = vmatprep.subr.bf16.mxu0 0
    %2499 = vmatpush2.bf16.msra.mxu0 0
    %2500 = vmatprep.subr.bf16.mxu0 0
    %2501 = vmatpush2.bf16.msra.mxu0 0
    %2502 = vmatprep.subr.bf16.mxu0 0
    %2503 = vmatpush2.bf16.msra.mxu0 0
    %2504 = vmatprep.mubr.bf16.mxu0 0
    %2505 = vmatmul.mubr.bf16.gmra.mxu0 %v834
    %v2506 = vpop.f32.mrf.mxu0
    %v2507 = vadd.f32 %v2425, %v2506
    %v2508 = vpop.f32.mrf.mxu0
    %v2509 = vadd.f32 %v2427, %v2508
    %v2510 = vpop.f32.mrf.mxu0
    %v2511 = vpop.f32.mrf.mxu0
    %2512 = vdwg.mxu0
    %v2513 = vpack.c.bf16 %v2333, %v2333
    %2514 = vmatprep.subr.bf16.mxu0 %v659
    %2515 = vmatpush1.bf16.msra.mxu0 %v658
    %2516 = vmatprep.subr.bf16.mxu0 %v655
    %2517 = vmatpush1.bf16.msra.mxu0 %v654
    %2518 = vmatprep.subr.bf16.mxu0 %v651
    %2519 = vmatpush1.bf16.msra.mxu0 %v650
    %2520 = vmatprep.subr.bf16.mxu0 %v647
    %2521 = vmatpush1.bf16.msra.mxu0 %v646
    %2522 = vmatprep.subr.bf16.mxu0 %v643
    %2523 = vmatpush1.bf16.msra.mxu0 %v642
    %2524 = vmatprep.subr.bf16.mxu0 %v639
    %2525 = vmatpush1.bf16.msra.mxu0 %v638
    %2526 = vmatprep.subr.bf16.mxu0 %v635
    %2527 = vmatpush1.bf16.msra.mxu0 %v634
    %2528 = vmatprep.subr.bf16.mxu0 %v631
    %2529 = vmatpush1.bf16.msra.mxu0 %v630
    %2530 = vmatprep.subr.bf16.mxu0 0
    %2531 = vmatpush2.bf16.msra.mxu0 0
    %2532 = vmatprep.subr.bf16.mxu0 0
    %2533 = vmatpush2.bf16.msra.mxu0 0
    %2534 = vmatprep.subr.bf16.mxu0 0
    %2535 = vmatpush2.bf16.msra.mxu0 0
    %2536 = vmatprep.subr.bf16.mxu0 0
    %2537 = vmatpush2.bf16.msra.mxu0 0
    %2538 = vmatprep.subr.bf16.mxu0 0
    %2539 = vmatpush2.bf16.msra.mxu0 0
    %2540 = vmatprep.subr.bf16.mxu0 0
    %2541 = vmatpush2.bf16.msra.mxu0 0
    %2542 = vmatprep.subr.bf16.mxu0 0
    %2543 = vmatpush2.bf16.msra.mxu0 0
    %2544 = vmatprep.subr.bf16.mxu0 0
    %2545 = vmatpush2.bf16.msra.mxu0 0
    %2546 = vmatprep.mubr.bf16.mxu0 0
    %2547 = vmatmul.mubr.bf16.gmra.mxu0 %v2513
    %v2548 = vpop.f32.mrf.mxu0
    %v2549 = vadd.f32 0.0, %v2548
    %v2550 = vpop.f32.mrf.mxu0
    %v2551 = vadd.f32 0.0, %v2550
    %v2552 = vpop.f32.mrf.mxu0
    %v2553 = vpop.f32.mrf.mxu0
    %2554 = vdwg.mxu0
    %2555 = vmatprep.subr.bf16.mxu0 %v661
    %2556 = vmatpush1.bf16.msra.mxu0 %v660
    %2557 = vmatprep.subr.bf16.mxu0 %v657
    %2558 = vmatpush1.bf16.msra.mxu0 %v656
    %2559 = vmatprep.subr.bf16.mxu0 %v653
    %2560 = vmatpush1.bf16.msra.mxu0 %v652
    %2561 = vmatprep.subr.bf16.mxu0 %v649
    %2562 = vmatpush1.bf16.msra.mxu0 %v648
    %2563 = vmatprep.subr.bf16.mxu0 %v645
    %2564 = vmatpush1.bf16.msra.mxu0 %v644
    %2565 = vmatprep.subr.bf16.mxu0 %v641
    %2566 = vmatpush1.bf16.msra.mxu0 %v640
    %2567 = vmatprep.subr.bf16.mxu0 %v637
    %2568 = vmatpush1.bf16.msra.mxu0 %v636
    %2569 = vmatprep.subr.bf16.mxu0 %v633
    %2570 = vmatpush1.bf16.msra.mxu0 %v632
    %2571 = vmatprep.subr.bf16.mxu0 0
    %2572 = vmatpush2.bf16.msra.mxu0 0
    %2573 = vmatprep.subr.bf16.mxu0 0
    %2574 = vmatpush2.bf16.msra.mxu0 0
    %2575 = vmatprep.subr.bf16.mxu0 0
    %2576 = vmatpush2.bf16.msra.mxu0 0
    %2577 = vmatprep.subr.bf16.mxu0 0
    %2578 = vmatpush2.bf16.msra.mxu0 0
    %2579 = vmatprep.subr.bf16.mxu0 0
    %2580 = vmatpush2.bf16.msra.mxu0 0
    %2581 = vmatprep.subr.bf16.mxu0 0
    %2582 = vmatpush2.bf16.msra.mxu0 0
    %2583 = vmatprep.subr.bf16.mxu0 0
    %2584 = vmatpush2.bf16.msra.mxu0 0
    %2585 = vmatprep.subr.bf16.mxu0 0
    %2586 = vmatpush2.bf16.msra.mxu0 0
    %2587 = vmatprep.mubr.bf16.mxu0 0
    %2588 = vmatmul.mubr.bf16.gmra.mxu0 %v2513
    %v2589 = vpop.f32.mrf.mxu0
    %v2590 = vadd.f32 0.0, %v2589
    %v2591 = vpop.f32.mrf.mxu0
    %v2592 = vadd.f32 0.0, %v2591
    %v2593 = vpop.f32.mrf.mxu0
    %v2594 = vpop.f32.mrf.mxu0
    %2595 = vdwg.mxu0
    %v2596 = vadd.f32 %v2466, %v2549
    %v2597 = vadd.f32 %v2468, %v2551
    %v2598 = vadd.f32 %v2507, %v2590
    %v2599 = vadd.f32 %v2509, %v2592
    %v2600 = vadd.f32 %v2596, %v183
    %v2601 = vadd.f32 %v2597, %v187
    %v2602 = vadd.f32 %v2598, %v191
    %v2603 = vadd.f32 %v2599, %v195
    %v2604 = vxor.u32 %v2600, 2147483648
    %v2605 = vmul.f32 %v2604, 1.442695
    %v2606 = vpow.pop %v2605
    %v2607 = vadd.f32 %v2606, 1.0
    %v2608 = vrcp.pop %v2607
    %v2609 = vmul.f32 1.0, %v2608
    %v2610 = vxor.u32 %v2601, 2147483648
    %v2611 = vmul.f32 %v2610, 1.442695
    %v2612 = vpow.pop %v2611
    %v2613 = vadd.f32 %v2612, 1.0
    %v2614 = vrcp.pop %v2613
    %v2615 = vmul.f32 1.0, %v2614
    %v2616 = vtanh.pop %v2602
    %v2617 = vxor.u32 %v2603, 2147483648
    %v2618 = vmul.f32 %v2617, 1.442695
    %v2619 = vpow.pop %v2618
    %v2620 = vadd.f32 %v2619, 1.0
    %v2621 = vrcp.pop %v2620
    %v2622 = vmul.f32 1.0, %v2621
    %v2623 = vmul.f32 %v2615, %v2334
    %v2624 = vmul.f32 %v2609, %v2616
    %v2625 = vadd.f32 %v2623, %v2624
    %v2626 = vtanh.pop %v2625
    %v2627 = vmul.f32 %v2622, %v2626
    %v2628 = vsel %vm111, 6, 1
    %vm2629 = vcmp.lt.s32.totalorder %v2628, %v811
    %v2630 = vsel %vm2629, %v2627, 0.0
    %v2631 = vsel %vm2629, %v2627, %v2333
    %v2632 = vsel %vm2629, %v2625, %v2334
    %p2633 = scmp.eq.s32.totalorder %s107, 6
    %s2634 = scalar_select %p2633, 1, 0
    %v2635 = vstv %s2634
    %vm2636 = vcmp.eq.s32.totalorder %v2635, 1
    %vm2637 = vmand %vm2636, %vm111
    %p2638 = scmp.eq.s32.totalorder %s108, 6
    %s2639 = scalar_select %p2638, 1, 0
    %v2640 = vstv %s2639
    %vm2641 = vcmp.eq.s32.totalorder %v2640, 1
    %vm2642 = vmand %vm2641, %vm112
    %vm2643 = vmor %vm2637, %vm2642
    %v2644 = vsel %vm2643, 1, 0
    %vm2645 = vcmp.eq.s32.totalorder %v2644, 1
    %v2646 = vsel %vm2645, %v2630, %v2348
    %2647 = vmatprep.subr.bf16.mxu0 0
    %2648 = vmatpush1.bf16.msra.mxu0 0
    %2649 = vmatprep.subr.bf16.mxu0 0
    %2650 = vmatpush1.bf16.msra.mxu0 0
    %2651 = vmatprep.subr.bf16.mxu0 0
    %2652 = vmatpush1.bf16.msra.mxu0 0
    %2653 = vmatprep.subr.bf16.mxu0 0
    %2654 = vmatpush1.bf16.msra.mxu0 0
    %2655 = vmatprep.subr.bf16.mxu0 %v264
    %2656 = vmatpush1.bf16.msra.mxu0 %v263
    %2657 = vmatprep.subr.bf16.mxu0 %v260
    %2658 = vmatpush1.bf16.msra.mxu0 %v259
    %2659 = vmatprep.subr.bf16.mxu0 %v256
    %2660 = vmatpush1.bf16.msra.mxu0 %v255
    %2661 = vmatprep.subr.bf16.mxu0 %v252
    %2662 = vmatpush1.bf16.msra.mxu0 %v251
    %2663 = vmatprep.subr.bf16.mxu0 0
    %2664 = vmatpush2.bf16.msra.mxu0 0
    %2665 = vmatprep.subr.bf16.mxu0 0
    %2666 = vmatpush2.bf16.msra.mxu0 0
    %2667 = vmatprep.subr.bf16.mxu0 0
    %2668 = vmatpush2.bf16.msra.mxu0 0
    %2669 = vmatprep.subr.bf16.mxu0 0
    %2670 = vmatpush2.bf16.msra.mxu0 0
    %2671 = vmatprep.subr.bf16.mxu0 0
    %2672 = vmatpush2.bf16.msra.mxu0 0
    %2673 = vmatprep.subr.bf16.mxu0 0
    %2674 = vmatpush2.bf16.msra.mxu0 0
    %2675 = vmatprep.subr.bf16.mxu0 0
    %2676 = vmatpush2.bf16.msra.mxu0 0
    %2677 = vmatprep.subr.bf16.mxu0 0
    %2678 = vmatpush2.bf16.msra.mxu0 0
    %2679 = vmatprep.mubr.bf16.mxu0 0
    %2680 = vmatmul.mubr.bf16.gmra.mxu0 %v450
    %v2681 = vpop.f32.mrf.mxu0
    %v2682 = vadd.f32 0.0, %v2681
    %v2683 = vpop.f32.mrf.mxu0
    %v2684 = vadd.f32 0.0, %v2683
    %v2685 = vpop.f32.mrf.mxu0
    %v2686 = vpop.f32.mrf.mxu0
    %2687 = vdwg.mxu0
    %2688 = vmatprep.subr.bf16.mxu0 0
    %2689 = vmatpush1.bf16.msra.mxu0 0
    %2690 = vmatprep.subr.bf16.mxu0 0
    %2691 = vmatpush1.bf16.msra.mxu0 0
    %2692 = vmatprep.subr.bf16.mxu0 0
    %2693 = vmatpush1.bf16.msra.mxu0 0
    %2694 = vmatprep.subr.bf16.mxu0 0
    %2695 = vmatpush1.bf16.msra.mxu0 0
    %2696 = vmatprep.subr.bf16.mxu0 %v266
    %2697 = vmatpush1.bf16.msra.mxu0 %v265
    %2698 = vmatprep.subr.bf16.mxu0 %v262
    %2699 = vmatpush1.bf16.msra.mxu0 %v261
    %2700 = vmatprep.subr.bf16.mxu0 %v258
    %2701 = vmatpush1.bf16.msra.mxu0 %v257
    %2702 = vmatprep.subr.bf16.mxu0 %v254
    %2703 = vmatpush1.bf16.msra.mxu0 %v253
    %2704 = vmatprep.subr.bf16.mxu0 0
    %2705 = vmatpush2.bf16.msra.mxu0 0
    %2706 = vmatprep.subr.bf16.mxu0 0
    %2707 = vmatpush2.bf16.msra.mxu0 0
    %2708 = vmatprep.subr.bf16.mxu0 0
    %2709 = vmatpush2.bf16.msra.mxu0 0
    %2710 = vmatprep.subr.bf16.mxu0 0
    %2711 = vmatpush2.bf16.msra.mxu0 0
    %2712 = vmatprep.subr.bf16.mxu0 0
    %2713 = vmatpush2.bf16.msra.mxu0 0
    %2714 = vmatprep.subr.bf16.mxu0 0
    %2715 = vmatpush2.bf16.msra.mxu0 0
    %2716 = vmatprep.subr.bf16.mxu0 0
    %2717 = vmatpush2.bf16.msra.mxu0 0
    %2718 = vmatprep.subr.bf16.mxu0 0
    %2719 = vmatpush2.bf16.msra.mxu0 0
    %2720 = vmatprep.mubr.bf16.mxu0 0
    %2721 = vmatmul.mubr.bf16.gmra.mxu0 %v450
    %v2722 = vpop.f32.mrf.mxu0
    %v2723 = vadd.f32 0.0, %v2722
    %v2724 = vpop.f32.mrf.mxu0
    %v2725 = vadd.f32 0.0, %v2724
    %v2726 = vpop.f32.mrf.mxu0
    %v2727 = vpop.f32.mrf.mxu0
    %2728 = vdwg.mxu0
    %2729 = vmatprep.subr.bf16.mxu0 0
    %2730 = vmatpush1.bf16.msra.mxu0 0
    %2731 = vmatprep.subr.bf16.mxu0 0
    %2732 = vmatpush1.bf16.msra.mxu0 0
    %2733 = vmatprep.subr.bf16.mxu0 0
    %2734 = vmatpush1.bf16.msra.mxu0 0
    %2735 = vmatprep.subr.bf16.mxu0 0
    %2736 = vmatpush1.bf16.msra.mxu0 0
    %2737 = vmatprep.subr.bf16.mxu0 %v430
    %2738 = vmatpush1.bf16.msra.mxu0 %v429
    %2739 = vmatprep.subr.bf16.mxu0 %v426
    %2740 = vmatpush1.bf16.msra.mxu0 %v425
    %2741 = vmatprep.subr.bf16.mxu0 %v422
    %2742 = vmatpush1.bf16.msra.mxu0 %v421
    %2743 = vmatprep.subr.bf16.mxu0 %v418
    %2744 = vmatpush1.bf16.msra.mxu0 %v417
    %2745 = vmatprep.subr.bf16.mxu0 0
    %2746 = vmatpush2.bf16.msra.mxu0 0
    %2747 = vmatprep.subr.bf16.mxu0 0
    %2748 = vmatpush2.bf16.msra.mxu0 0
    %2749 = vmatprep.subr.bf16.mxu0 0
    %2750 = vmatpush2.bf16.msra.mxu0 0
    %2751 = vmatprep.subr.bf16.mxu0 0
    %2752 = vmatpush2.bf16.msra.mxu0 0
    %2753 = vmatprep.subr.bf16.mxu0 0
    %2754 = vmatpush2.bf16.msra.mxu0 0
    %2755 = vmatprep.subr.bf16.mxu0 0
    %2756 = vmatpush2.bf16.msra.mxu0 0
    %2757 = vmatprep.subr.bf16.mxu0 0
    %2758 = vmatpush2.bf16.msra.mxu0 0
    %2759 = vmatprep.subr.bf16.mxu0 0
    %2760 = vmatpush2.bf16.msra.mxu0 0
    %2761 = vmatprep.mubr.bf16.mxu0 0
    %2762 = vmatmul.mubr.bf16.gmra.mxu0 %v285
    %v2763 = vpop.f32.mrf.mxu0
    %v2764 = vadd.f32 %v2682, %v2763
    %v2765 = vpop.f32.mrf.mxu0
    %v2766 = vadd.f32 %v2684, %v2765
    %v2767 = vpop.f32.mrf.mxu0
    %v2768 = vpop.f32.mrf.mxu0
    %2769 = vdwg.mxu0
    %2770 = vmatprep.subr.bf16.mxu0 0
    %2771 = vmatpush1.bf16.msra.mxu0 0
    %2772 = vmatprep.subr.bf16.mxu0 0
    %2773 = vmatpush1.bf16.msra.mxu0 0
    %2774 = vmatprep.subr.bf16.mxu0 0
    %2775 = vmatpush1.bf16.msra.mxu0 0
    %2776 = vmatprep.subr.bf16.mxu0 0
    %2777 = vmatpush1.bf16.msra.mxu0 0
    %2778 = vmatprep.subr.bf16.mxu0 %v432
    %2779 = vmatpush1.bf16.msra.mxu0 %v431
    %2780 = vmatprep.subr.bf16.mxu0 %v428
    %2781 = vmatpush1.bf16.msra.mxu0 %v427
    %2782 = vmatprep.subr.bf16.mxu0 %v424
    %2783 = vmatpush1.bf16.msra.mxu0 %v423
    %2784 = vmatprep.subr.bf16.mxu0 %v420
    %2785 = vmatpush1.bf16.msra.mxu0 %v419
    %2786 = vmatprep.subr.bf16.mxu0 0
    %2787 = vmatpush2.bf16.msra.mxu0 0
    %2788 = vmatprep.subr.bf16.mxu0 0
    %2789 = vmatpush2.bf16.msra.mxu0 0
    %2790 = vmatprep.subr.bf16.mxu0 0
    %2791 = vmatpush2.bf16.msra.mxu0 0
    %2792 = vmatprep.subr.bf16.mxu0 0
    %2793 = vmatpush2.bf16.msra.mxu0 0
    %2794 = vmatprep.subr.bf16.mxu0 0
    %2795 = vmatpush2.bf16.msra.mxu0 0
    %2796 = vmatprep.subr.bf16.mxu0 0
    %2797 = vmatpush2.bf16.msra.mxu0 0
    %2798 = vmatprep.subr.bf16.mxu0 0
    %2799 = vmatpush2.bf16.msra.mxu0 0
    %2800 = vmatprep.subr.bf16.mxu0 0
    %2801 = vmatpush2.bf16.msra.mxu0 0
    %2802 = vmatprep.mubr.bf16.mxu0 0
    %2803 = vmatmul.mubr.bf16.gmra.mxu0 %v285
    %v2804 = vpop.f32.mrf.mxu0
    %v2805 = vadd.f32 %v2723, %v2804
    %v2806 = vpop.f32.mrf.mxu0
    %v2807 = vadd.f32 %v2725, %v2806
    %v2808 = vpop.f32.mrf.mxu0
    %v2809 = vpop.f32.mrf.mxu0
    %2810 = vdwg.mxu0
    %v2811 = vpack.c.bf16 %v2631, %v2631
    %2812 = vmatprep.subr.bf16.mxu0 %v659
    %2813 = vmatpush1.bf16.msra.mxu0 %v658
    %2814 = vmatprep.subr.bf16.mxu0 %v655
    %2815 = vmatpush1.bf16.msra.mxu0 %v654
    %2816 = vmatprep.subr.bf16.mxu0 %v651
    %2817 = vmatpush1.bf16.msra.mxu0 %v650
    %2818 = vmatprep.subr.bf16.mxu0 %v647
    %2819 = vmatpush1.bf16.msra.mxu0 %v646
    %2820 = vmatprep.subr.bf16.mxu0 %v643
    %2821 = vmatpush1.bf16.msra.mxu0 %v642
    %2822 = vmatprep.subr.bf16.mxu0 %v639
    %2823 = vmatpush1.bf16.msra.mxu0 %v638
    %2824 = vmatprep.subr.bf16.mxu0 %v635
    %2825 = vmatpush1.bf16.msra.mxu0 %v634
    %2826 = vmatprep.subr.bf16.mxu0 %v631
    %2827 = vmatpush1.bf16.msra.mxu0 %v630
    %2828 = vmatprep.subr.bf16.mxu0 0
    %2829 = vmatpush2.bf16.msra.mxu0 0
    %2830 = vmatprep.subr.bf16.mxu0 0
    %2831 = vmatpush2.bf16.msra.mxu0 0
    %2832 = vmatprep.subr.bf16.mxu0 0
    %2833 = vmatpush2.bf16.msra.mxu0 0
    %2834 = vmatprep.subr.bf16.mxu0 0
    %2835 = vmatpush2.bf16.msra.mxu0 0
    %2836 = vmatprep.subr.bf16.mxu0 0
    %2837 = vmatpush2.bf16.msra.mxu0 0
    %2838 = vmatprep.subr.bf16.mxu0 0
    %2839 = vmatpush2.bf16.msra.mxu0 0
    %2840 = vmatprep.subr.bf16.mxu0 0
    %2841 = vmatpush2.bf16.msra.mxu0 0
    %2842 = vmatprep.subr.bf16.mxu0 0
    %2843 = vmatpush2.bf16.msra.mxu0 0
    %2844 = vmatprep.mubr.bf16.mxu0 0
    %2845 = vmatmul.mubr.bf16.gmra.mxu0 %v2811
    %v2846 = vpop.f32.mrf.mxu0
    %v2847 = vadd.f32 0.0, %v2846
    %v2848 = vpop.f32.mrf.mxu0
    %v2849 = vadd.f32 0.0, %v2848
    %v2850 = vpop.f32.mrf.mxu0
    %v2851 = vpop.f32.mrf.mxu0
    %2852 = vdwg.mxu0
    %2853 = vmatprep.subr.bf16.mxu0 %v661
    %2854 = vmatpush1.bf16.msra.mxu0 %v660
    %2855 = vmatprep.subr.bf16.mxu0 %v657
    %2856 = vmatpush1.bf16.msra.mxu0 %v656
    %2857 = vmatprep.subr.bf16.mxu0 %v653
    %2858 = vmatpush1.bf16.msra.mxu0 %v652
    %2859 = vmatprep.subr.bf16.mxu0 %v649
    %2860 = vmatpush1.bf16.msra.mxu0 %v648
    %2861 = vmatprep.subr.bf16.mxu0 %v645
    %2862 = vmatpush1.bf16.msra.mxu0 %v644
    %2863 = vmatprep.subr.bf16.mxu0 %v641
    %2864 = vmatpush1.bf16.msra.mxu0 %v640
    %2865 = vmatprep.subr.bf16.mxu0 %v637
    %2866 = vmatpush1.bf16.msra.mxu0 %v636
    %2867 = vmatprep.subr.bf16.mxu0 %v633
    %2868 = vmatpush1.bf16.msra.mxu0 %v632
    %2869 = vmatprep.subr.bf16.mxu0 0
    %2870 = vmatpush2.bf16.msra.mxu0 0
    %2871 = vmatprep.subr.bf16.mxu0 0
    %2872 = vmatpush2.bf16.msra.mxu0 0
    %2873 = vmatprep.subr.bf16.mxu0 0
    %2874 = vmatpush2.bf16.msra.mxu0 0
    %2875 = vmatprep.subr.bf16.mxu0 0
    %2876 = vmatpush2.bf16.msra.mxu0 0
    %2877 = vmatprep.subr.bf16.mxu0 0
    %2878 = vmatpush2.bf16.msra.mxu0 0
    %2879 = vmatprep.subr.bf16.mxu0 0
    %2880 = vmatpush2.bf16.msra.mxu0 0
    %2881 = vmatprep.subr.bf16.mxu0 0
    %2882 = vmatpush2.bf16.msra.mxu0 0
    %2883 = vmatprep.subr.bf16.mxu0 0
    %2884 = vmatpush2.bf16.msra.mxu0 0
    %2885 = vmatprep.mubr.bf16.mxu0 0
    %2886 = vmatmul.mubr.bf16.gmra.mxu0 %v2811
    %v2887 = vpop.f32.mrf.mxu0
    %v2888 = vadd.f32 0.0, %v2887
    %v2889 = vpop.f32.mrf.mxu0
    %v2890 = vadd.f32 0.0, %v2889
    %v2891 = vpop.f32.mrf.mxu0
    %v2892 = vpop.f32.mrf.mxu0
    %2893 = vdwg.mxu0
    %v2894 = vadd.f32 %v2764, %v2847
    %v2895 = vadd.f32 %v2766, %v2849
    %v2896 = vadd.f32 %v2805, %v2888
    %v2897 = vadd.f32 %v2807, %v2890
    %v2898 = vadd.f32 %v2894, %v183
    %v2899 = vadd.f32 %v2895, %v187
    %v2900 = vadd.f32 %v2896, %v191
    %v2901 = vadd.f32 %v2897, %v195
    %v2902 = vxor.u32 %v2898, 2147483648
    %v2903 = vmul.f32 %v2902, 1.442695
    %v2904 = vpow.pop %v2903
    %v2905 = vadd.f32 %v2904, 1.0
    %v2906 = vrcp.pop %v2905
    %v2907 = vmul.f32 1.0, %v2906
    %v2908 = vxor.u32 %v2899, 2147483648
    %v2909 = vmul.f32 %v2908, 1.442695
    %v2910 = vpow.pop %v2909
    %v2911 = vadd.f32 %v2910, 1.0
    %v2912 = vrcp.pop %v2911
    %v2913 = vmul.f32 1.0, %v2912
    %v2914 = vtanh.pop %v2900
    %v2915 = vxor.u32 %v2901, 2147483648
    %v2916 = vmul.f32 %v2915, 1.442695
    %v2917 = vpow.pop %v2916
    %v2918 = vadd.f32 %v2917, 1.0
    %v2919 = vrcp.pop %v2918
    %v2920 = vmul.f32 1.0, %v2919
    %v2921 = vmul.f32 %v2913, %v2632
    %v2922 = vmul.f32 %v2907, %v2914
    %v2923 = vadd.f32 %v2921, %v2922
    %v2924 = vtanh.pop %v2923
    %v2925 = vmul.f32 %v2920, %v2924
    %v2926 = vsel %vm111, 7, 0
    %vm2927 = vcmp.lt.s32.totalorder %v2926, %v811
    %v2928 = vsel %vm2927, %v2925, 0.0
    %p2929 = scmp.eq.s32.totalorder %s107, 7
    %s2930 = scalar_select %p2929, 1, 0
    %v2931 = vstv %s2930
    %vm2932 = vcmp.eq.s32.totalorder %v2931, 1
    %vm2933 = vmand %vm2932, %vm111
    %p2934 = scmp.eq.s32.totalorder %s108, 7
    %s2935 = scalar_select %p2934, 1, 0
    %v2936 = vstv %s2935
    %vm2937 = vcmp.eq.s32.totalorder %v2936, 1
    %vm2938 = vmand %vm2937, %vm112
    %vm2939 = vmor %vm2933, %vm2938
    %v2940 = vsel %vm2939, 1, 0
    %vm2941 = vcmp.eq.s32.totalorder %v2940, 1
    %v2942 = vsel %vm2941, %v2928, %v2646
    %v2943 = vpack.c.bf16 %v2942, %v2942
    %v2944 = vld [vmem:[%s7] sm:$0xf]
    %v2945 = vld [vmem:[%s7 + $0x4] sm:$0xf]
    %v2946 = vld [vmem:[%s7 + $0x8] sm:$0xf]
    %v2947 = vld [vmem:[%s7 + $0xc] sm:$0xf]
    %v2948 = vld [vmem:[%s7 + $0x10] sm:$0xf]
    %v2949 = vld [vmem:[%s7 + $0x14] sm:$0xf]
    %v2950 = vld [vmem:[%s7 + $0x18] sm:$0xf]
    %v2951 = vld [vmem:[%s7 + $0x1c] sm:$0xf]
    %v2952 = vld [vmem:[%s7 + $0x20] sm:$0xf]
    %v2953 = vld [vmem:[%s7 + $0x24] sm:$0xf]
    %v2954 = vld [vmem:[%s7 + $0x28] sm:$0xf]
    %v2955 = vld [vmem:[%s7 + $0x2c] sm:$0xf]
    %v2956 = vld [vmem:[%s7 + $0x30] sm:$0xf]
    %v2957 = vld [vmem:[%s7 + $0x34] sm:$0xf]
    %v2958 = vld [vmem:[%s7 + $0x38] sm:$0xf]
    %v2959 = vld [vmem:[%s7 + $0x3c] sm:$0xf]
    %v2960 = vld [vmem:[%s8] sm:$0x1]
    %v2962 = vlaneseq
    %v2963 = vshrl.u32 %v2962, 7
    %v2964 = vsub.s32 0, %v2963
    %v2965 = vrot.slane %v2960, %v2964
    %v2983 = vunpack.c.l.b16 %v2944
    %v2984 = vunpack.c.l.b16 %v2945
    %v2985 = vunpack.c.l.b16 %v2946
    %v2986 = vunpack.c.l.b16 %v2947
    %v2987 = vunpack.c.l.b16 %v2948
    %v2988 = vunpack.c.l.b16 %v2949
    %v2989 = vunpack.c.l.b16 %v2950
    %v2990 = vunpack.c.l.b16 %v2951
    %v2991 = vunpack.c.l.b16 %v2952
    %v2992 = vunpack.c.l.b16 %v2953
    %v2993 = vunpack.c.l.b16 %v2954
    %v2994 = vunpack.c.l.b16 %v2955
    %v2995 = vunpack.c.l.b16 %v2956
    %v2996 = vunpack.c.l.b16 %v2957
    %v2997 = vunpack.c.l.b16 %v2958
    %v2998 = vunpack.c.l.b16 %v2959
    %v2999 = vpack.c.b16 %v2984, %v2983
    %v3000 = vpack.c.b16 %v2986, %v2985
    %v3001 = vpack.c.b16 %v2988, %v2987
    %v3002 = vpack.c.b16 %v2990, %v2989
    %v3003 = vpack.c.b16 %v2992, %v2991
    %v3004 = vpack.c.b16 %v2994, %v2993
    %v3005 = vpack.c.b16 %v2996, %v2995
    %v3006 = vpack.c.b16 %v2998, %v2997
    %3015 = vmatprep.subr.bf16.mxu0 0
    %3016 = vmatpush1.bf16.msra.mxu0 %v3006
    %3017 = vmatprep.subr.bf16.mxu0 0
    %3018 = vmatpush1.bf16.msra.mxu0 %v3005
    %3019 = vmatprep.subr.bf16.mxu0 0
    %3020 = vmatpush1.bf16.msra.mxu0 %v3004
    %3021 = vmatprep.subr.bf16.mxu0 0
    %3022 = vmatpush1.bf16.msra.mxu0 %v3003
    %3023 = vmatprep.subr.bf16.mxu0 0
    %3024 = vmatpush1.bf16.msra.mxu0 %v3002
    %3025 = vmatprep.subr.bf16.mxu0 0
    %3026 = vmatpush1.bf16.msra.mxu0 %v3001
    %3027 = vmatprep.subr.bf16.mxu0 0
    %3028 = vmatpush1.bf16.msra.mxu0 %v3000
    %3029 = vmatprep.subr.bf16.mxu0 0
    %3030 = vmatpush1.bf16.msra.mxu0 %v2999
    %3031 = vmatprep.subr.bf16.mxu0 0
    %3032 = vmatpush2.bf16.msra.mxu0 0
    %3033 = vmatprep.subr.bf16.mxu0 0
    %3034 = vmatpush2.bf16.msra.mxu0 0
    %3035 = vmatprep.subr.bf16.mxu0 0
    %3036 = vmatpush2.bf16.msra.mxu0 0
    %3037 = vmatprep.subr.bf16.mxu0 0
    %3038 = vmatpush2.bf16.msra.mxu0 0
    %3039 = vmatprep.subr.bf16.mxu0 0
    %3040 = vmatpush2.bf16.msra.mxu0 0
    %3041 = vmatprep.subr.bf16.mxu0 0
    %3042 = vmatpush2.bf16.msra.mxu0 0
    %3043 = vmatprep.subr.bf16.mxu0 0
    %3044 = vmatpush2.bf16.msra.mxu0 0
    %3045 = vmatprep.subr.bf16.mxu0 0
    %3046 = vmatpush2.bf16.msra.mxu0 0
    %3047 = vmatprep.mubr.bf16.mxu0 0
    %3048 = vmatmul.mubr.bf16.gmra.mxu0 %v2943
    %v3049 = vpop.f32.mrf.mxu0
    %v3050 = vadd.f32 %v2965, %v3049
    %v3051 = vpop.f32.mrf.mxu0
    %v3052 = vpop.f32.mrf.mxu0
    %v3053 = vpop.f32.mrf.mxu0
    %3054 = vdwg.mxu0
    %v3055 = vld [vmem:[%s9] sm:$0xff]
    %v3056 = vld [vmem:[%s10] sm:$0xf]
    %v3057 = vld [vmem:[%s10 + $0x4] sm:$0xf]
    %v3058 = vld [vmem:[%s10 + $0x8] sm:$0xf]
    %v3059 = vld [vmem:[%s10 + $0xc] sm:$0xf]
    %v3060 = vld [vmem:[%s10 + $0x10] sm:$0xf]
    %v3061 = vld [vmem:[%s10 + $0x14] sm:$0xf]
    %v3062 = vld [vmem:[%s10 + $0x18] sm:$0xf]
    %v3063 = vld [vmem:[%s10 + $0x1c] sm:$0xf]
    %v3064 = vld [vmem:[%s10 + $0x20] sm:$0xf]
    %v3065 = vld [vmem:[%s10 + $0x24] sm:$0xf]
    %v3066 = vld [vmem:[%s10 + $0x28] sm:$0xf]
    %v3067 = vld [vmem:[%s10 + $0x2c] sm:$0xf]
    %v3068 = vld [vmem:[%s10 + $0x30] sm:$0xf]
    %v3069 = vld [vmem:[%s10 + $0x34] sm:$0xf]
    %v3070 = vld [vmem:[%s10 + $0x38] sm:$0xf]
    %v3071 = vld [vmem:[%s10 + $0x3c] sm:$0xf]
    %v3072 = vld [vmem:[%s10 + $0x40] sm:$0xf]
    %v3073 = vld [vmem:[%s10 + $0x44] sm:$0xf]
    %v3074 = vld [vmem:[%s10 + $0x48] sm:$0xf]
    %v3075 = vld [vmem:[%s10 + $0x4c] sm:$0xf]
    %v3076 = vld [vmem:[%s10 + $0x50] sm:$0xf]
    %v3077 = vld [vmem:[%s10 + $0x54] sm:$0xf]
    %v3078 = vld [vmem:[%s10 + $0x58] sm:$0xf]
    %v3079 = vld [vmem:[%s10 + $0x5c] sm:$0xf]
    %v3080 = vld [vmem:[%s10 + $0x60] sm:$0xf]
    %v3081 = vld [vmem:[%s10 + $0x64] sm:$0xf]
    %v3082 = vld [vmem:[%s10 + $0x68] sm:$0xf]
    %v3083 = vld [vmem:[%s10 + $0x6c] sm:$0xf]
    %v3084 = vld [vmem:[%s10 + $0x70] sm:$0xf]
    %v3085 = vld [vmem:[%s10 + $0x74] sm:$0xf]
    %v3086 = vld [vmem:[%s10 + $0x78] sm:$0xf]
    %v3087 = vld [vmem:[%s10 + $0x7c] sm:$0xf]
    %v3088 = vpack.c.bf16 %v3050, %v3050
    %v3089 = vld [vmem:[#allocation9] sm:$0xf]
    %v3090 = vld [vmem:[#allocation9 + $0x4] sm:$0xf]
    %v3091 = vld [vmem:[#allocation9 + $0x8] sm:$0xf]
    %v3092 = vld [vmem:[#allocation9 + $0xc] sm:$0xf]
    %v3093 = vld [vmem:[#allocation9 + $0x10] sm:$0xf]
    %v3094 = vld [vmem:[#allocation9 + $0x14] sm:$0xf]
    %v3095 = vld [vmem:[#allocation9 + $0x18] sm:$0xf]
    %v3096 = vld [vmem:[#allocation9 + $0x1c] sm:$0xf]
    %v3105 = vunpack.c.l.b16 %v3089
    %v3106 = vunpack.c.l.b16 %v3090
    %v3107 = vunpack.c.l.b16 %v3091
    %v3108 = vunpack.c.l.b16 %v3092
    %v3109 = vunpack.c.l.b16 %v3093
    %v3110 = vunpack.c.l.b16 %v3094
    %v3111 = vunpack.c.l.b16 %v3095
    %v3112 = vunpack.c.l.b16 %v3096
    %v3113 = vpack.c.b16 %v3106, %v3105
    %v3114 = vpack.c.b16 %v3108, %v3107
    %v3115 = vpack.c.b16 %v3110, %v3109
    %v3116 = vpack.c.b16 %v3112, %v3111
    %v3122 = vsel %vm283, %v3088, 0
    %3124 = vmatprep.subr.bf16.mxu0 0
    %3125 = vmatpush1.bf16.msra.mxu0 0
    %3126 = vmatprep.subr.bf16.mxu0 0
    %3127 = vmatpush1.bf16.msra.mxu0 0
    %3128 = vmatprep.subr.bf16.mxu0 0
    %3129 = vmatpush1.bf16.msra.mxu0 0
    %3130 = vmatprep.subr.bf16.mxu0 0
    %3131 = vmatpush1.bf16.msra.mxu0 0
    %3132 = vmatprep.subr.bf16.mxu0 0
    %3133 = vmatpush1.bf16.msra.mxu0 %v3116
    %3134 = vmatprep.subr.bf16.mxu0 0
    %3135 = vmatpush1.bf16.msra.mxu0 %v3115
    %3136 = vmatprep.subr.bf16.mxu0 0
    %3137 = vmatpush1.bf16.msra.mxu0 %v3114
    %3138 = vmatprep.subr.bf16.mxu0 0
    %3139 = vmatpush1.bf16.msra.mxu0 %v3113
    %3140 = vmatprep.subr.bf16.mxu0 0
    %3141 = vmatpush2.bf16.msra.mxu0 0
    %3142 = vmatprep.subr.bf16.mxu0 0
    %3143 = vmatpush2.bf16.msra.mxu0 0
    %3144 = vmatprep.subr.bf16.mxu0 0
    %3145 = vmatpush2.bf16.msra.mxu0 0
    %3146 = vmatprep.subr.bf16.mxu0 0
    %3147 = vmatpush2.bf16.msra.mxu0 0
    %3148 = vmatprep.subr.bf16.mxu0 0
    %3149 = vmatpush2.bf16.msra.mxu0 0
    %3150 = vmatprep.subr.bf16.mxu0 0
    %3151 = vmatpush2.bf16.msra.mxu0 0
    %3152 = vmatprep.subr.bf16.mxu0 0
    %3153 = vmatpush2.bf16.msra.mxu0 0
    %3154 = vmatprep.subr.bf16.mxu0 0
    %3155 = vmatpush2.bf16.msra.mxu0 0
    %3156 = vmatprep.mubr.bf16.mxu0 0
    %3157 = vmatmul.mubr.bf16.gmra.mxu0 %v3122
    %v3158 = vpop.f32.mrf.mxu0
    %v3159 = vadd.f32 0.0, %v3158
    %v3160 = vpop.f32.mrf.mxu0
    %v3161 = vpop.f32.mrf.mxu0
    %v3162 = vpop.f32.mrf.mxu0
    %3163 = vdwg.mxu0
    %v3165 = vunpack.c.l.b16 %v3055
    %v3166 = vunpack.c.h.b16 %v3055
    %v3167 = vpack.c.b16 %v3165, %v3165
    %v3168 = vpack.c.b16 %v3166, %v3166
    %v3203 = vunpack.c.l.b16 %v3056
    %v3204 = vunpack.c.l.b16 %v3057
    %v3205 = vunpack.c.l.b16 %v3058
    %v3206 = vunpack.c.l.b16 %v3059
    %v3207 = vunpack.c.l.b16 %v3060
    %v3208 = vunpack.c.l.b16 %v3061
    %v3209 = vunpack.c.l.b16 %v3062
    %v3210 = vunpack.c.l.b16 %v3063
    %v3211 = vunpack.c.l.b16 %v3064
    %v3212 = vunpack.c.l.b16 %v3065
    %v3213 = vunpack.c.l.b16 %v3066
    %v3214 = vunpack.c.l.b16 %v3067
    %v3215 = vunpack.c.l.b16 %v3068
    %v3216 = vunpack.c.l.b16 %v3069
    %v3217 = vunpack.c.l.b16 %v3070
    %v3218 = vunpack.c.l.b16 %v3071
    %v3219 = vunpack.c.l.b16 %v3072
    %v3220 = vunpack.c.l.b16 %v3073
    %v3221 = vunpack.c.l.b16 %v3074
    %v3222 = vunpack.c.l.b16 %v3075
    %v3223 = vunpack.c.l.b16 %v3076
    %v3224 = vunpack.c.l.b16 %v3077
    %v3225 = vunpack.c.l.b16 %v3078
    %v3226 = vunpack.c.l.b16 %v3079
    %v3227 = vunpack.c.l.b16 %v3080
    %v3228 = vunpack.c.l.b16 %v3081
    %v3229 = vunpack.c.l.b16 %v3082
    %v3230 = vunpack.c.l.b16 %v3083
    %v3231 = vunpack.c.l.b16 %v3084
    %v3232 = vunpack.c.l.b16 %v3085
    %v3233 = vunpack.c.l.b16 %v3086
    %v3234 = vunpack.c.l.b16 %v3087
    %v3235 = vpack.c.b16 %v3204, %v3203
    %v3236 = vpack.c.b16 %v3206, %v3205
    %v3237 = vpack.c.b16 %v3208, %v3207
    %v3238 = vpack.c.b16 %v3210, %v3209
    %v3239 = vpack.c.b16 %v3212, %v3211
    %v3240 = vpack.c.b16 %v3214, %v3213
    %v3241 = vpack.c.b16 %v3216, %v3215
    %v3242 = vpack.c.b16 %v3218, %v3217
    %v3243 = vpack.c.b16 %v3220, %v3219
    %v3244 = vpack.c.b16 %v3222, %v3221
    %v3245 = vpack.c.b16 %v3224, %v3223
    %v3246 = vpack.c.b16 %v3226, %v3225
    %v3247 = vpack.c.b16 %v3228, %v3227
    %v3248 = vpack.c.b16 %v3230, %v3229
    %v3249 = vpack.c.b16 %v3232, %v3231
    %v3250 = vpack.c.b16 %v3234, %v3233
    %3267 = vmatprep.subr.bf16.mxu0 0
    %3268 = vmatpush1.bf16.msra.mxu0 %v3242
    %3269 = vmatprep.subr.bf16.mxu0 0
    %3270 = vmatpush1.bf16.msra.mxu0 %v3241
    %3271 = vmatprep.subr.bf16.mxu0 0
    %3272 = vmatpush1.bf16.msra.mxu0 %v3240
    %3273 = vmatprep.subr.bf16.mxu0 0
    %3274 = vmatpush1.bf16.msra.mxu0 %v3239
    %3275 = vmatprep.subr.bf16.mxu0 0
    %3276 = vmatpush1.bf16.msra.mxu0 %v3238
    %3277 = vmatprep.subr.bf16.mxu0 0
    %3278 = vmatpush1.bf16.msra.mxu0 %v3237
    %3279 = vmatprep.subr.bf16.mxu0 0
    %3280 = vmatpush1.bf16.msra.mxu0 %v3236
    %3281 = vmatprep.subr.bf16.mxu0 0
    %3282 = vmatpush1.bf16.msra.mxu0 %v3235
    %3283 = vmatprep.subr.bf16.mxu0 0
    %3284 = vmatpush2.bf16.msra.mxu0 %v3250
    %3285 = vmatprep.subr.bf16.mxu0 0
    %3286 = vmatpush2.bf16.msra.mxu0 %v3249
    %3287 = vmatprep.subr.bf16.mxu0 0
    %3288 = vmatpush2.bf16.msra.mxu0 %v3248
    %3289 = vmatprep.subr.bf16.mxu0 0
    %3290 = vmatpush2.bf16.msra.mxu0 %v3247
    %3291 = vmatprep.subr.bf16.mxu0 0
    %3292 = vmatpush2.bf16.msra.mxu0 %v3246
    %3293 = vmatprep.subr.bf16.mxu0 0
    %3294 = vmatpush2.bf16.msra.mxu0 %v3245
    %3295 = vmatprep.subr.bf16.mxu0 0
    %3296 = vmatpush2.bf16.msra.mxu0 %v3244
    %3297 = vmatprep.subr.bf16.mxu0 0
    %3298 = vmatpush2.bf16.msra.mxu0 %v3243
    %3299 = vmatprep.mubr.bf16.mxu0 %v3168
    %3300 = vmatmul.mubr.bf16.gmra.mxu0 %v3167
    %v3301 = vpop.f32.mrf.mxu0
    %v3302 = vadd.f32 %v3159, %v3301
    %v3303 = vpop.f32.mrf.mxu0
    %v3304 = vpop.f32.mrf.mxu0
    %v3305 = vpop.f32.mrf.mxu0
    %3306 = vdwg.mxu0
    %v3307 = vld [vmem:[%s12] sm:$0x1]
    %v3309 = vlaneseq
    %v3310 = vshrl.u32 %v3309, 7
    %v3311 = vsub.s32 0, %v3310
    %v3312 = vrot.slane %v3307, %v3311
    %v3314 = vadd.f32 %v3302, %v3312
    %vm3315 = vcmp.ge.f32.partialorder %v3314, 0.0
    %v3316 = vmul.f32 %v3314, 0.01
    %v3317 = vsel %vm3315, %v3314, %v3316
    %v3318 = vpack.c.bf16 %v3317, %v3317
    %v3319 = vld [vmem:[#allocation10] sm:$0xf]
    %v3320 = vld [vmem:[#allocation10 + $0x4] sm:$0xf]
    %v3321 = vld [vmem:[#allocation10 + $0x8] sm:$0xf]
    %v3322 = vld [vmem:[#allocation10 + $0xc] sm:$0xf]
    %v3323 = vld [vmem:[#allocation10 + $0x10] sm:$0xf]
    %v3324 = vld [vmem:[#allocation10 + $0x14] sm:$0xf]
    %v3325 = vld [vmem:[#allocation10 + $0x18] sm:$0xf]
    %v3326 = vld [vmem:[#allocation10 + $0x1c] sm:$0xf]
    %v3327 = vld [vmem:[%s14] sm:$0x1]
    %v3329 = vlaneseq
    %v3330 = vshrl.u32 %v3329, 7
    %v3331 = vsub.s32 0, %v3330
    %v3332 = vrot.slane %v3327, %v3331
    %v3342 = vunpack.c.l.b16 %v3319
    %v3343 = vunpack.c.l.b16 %v3320
    %v3344 = vunpack.c.l.b16 %v3321
    %v3345 = vunpack.c.l.b16 %v3322
    %v3346 = vunpack.c.l.b16 %v3323
    %v3347 = vunpack.c.l.b16 %v3324
    %v3348 = vunpack.c.l.b16 %v3325
    %v3349 = vunpack.c.l.b16 %v3326
    %v3350 = vpack.c.b16 %v3343, %v3342
    %v3351 = vpack.c.b16 %v3345, %v3344
    %v3352 = vpack.c.b16 %v3347, %v3346
    %v3353 = vpack.c.b16 %v3349, %v3348
    %v3359 = vsel %vm283, %v3318, 0
    %3361 = vmatprep.subr.bf16.mxu0 0
    %3362 = vmatpush1.bf16.msra.mxu0 0
    %3363 = vmatprep.subr.bf16.mxu0 0
    %3364 = vmatpush1.bf16.msra.mxu0 0
    %3365 = vmatprep.subr.bf16.mxu0 0
    %3366 = vmatpush1.bf16.msra.mxu0 0
    %3367 = vmatprep.subr.bf16.mxu0 0
    %3368 = vmatpush1.bf16.msra.mxu0 0
    %3369 = vmatprep.subr.bf16.mxu0 0
    %3370 = vmatpush1.bf16.msra.mxu0 %v3353
    %3371 = vmatprep.subr.bf16.mxu0 0
    %3372 = vmatpush1.bf16.msra.mxu0 %v3352
    %3373 = vmatprep.subr.bf16.mxu0 0
    %3374 = vmatpush1.bf16.msra.mxu0 %v3351
    %3375 = vmatprep.subr.bf16.mxu0 0
    %3376 = vmatpush1.bf16.msra.mxu0 %v3350
    %3377 = vmatprep.subr.bf16.mxu0 0
    %3378 = vmatpush2.bf16.msra.mxu0 0
    %3379 = vmatprep.subr.bf16.mxu0 0
    %3380 = vmatpush2.bf16.msra.mxu0 0
    %3381 = vmatprep.subr.bf16.mxu0 0
    %3382 = vmatpush2.bf16.msra.mxu0 0
    %3383 = vmatprep.subr.bf16.mxu0 0
    %3384 = vmatpush2.bf16.msra.mxu0 0
    %3385 = vmatprep.subr.bf16.mxu0 0
    %3386 = vmatpush2.bf16.msra.mxu0 0
    %3387 = vmatprep.subr.bf16.mxu0 0
    %3388 = vmatpush2.bf16.msra.mxu0 0
    %3389 = vmatprep.subr.bf16.mxu0 0
    %3390 = vmatpush2.bf16.msra.mxu0 0
    %3391 = vmatprep.subr.bf16.mxu0 0
    %3392 = vmatpush2.bf16.msra.mxu0 0
    %3393 = vmatprep.mubr.bf16.mxu0 0
    %3394 = vmatmul.mubr.bf16.gmra.mxu0 %v3359
    %v3395 = vpop.f32.mrf.mxu0
    %v3396 = vadd.f32 %v3332, %v3395
    %v3397 = vpop.f32.mrf.mxu0
    %v3398 = vpop.f32.mrf.mxu0
    %v3399 = vpop.f32.mrf.mxu0
    %3400 = vdwg.mxu0
    %3401 = vst [vmem:[#allocation12] sm:$0xff] %v3396
    // Predicated region
    $region74: #{tpu_custom_call.1} parent=1 // pred_check
      _
    $region75: #{tpu_custom_call.1} parent=1 // pred_check_branch
      %3403 = sbr.rel (0) target = $region77
    $region76: #{tpu_custom_call.1} parent=1 // pred_region
      %s3405 = ssub.s32 128, 128
      %3406 = vsyncadd [#allocation6], %s3405
      %s3408 = sshll.u32 [#allocation12], 4
      %s3409 = int_to_ptr.vmem [resolvable:$true] %s3408
      %3411 = dma.vmem_to_hbm [thread:$0]  %s3409, 128, %s15, [#allocation6]
    $region77: #{tpu_custom_call.1} parent=1 // pred_fallthru
      _
    // Predicated region
    $region78: #{tpu_custom_call.1} parent=1 // pred_check
      _
    $region79: #{tpu_custom_call.1} parent=1 // pred_check_branch
      %3413 = sbr.rel (0) target = $region81
    $region80: #{tpu_custom_call.1} parent=1 // pred_region
      %3414 = dma.done [#allocation6], 128
    $region81: #{tpu_custom_call.1} parent=1 // pred_fallthru
      _
    %3415 = vsyncpa [#allocation5], 1
    %3416 = vsyncpa [#allocation8], 1
    %3417 = vsyncpa [#allocation11], 1
    %3418 = vsyncpa [#allocation6], 1

</llo_original>
